<compile_context>
chip_gen: v7x
topology: tpu7x:2x2x1
jax: 0.10.0
libtpu: 0.0.40
codegen_flags: <defaults>
</compile_context>

<pallas_src>
import math

import jax
import jax.numpy as jnp
from jax.experimental import pallas as pl
from jax.experimental.pallas import tpu as pltpu

# ---------------- small config (stand-ins for roberta-base sizes) ----------------
VOCAB = 100        # stands in for 50265
MAX_POS = 64       # stands in for 514
D = 32             # hidden_size, stands in for 768
N_HEADS = 2        # stands in for 12
HEAD_DIM = D // N_HEADS
FFN = 64           # stands in for 3072
N_LAYERS = 2       # stands in for 12
HIDDEN_DIM = 64    # ResidualBlock middle dim, stands in for 1536
LN_EPS = 1e-5

_VMEM = pl.BlockSpec(memory_space=pltpu.MemorySpace.VMEM)
_VMEM_LIMIT = 64 * 1024 * 1024
_CPARAMS_NOGRID = pltpu.CompilerParams(vmem_limit_bytes=_VMEM_LIMIT)


# ---------------------------- in-kernel helpers ----------------------------

def _gelu_exact(x):
    # nn.GELU() default = exact (erf) formulation
    return 0.5 * x * (1.0 + jax.lax.erf(x * (1.0 / math.sqrt(2.0))))


def _layernorm(y, g, b, eps=LN_EPS):
    mu = jnp.mean(y, axis=-1, keepdims=True)
    var = jnp.mean((y - mu) ** 2, axis=-1, keepdims=True)
    return (y - mu) * jax.lax.rsqrt(var + eps) * g + b


# ---------------------------- Pallas kernels ----------------------------

def _emb_ln_kernel(x_ref, g_ref, b_ref, o_ref):
    o_ref[...] = _layernorm(x_ref[...], g_ref[...], b_ref[...]).astype(o_ref.dtype)


def emb_layernorm(x, g, b):
    """Embedding LayerNorm (f32 math), emits bf16 activations for the encoder stack."""
    n, d = x.shape
    return pl.pallas_call(
        _emb_ln_kernel,
        out_shape=jax.ShapeDtypeStruct((n, d), jnp.bfloat16),
        in_specs=[_VMEM, _VMEM, _VMEM],
        out_specs=_VMEM,
        compiler_params=_CPARAMS_NOGRID,
    )(x, g, b)


def _encoder_layer_kernel(x_ref, bias_ref, wqkv_ref, bqkv_ref, wo_ref, bo_ref,
                          ln1g_ref, ln1b_ref, w1_ref, b1_ref, w2_ref, b2_ref,
                          ln2g_ref, ln2b_ref, o_ref):
    """One fused transformer encoder layer for one batch element (grid axis = batch)."""
    x_bf = x_ref[0]                                     # [S, D] bf16
    x = x_bf.astype(jnp.float32)
    bias = bias_ref[0]                                  # [1, S] f32 additive mask

    # Fused QKV projection: single MXU pass with N = 3*D.
    qkv = jnp.dot(x_bf, wqkv_ref[...], preferred_element_type=jnp.float32)
    qkv = qkv + bqkv_ref[...]                           # [S, 3D] f32

    scale = 1.0 / math.sqrt(HEAD_DIM)
    ctx_heads = []
    for hi in range(N_HEADS):                           # static, unrolled (N_HEADS small)
        lo = hi * HEAD_DIM
        q_h = qkv[:, lo:lo + HEAD_DIM].astype(jnp.bfloat16)
        k_h = qkv[:, D + lo:D + lo + HEAD_DIM].astype(jnp.bfloat16)
        v_h = qkv[:, 2 * D + lo:2 * D + lo + HEAD_DIM].astype(jnp.bfloat16)
        s = jnp.einsum("qd,kd->qk", q_h, k_h,
                       preferred_element_type=jnp.float32) * scale + bias
        m = jnp.max(s, axis=-1, keepdims=True)
        p = jnp.exp(s - m)
        denom = jnp.sum(p, axis=-1, keepdims=True)
        attn = p * pl.reciprocal(denom, approx=True)
        ctx_heads.append(
            jnp.dot(attn.astype(jnp.bfloat16), v_h,
                    preferred_element_type=jnp.float32))
    ctx = jnp.concatenate(ctx_heads, axis=-1)           # [S, D] f32

    a = jnp.dot(ctx.astype(jnp.bfloat16), wo_ref[...],
                preferred_element_type=jnp.float32) + bo_ref[...]
    h1 = _layernorm(a + x, ln1g_ref[...], ln1b_ref[...])

    f = jnp.dot(h1.astype(jnp.bfloat16), w1_ref[...],
                preferred_element_type=jnp.float32) + b1_ref[...]
    f = _gelu_exact(f)
    f = jnp.dot(f.astype(jnp.bfloat16), w2_ref[...],
                preferred_element_type=jnp.float32) + b2_ref[...]
    h2 = _layernorm(f + h1, ln2g_ref[...], ln2b_ref[...])

    o_ref[0] = h2.astype(o_ref.dtype)


def encoder_layer_pallas(h, mask_bias, p):
    """h: [B, S, D] bf16, mask_bias: [B, 1, S] f32. One pallas_call per layer."""
    B, S, _ = h.shape

    def full(arr):
        nd = arr.ndim
        return pl.BlockSpec(arr.shape, lambda b, _nd=nd: (0,) * _nd)

    return pl.pallas_call(
        _encoder_layer_kernel,
        grid=(B,),
        out_shape=jax.ShapeDtypeStruct((B, S, D), jnp.bfloat16),
        in_specs=[
            pl.BlockSpec((1, S, D), lambda b: (b, 0, 0)),   # activations (per batch)
            pl.BlockSpec((1, 1, S), lambda b: (b, 0, 0)),   # attention mask bias
            full(p["w_qkv"]), full(p["b_qkv"]),
            full(p["w_o"]), full(p["b_o"]),
            full(p["ln1_g"]), full(p["ln1_b"]),
            full(p["w1"]), full(p["b1"]),
            full(p["w2"]), full(p["b2"]),
            full(p["ln2_g"]), full(p["ln2_b"]),
        ],
        out_specs=pl.BlockSpec((1, S, D), lambda b: (b, 0, 0)),
        compiler_params=pltpu.CompilerParams(
            dimension_semantics=("parallel",),
            vmem_limit_bytes=_VMEM_LIMIT),
    )(h, mask_bias, p["w_qkv"], p["b_qkv"], p["w_o"], p["b_o"],
      p["ln1_g"], p["ln1_b"], p["w1"], p["b1"], p["w2"], p["b2"],
      p["ln2_g"], p["ln2_b"])


def _heads_kernel(cls_ref, pw_ref, pb_ref,
                  wdc_ref, bdc_ref,
                  wur_ref, bur_ref, lgr_ref, lbr_ref,
                  wuc_ref, buc_ref, lgc_ref, lbc_ref,
                  wor_ref, bor_ref, woc_ref, boc_ref,
                  sent_ref, out_ref):
    """Fused: RoBERTa pooler (Linear+tanh) + both ResidualBlock heads + final Linears."""
    pooled = jnp.tanh(
        jnp.dot(cls_ref[...], pw_ref[...],
                preferred_element_type=jnp.float32) + pb_ref[...])   # [B, D] f32
    sent_ref[...] = pooled
    pooled_bf = pooled.astype(jnp.bfloat16)

    # Both heads' down-projections fused into one [B, D] @ [D, 2H] matmul (lane-dense 2H=128).
    down = jnp.dot(pooled_bf, wdc_ref[...],
                   preferred_element_type=jnp.float32) + bdc_ref[...]
    down = _gelu_exact(down)                            # dropout1 = identity (eval)

    def residual_head(down_h, wu, bu, lg, lb):
        up = jnp.dot(down_h.astype(jnp.bfloat16), wu,
                     preferred_element_type=jnp.float32) + bu
        return _layernorm(up + pooled, lg, lb)          # dropout2 = identity (eval)

    yn_r = residual_head(down[:, :HIDDEN_DIM], wur_ref[...], bur_ref[...],
                         lgr_ref[...], lbr_ref[...])
    yn_c = residual_head(down[:, HIDDEN_DIM:], wuc_ref[...], buc_ref[...],
                         lgc_ref[...], lbc_ref[...])

    out_r = jnp.dot(yn_r.astype(jnp.bfloat16), wor_ref[...],
                    preferred_element_type=jnp.float32) + bor_ref[...]
    out_c = jnp.dot(yn_c.astype(jnp.bfloat16), woc_ref[...],
                    preferred_element_type=jnp.float32) + boc_ref[...]
    # column 0 = sigmoid(regression), column 1 = classification logit
    out_ref[...] = jnp.concatenate([jax.nn.sigmoid(out_r), out_c], axis=-1)


def heads_pallas(cls_tok, params):
    B = cls_tok.shape[0]
    rh, ch = params["reg_head"], params["cls_head"]
    return pl.pallas_call(
        _heads_kernel,
        out_shape=(jax.ShapeDtypeStruct((B, D), jnp.float32),
                   jax.ShapeDtypeStruct((B, 2), jnp.float32)),
        in_specs=[_VMEM] * 17,
        out_specs=(_VMEM, _VMEM),
        compiler_params=_CPARAMS_NOGRID,
    )(cls_tok, params["pool_w"], params["pool_b"],
      params["w_down_cat"], params["b_down_cat"],
      rh["w_up"], rh["b_up"], rh["ln_g"], rh["ln_b"],
      ch["w_up"], ch["b_up"], ch["ln_g"], ch["ln_b"],
      rh["w_out"], rh["b_out"], ch["w_out"], ch["b_out"])


# ---------------------------- params (bf16 matmul weights, f32 bias/LN) ----------------------------

def init_params(key):
    keys = iter(jax.random.split(key, 64))

    def nrm(shape, scale=0.02):
        return scale * jax.random.normal(next(keys), shape, jnp.float32)

    def bf(x):
        return x.astype(jnp.bfloat16)   # cast once at init, not per call

    params = {
        "word_emb": nrm((VOCAB, D)),
        "pos_emb": nrm((MAX_POS, D)),
        "emb_ln_g": jnp.ones((1, D), jnp.float32),
        "emb_ln_b": jnp.zeros((1, D), jnp.float32),
        "layers": [],
    }
    for _ in range(N_LAYERS):
        wq, wk, wv = nrm((D, D)), nrm((D, D)), nrm((D, D))
        params["layers"].append({
            "w_qkv": bf(jnp.concatenate([wq, wk, wv], axis=1)),     # fused QKV [D, 3D]
            "b_qkv": jnp.zeros((1, 3 * D), jnp.float32),
            "w_o": bf(nrm((D, D))), "b_o": jnp.zeros((1, D), jnp.float32),
            "ln1_g": jnp.ones((1, D), jnp.float32), "ln1_b": jnp.zeros((1, D), jnp.float32),
            "w1": bf(nrm((D, FFN))), "b1": jnp.zeros((1, FFN), jnp.float32),
            "w2": bf(nrm((FFN, D))), "b2": jnp.zeros((1, D), jnp.float32),
            "ln2_g": jnp.ones((1, D), jnp.float32), "ln2_b": jnp.zeros((1, D), jnp.float32),
        })
    params["pool_w"] = bf(nrm((D, D)))
    params["pool_b"] = jnp.zeros((1, D), jnp.float32)

    def make_head():
        return {
            "w_down": nrm((D, HIDDEN_DIM)),
            "w_up": bf(nrm((HIDDEN_DIM, D))), "b_up": jnp.zeros((1, D), jnp.float32),
            "ln_g": jnp.ones((1, D), jnp.float32), "ln_b": jnp.zeros((1, D), jnp.float32),
            "w_out": bf(nrm((D, 1))), "b_out": jnp.zeros((1, 1), jnp.float32),
        }

    rh, ch = make_head(), make_head()
    # Both heads' down-projections concatenated -> one [D, 2*HIDDEN_DIM] matmul in-kernel.
    params["w_down_cat"] = bf(jnp.concatenate([rh.pop("w_down"), ch.pop("w_down")], axis=1))
    params["b_down_cat"] = jnp.zeros((1, 2 * HIDDEN_DIM), jnp.float32)
    params["reg_head"] = rh
    params["cls_head"] = ch
    return params


# ---------------------------- forward ----------------------------

def distinguish_forward(params, input_ids, attention_mask=None):
    B, S = input_ids.shape
    if attention_mask is None:
        attention_mask = jnp.ones((B, S), jnp.float32)

    # TODO(synk): embedding gather stays in plain JAX; real RoBERTa offsets positions by
    # padding_idx+1 and skips pad tokens — stand-in uses raw arange positions.
    pos = jnp.arange(S)
    emb = params["word_emb"][input_ids] + params["pos_emb"][pos][None, :, :]
    h = emb_layernorm(emb.reshape(B * S, D),
                      params["emb_ln_g"], params["emb_ln_b"]).reshape(B, S, D)

    mask_bias = ((1.0 - attention_mask.astype(jnp.float32)) * -1e9)[:, None, :]  # [B,1,S]
    for lp in params["layers"]:
        h = encoder_layer_pallas(h, mask_bias, lp)      # one fused pallas_call per layer

    cls_tok = h[:, 0, :]                                # [CLS] token, [B, D] bf16
    sentence_embedding, head_out = heads_pallas(cls_tok, params)
    regression_output = head_out[:, 0:1]                # sigmoid already applied in-kernel
    classification_logits = head_out[:, 1:2]
    return regression_output, classification_logits, sentence_embedding


# ---------------------------- run ----------------------------

if __name__ == "__main__":
    B, S = 2, 8
    key = jax.random.PRNGKey(0)
    k_ids, k_params = jax.random.split(key)

    input_ids = jax.random.randint(k_ids, (B, S), 0, VOCAB, dtype=jnp.int32)
    attention_mask = jnp.ones((B, S), jnp.float32)
    params = init_params(k_params)

    fwd = jax.jit(distinguish_forward)
    reg, cls, emb = fwd(params, input_ids, attention_mask)
    jax.block_until_ready((reg, cls, emb))

    assert reg.shape == (B, 1) and cls.shape == (B, 1) and emb.shape == (B, D)
    assert bool(jnp.all((reg >= 0.0) & (reg <= 1.0)))  # sigmoid range check
    print("KERNEL_OK")
</pallas_src>

<mosaic_0001>
module attributes {stable_mosaic.version = 11 : i64} {
  func.func @_emb_ln_kernel(%arg0: memref<16x32xf32, #tpu.memory_space<vmem>>, %arg1: memref<1x32xf32, #tpu.memory_space<vmem>>, %arg2: memref<1x32xf32, #tpu.memory_space<vmem>>, %arg3: memref<16x32xbf16, #tpu.memory_space<vmem>>) attributes {dimension_semantics = [], scalar_prefetch = 0 : i64, scratch_operands = 0 : i64, tpu.core_type = #tpu.core_type<tc>} {
    %c0 = arith.constant 0 : index
    %c0_0 = arith.constant 0 : index
    %0 = vector.load %arg0[%c0, %c0_0] : memref<16x32xf32, #tpu.memory_space<vmem>>, vector<16x32xf32>
    %c0_1 = arith.constant 0 : index
    %c0_2 = arith.constant 0 : index
    %1 = vector.load %arg1[%c0_1, %c0_2] : memref<1x32xf32, #tpu.memory_space<vmem>>, vector<1x32xf32>
    %c0_3 = arith.constant 0 : index
    %c0_4 = arith.constant 0 : index
    %2 = vector.load %arg2[%c0_3, %c0_4] : memref<1x32xf32, #tpu.memory_space<vmem>>, vector<1x32xf32>
    %cst = arith.constant dense<0.000000e+00> : vector<16xf32>
    %3 = vector.multi_reduction <add>, %0, %cst [1] : vector<16x32xf32> to vector<16xf32>
    %4 = vector.shape_cast %3 : vector<16xf32> to vector<16x1xf32>
    %cst_5 = arith.constant 3.200000e+01 : f32
    %5 = vector.broadcast %cst_5 : f32 to vector<16x1xf32>
    %6 = arith.divf %4, %5 : vector<16x1xf32>
    %7 = vector.broadcast %6 : vector<16x1xf32> to vector<16x32xf32>
    %8 = arith.subf %0, %7 : vector<16x32xf32>
    %9 = arith.mulf %8, %8 : vector<16x32xf32>
    %cst_6 = arith.constant dense<0.000000e+00> : vector<16xf32>
    %10 = vector.multi_reduction <add>, %9, %cst_6 [1] : vector<16x32xf32> to vector<16xf32>
    %11 = vector.shape_cast %10 : vector<16xf32> to vector<16x1xf32>
    %cst_7 = arith.constant 3.200000e+01 : f32
    %12 = vector.broadcast %cst_7 : f32 to vector<16x1xf32>
    %13 = arith.divf %11, %12 : vector<16x1xf32>
    %14 = vector.broadcast %6 : vector<16x1xf32> to vector<16x32xf32>
    %15 = arith.subf %0, %14 : vector<16x32xf32>
    %cst_8 = arith.constant 9.99999974E-6 : f32
    %16 = vector.broadcast %cst_8 : f32 to vector<16x1xf32>
    %17 = arith.addf %13, %16 : vector<16x1xf32>
    %18 = math.rsqrt %17 : vector<16x1xf32>
    %19 = vector.broadcast %18 : vector<16x1xf32> to vector<16x32xf32>
    %20 = arith.mulf %15, %19 : vector<16x32xf32>
    %21 = vector.broadcast %1 : vector<1x32xf32> to vector<16x32xf32>
    %22 = arith.mulf %20, %21 : vector<16x32xf32>
    %23 = vector.broadcast %2 : vector<1x32xf32> to vector<16x32xf32>
    %24 = arith.addf %22, %23 : vector<16x32xf32>
    %25 = arith.truncf %24 : vector<16x32xf32> to vector<16x32xbf16>
    %c0_9 = arith.constant 0 : index
    %c0_10 = arith.constant 0 : index
    %26 = vector.load %arg3[%c0_9, %c0_10] : memref<16x32xbf16, #tpu.memory_space<vmem>>, vector<16x32xbf16>
    tpu.vector_store %arg3[%c0_9, %c0_10], %25 {strides = array<i32>} : memref<16x32xbf16, #tpu.memory_space<vmem>>, vector<16x32xbf16>,
    return
  }
}

module attributes {stable_mosaic.version = 11 : i64} {
  func.func @_encoder_layer_kernel(%arg0: i32, %arg1: memref<1x8x32xbf16, #tpu.memory_space<vmem>>, %arg2: memref<1x1x8xf32, #tpu.memory_space<vmem>>, %arg3: memref<32x96xbf16, #tpu.memory_space<vmem>>, %arg4: memref<1x96xf32, #tpu.memory_space<vmem>>, %arg5: memref<32x32xbf16, #tpu.memory_space<vmem>>, %arg6: memref<1x32xf32, #tpu.memory_space<vmem>>, %arg7: memref<1x32xf32, #tpu.memory_space<vmem>>, %arg8: memref<1x32xf32, #tpu.memory_space<vmem>>, %arg9: memref<32x64xbf16, #tpu.memory_space<vmem>>, %arg10: memref<1x64xf32, #tpu.memory_space<vmem>>, %arg11: memref<64x32xbf16, #tpu.memory_space<vmem>>, %arg12: memref<1x32xf32, #tpu.memory_space<vmem>>, %arg13: memref<1x32xf32, #tpu.memory_space<vmem>>, %arg14: memref<1x32xf32, #tpu.memory_space<vmem>>, %arg15: memref<1x8x32xbf16, #tpu.memory_space<vmem>>) attributes {dimension_semantics = [#tpu.dimension_semantics<parallel>], iteration_bounds = array<i64: 2>, scalar_prefetch = 0 : i64, scratch_operands = 0 : i64, tpu.core_type = #tpu.core_type<tc>, window_params = [{transform_indices = @transform_0, window_bounds = array<i64: 1, 8, 32>}, {transform_indices = @transform_1, window_bounds = array<i64: 1, 1, 8>}, {pipeline_mode = #tpu.pipeline_mode<synchronous>, transform_indices = @transform_2, window_bounds = array<i64: 32, 96>}, {pipeline_mode = #tpu.pipeline_mode<synchronous>, transform_indices = @transform_3, window_bounds = array<i64: 1, 96>}, {pipeline_mode = #tpu.pipeline_mode<synchronous>, transform_indices = @transform_4, window_bounds = array<i64: 32, 32>}, {pipeline_mode = #tpu.pipeline_mode<synchronous>, transform_indices = @transform_5, window_bounds = array<i64: 1, 32>}, {pipeline_mode = #tpu.pipeline_mode<synchronous>, transform_indices = @transform_6, window_bounds = array<i64: 1, 32>}, {pipeline_mode = #tpu.pipeline_mode<synchronous>, transform_indices = @transform_7, window_bounds = array<i64: 1, 32>}, {pipeline_mode = #tpu.pipeline_mode<synchronous>, transform_indices = @transform_8, window_bounds = array<i64: 32, 64>}, {pipeline_mode = #tpu.pipeline_mode<synchronous>, transform_indices = @transform_9, window_bounds = array<i64: 1, 64>}, {pipeline_mode = #tpu.pipeline_mode<synchronous>, transform_indices = @transform_10, window_bounds = array<i64: 64, 32>}, {pipeline_mode = #tpu.pipeline_mode<synchronous>, transform_indices = @transform_11, window_bounds = array<i64: 1, 32>}, {pipeline_mode = #tpu.pipeline_mode<synchronous>, transform_indices = @transform_12, window_bounds = array<i64: 1, 32>}, {pipeline_mode = #tpu.pipeline_mode<synchronous>, transform_indices = @transform_13, window_bounds = array<i64: 1, 32>}, {transform_indices = @transform_14, window_bounds = array<i64: 1, 8, 32>}]} {
    %c0 = arith.constant 0 : index
    %c0_0 = arith.constant 0 : index
    %c0_1 = arith.constant 0 : index
    %0 = vector.load %arg1[%c0, %c0_0, %c0_1] : memref<1x8x32xbf16, #tpu.memory_space<vmem>>, vector<1x8x32xbf16>
    %1 = vector.shape_cast %0 : vector<1x8x32xbf16> to vector<8x32xbf16>
    %2 = arith.extf %1 : vector<8x32xbf16> to vector<8x32xf32>
    %c0_2 = arith.constant 0 : index
    %c0_3 = arith.constant 0 : index
    %c0_4 = arith.constant 0 : index
    %3 = vector.load %arg2[%c0_2, %c0_3, %c0_4] : memref<1x1x8xf32, #tpu.memory_space<vmem>>, vector<1x1x8xf32>
    %4 = vector.shape_cast %3 : vector<1x1x8xf32> to vector<1x8xf32>
    %c0_5 = arith.constant 0 : index
    %c0_6 = arith.constant 0 : index
    %5 = vector.load %arg3[%c0_5, %c0_6] : memref<32x96xbf16, #tpu.memory_space<vmem>>, vector<32x96xbf16>
    %cst = arith.constant dense<0.000000e+00> : vector<8x96xf32>
    %6 = tpu.matmul %1, %5, %cst {dimension_numbers = #tpu.dot_dimension_numbers<[1], [0], [0], [1], [0, 0, 1, 1], [], []>} : vector<8x32xbf16>, vector<32x96xbf16>, vector<8x96xf32> -> vector<8x96xf32>
    %c0_7 = arith.constant 0 : index
    %c0_8 = arith.constant 0 : index
    %7 = vector.load %arg4[%c0_7, %c0_8] : memref<1x96xf32, #tpu.memory_space<vmem>>, vector<1x96xf32>
    %8 = vector.broadcast %7 : vector<1x96xf32> to vector<8x96xf32>
    %9 = arith.addf %6, %8 : vector<8x96xf32>
    %10 = vector.extract_strided_slice %9 {offsets = [0, 0], sizes = [8, 16], strides = [1, 1]} : vector<8x96xf32> to vector<8x16xf32>
    %11 = arith.truncf %10 : vector<8x16xf32> to vector<8x16xbf16>
    %12 = vector.extract_strided_slice %9 {offsets = [0, 32], sizes = [8, 16], strides = [1, 1]} : vector<8x96xf32> to vector<8x16xf32>
    %13 = arith.truncf %12 : vector<8x16xf32> to vector<8x16xbf16>
    %14 = vector.extract_strided_slice %9 {offsets = [0, 64], sizes = [8, 16], strides = [1, 1]} : vector<8x96xf32> to vector<8x16xf32>
    %15 = arith.truncf %14 : vector<8x16xf32> to vector<8x16xbf16>
    "tpu.trace_start"() <{level = 10 : i32, message = "qd,kd->qk"}> : () -> ()
    %cst_9 = arith.constant dense<0.000000e+00> : vector<8x8xf32>
    %16 = tpu.matmul %11, %13, %cst_9 {dimension_numbers = #tpu.dot_dimension_numbers<[1], [1], [0], [0], [0, 0, 1, 0], [], []>} : vector<8x16xbf16>, vector<8x16xbf16>, vector<8x8xf32> -> vector<8x8xf32>
    "tpu.trace_stop"() : () -> ()
    %cst_10 = arith.constant 2.500000e-01 : f32
    %17 = vector.broadcast %cst_10 : f32 to vector<8x8xf32>
    %18 = arith.mulf %16, %17 : vector<8x8xf32>
    %19 = vector.broadcast %4 : vector<1x8xf32> to vector<8x8xf32>
    %20 = arith.addf %18, %19 : vector<8x8xf32>
    %cst_11 = arith.constant dense<0xFF800000> : vector<8xf32>
    %21 = vector.multi_reduction <maximumf>, %20, %cst_11 [1] : vector<8x8xf32> to vector<8xf32>
    %22 = vector.shape_cast %21 : vector<8xf32> to vector<8x1xf32>
    %23 = vector.broadcast %22 : vector<8x1xf32> to vector<8x8xf32>
    %24 = arith.subf %20, %23 : vector<8x8xf32>
    %25 = math.exp %24 : vector<8x8xf32>
    %cst_12 = arith.constant dense<0.000000e+00> : vector<8xf32>
    %26 = vector.multi_reduction <add>, %25, %cst_12 [1] : vector<8x8xf32> to vector<8xf32>
    %27 = vector.shape_cast %26 : vector<8xf32> to vector<8x1xf32>
    %28 = tpu.reciprocal %27 {approx = true} : vector<8x1xf32> -> vector<8x1xf32>
    %29 = vector.broadcast %28 : vector<8x1xf32> to vector<8x8xf32>
    %30 = arith.mulf %25, %29 : vector<8x8xf32>
    %31 = arith.truncf %30 : vector<8x8xf32> to vector<8x8xbf16>
    %cst_13 = arith.constant dense<0.000000e+00> : vector<8x16xf32>
    %32 = tpu.matmul %31, %15, %cst_13 {dimension_numbers = #tpu.dot_dimension_numbers<[1], [0], [0], [1], [0, 0, 1, 1], [], []>} : vector<8x8xbf16>, vector<8x16xbf16>, vector<8x16xf32> -> vector<8x16xf32>
    %33 = vector.extract_strided_slice %9 {offsets = [0, 16], sizes = [8, 16], strides = [1, 1]} : vector<8x96xf32> to vector<8x16xf32>
    %34 = arith.truncf %33 : vector<8x16xf32> to vector<8x16xbf16>
    %35 = vector.extract_strided_slice %9 {offsets = [0, 48], sizes = [8, 16], strides = [1, 1]} : vector<8x96xf32> to vector<8x16xf32>
    %36 = arith.truncf %35 : vector<8x16xf32> to vector<8x16xbf16>
    %37 = vector.extract_strided_slice %9 {offsets = [0, 80], sizes = [8, 16], strides = [1, 1]} : vector<8x96xf32> to vector<8x16xf32>
    %38 = arith.truncf %37 : vector<8x16xf32> to vector<8x16xbf16>
    "tpu.trace_start"() <{level = 10 : i32, message = "qd,kd->qk"}> : () -> ()
    %cst_14 = arith.constant dense<0.000000e+00> : vector<8x8xf32>
    %39 = tpu.matmul %34, %36, %cst_14 {dimension_numbers = #tpu.dot_dimension_numbers<[1], [1], [0], [0], [0, 0, 1, 0], [], []>} : vector<8x16xbf16>, vector<8x16xbf16>, vector<8x8xf32> -> vector<8x8xf32>
    "tpu.trace_stop"() : () -> ()
    %cst_15 = arith.constant 2.500000e-01 : f32
    %40 = vector.broadcast %cst_15 : f32 to vector<8x8xf32>
    %41 = arith.mulf %39, %40 : vector<8x8xf32>
    %42 = vector.broadcast %4 : vector<1x8xf32> to vector<8x8xf32>
    %43 = arith.addf %41, %42 : vector<8x8xf32>
    %cst_16 = arith.constant dense<0xFF800000> : vector<8xf32>
    %44 = vector.multi_reduction <maximumf>, %43, %cst_16 [1] : vector<8x8xf32> to vector<8xf32>
    %45 = vector.shape_cast %44 : vector<8xf32> to vector<8x1xf32>
    %46 = vector.broadcast %45 : vector<8x1xf32> to vector<8x8xf32>
    %47 = arith.subf %43, %46 : vector<8x8xf32>
    %48 = math.exp %47 : vector<8x8xf32>
    %cst_17 = arith.constant dense<0.000000e+00> : vector<8xf32>
    %49 = vector.multi_reduction <add>, %48, %cst_17 [1] : vector<8x8xf32> to vector<8xf32>
    %50 = vector.shape_cast %49 : vector<8xf32> to vector<8x1xf32>
    %51 = tpu.reciprocal %50 {approx = true} : vector<8x1xf32> -> vector<8x1xf32>
    %52 = vector.broadcast %51 : vector<8x1xf32> to vector<8x8xf32>
    %53 = arith.mulf %48, %52 : vector<8x8xf32>
    %54 = arith.truncf %53 : vector<8x8xf32> to vector<8x8xbf16>
    %cst_18 = arith.constant dense<0.000000e+00> : vector<8x16xf32>
    %55 = tpu.matmul %54, %38, %cst_18 {dimension_numbers = #tpu.dot_dimension_numbers<[1], [0], [0], [1], [0, 0, 1, 1], [], []>} : vector<8x8xbf16>, vector<8x16xbf16>, vector<8x16xf32> -> vector<8x16xf32>
    %56 = tpu.concatenate %32, %55 in 1 : vector<8x16xf32>, vector<8x16xf32> -> vector<8x32xf32>
    %57 = arith.truncf %56 : vector<8x32xf32> to vector<8x32xbf16>
    %c0_19 = arith.constant 0 : index
    %c0_20 = arith.constant 0 : index
    %58 = vector.load %arg5[%c0_19, %c0_20] : memref<32x32xbf16, #tpu.memory_space<vmem>>, vector<32x32xbf16>
    %cst_21 = arith.constant dense<0.000000e+00> : vector<8x32xf32>
    %59 = tpu.matmul %57, %58, %cst_21 {dimension_numbers = #tpu.dot_dimension_numbers<[1], [0], [0], [1], [0, 0, 1, 1], [], []>} : vector<8x32xbf16>, vector<32x32xbf16>, vector<8x32xf32> -> vector<8x32xf32>
    %c0_22 = arith.constant 0 : index
    %c0_23 = arith.constant 0 : index
    %60 = vector.load %arg6[%c0_22, %c0_23] : memref<1x32xf32, #tpu.memory_space<vmem>>, vector<1x32xf32>
    %61 = vector.broadcast %60 : vector<1x32xf32> to vector<8x32xf32>
    %62 = arith.addf %59, %61 : vector<8x32xf32>
    %63 = arith.addf %62, %2 : vector<8x32xf32>
    %c0_24 = arith.constant 0 : index
    %c0_25 = arith.constant 0 : index
    %64 = vector.load %arg7[%c0_24, %c0_25] : memref<1x32xf32, #tpu.memory_space<vmem>>, vector<1x32xf32>
    %c0_26 = arith.constant 0 : index
    %c0_27 = arith.constant 0 : index
    %65 = vector.load %arg8[%c0_26, %c0_27] : memref<1x32xf32, #tpu.memory_space<vmem>>, vector<1x32xf32>
    %cst_28 = arith.constant dense<0.000000e+00> : vector<8xf32>
    %66 = vector.multi_reduction <add>, %63, %cst_28 [1] : vector<8x32xf32> to vector<8xf32>
    %67 = vector.shape_cast %66 : vector<8xf32> to vector<8x1xf32>
    %cst_29 = arith.constant 3.200000e+01 : f32
    %68 = vector.broadcast %cst_29 : f32 to vector<8x1xf32>
    %69 = arith.divf %67, %68 : vector<8x1xf32>
    %70 = vector.broadcast %69 : vector<8x1xf32> to vector<8x32xf32>
    %71 = arith.subf %63, %70 : vector<8x32xf32>
    %72 = arith.mulf %71, %71 : vector<8x32xf32>
    %cst_30 = arith.constant dense<0.000000e+00> : vector<8xf32>
    %73 = vector.multi_reduction <add>, %72, %cst_30 [1] : vector<8x32xf32> to vector<8xf32>
    %74 = vector.shape_cast %73 : vector<8xf32> to vector<8x1xf32>
    %cst_31 = arith.constant 3.200000e+01 : f32
    %75 = vector.broadcast %cst_31 : f32 to vector<8x1xf32>
    %76 = arith.divf %74, %75 : vector<8x1xf32>
    %77 = vector.broadcast %69 : vector<8x1xf32> to vector<8x32xf32>
    %78 = arith.subf %63, %77 : vector<8x32xf32>
    %cst_32 = arith.constant 9.99999974E-6 : f32
    %79 = vector.broadcast %cst_32 : f32 to vector<8x1xf32>
    %80 = arith.addf %76, %79 : vector<8x1xf32>
    %81 = math.rsqrt %80 : vector<8x1xf32>
    %82 = vector.broadcast %81 : vector<8x1xf32> to vector<8x32xf32>
    %83 = arith.mulf %78, %82 : vector<8x32xf32>
    %84 = vector.broadcast %64 : vector<1x32xf32> to vector<8x32xf32>
    %85 = arith.mulf %83, %84 : vector<8x32xf32>
    %86 = vector.broadcast %65 : vector<1x32xf32> to vector<8x32xf32>
    %87 = arith.addf %85, %86 : vector<8x32xf32>
    %88 = arith.truncf %87 : vector<8x32xf32> to vector<8x32xbf16>
    %c0_33 = arith.constant 0 : index
    %c0_34 = arith.constant 0 : index
    %89 = vector.load %arg9[%c0_33, %c0_34] : memref<32x64xbf16, #tpu.memory_space<vmem>>, vector<32x64xbf16>
    %cst_35 = arith.constant dense<0.000000e+00> : vector<8x64xf32>
    %90 = tpu.matmul %88, %89, %cst_35 {dimension_numbers = #tpu.dot_dimension_numbers<[1], [0], [0], [1], [0, 0, 1, 1], [], []>} : vector<8x32xbf16>, vector<32x64xbf16>, vector<8x64xf32> -> vector<8x64xf32>
    %c0_36 = arith.constant 0 : index
    %c0_37 = arith.constant 0 : index
    %91 = vector.load %arg10[%c0_36, %c0_37] : memref<1x64xf32, #tpu.memory_space<vmem>>, vector<1x64xf32>
    %92 = vector.broadcast %91 : vector<1x64xf32> to vector<8x64xf32>
    %93 = arith.addf %90, %92 : vector<8x64xf32>
    %cst_38 = arith.constant 5.000000e-01 : f32
    %94 = vector.broadcast %cst_38 : f32 to vector<8x64xf32>
    %95 = arith.mulf %94, %93 : vector<8x64xf32>
    %cst_39 = arith.constant 0.707106769 : f32
    %96 = vector.broadcast %cst_39 : f32 to vector<8x64xf32>
    %97 = arith.mulf %93, %96 : vector<8x64xf32>
    %98 = math.erf %97 : vector<8x64xf32>
    %cst_40 = arith.constant 1.000000e+00 : f32
    %99 = vector.broadcast %cst_40 : f32 to vector<8x64xf32>
    %100 = arith.addf %99, %98 : vector<8x64xf32>
    %101 = arith.mulf %95, %100 : vector<8x64xf32>
    %102 = arith.truncf %101 : vector<8x64xf32> to vector<8x64xbf16>
    %c0_41 = arith.constant 0 : index
    %c0_42 = arith.constant 0 : index
    %103 = vector.load %arg11[%c0_41, %c0_42] : memref<64x32xbf16, #tpu.memory_space<vmem>>, vector<64x32xbf16>
    %cst_43 = arith.constant dense<0.000000e+00> : vector<8x32xf32>
    %104 = tpu.matmul %102, %103, %cst_43 {dimension_numbers = #tpu.dot_dimension_numbers<[1], [0], [0], [1], [0, 0, 1, 1], [], []>} : vector<8x64xbf16>, vector<64x32xbf16>, vector<8x32xf32> -> vector<8x32xf32>
    %c0_44 = arith.constant 0 : index
    %c0_45 = arith.constant 0 : index
    %105 = vector.load %arg12[%c0_44, %c0_45] : memref<1x32xf32, #tpu.memory_space<vmem>>, vector<1x32xf32>
    %106 = vector.broadcast %105 : vector<1x32xf32> to vector<8x32xf32>
    %107 = arith.addf %104, %106 : vector<8x32xf32>
    %108 = arith.addf %107, %87 : vector<8x32xf32>
    %c0_46 = arith.constant 0 : index
    %c0_47 = arith.constant 0 : index
    %109 = vector.load %arg13[%c0_46, %c0_47] : memref<1x32xf32, #tpu.memory_space<vmem>>, vector<1x32xf32>
    %c0_48 = arith.constant 0 : index
    %c0_49 = arith.constant 0 : index
    %110 = vector.load %arg14[%c0_48, %c0_49] : memref<1x32xf32, #tpu.memory_space<vmem>>, vector<1x32xf32>
    %cst_50 = arith.constant dense<0.000000e+00> : vector<8xf32>
    %111 = vector.multi_reduction <add>, %108, %cst_50 [1] : vector<8x32xf32> to vector<8xf32>
    %112 = vector.shape_cast %111 : vector<8xf32> to vector<8x1xf32>
    %cst_51 = arith.constant 3.200000e+01 : f32
    %113 = vector.broadcast %cst_51 : f32 to vector<8x1xf32>
    %114 = arith.divf %112, %113 : vector<8x1xf32>
    %115 = vector.broadcast %114 : vector<8x1xf32> to vector<8x32xf32>
    %116 = arith.subf %108, %115 : vector<8x32xf32>
    %117 = arith.mulf %116, %116 : vector<8x32xf32>
    %cst_52 = arith.constant dense<0.000000e+00> : vector<8xf32>
    %118 = vector.multi_reduction <add>, %117, %cst_52 [1] : vector<8x32xf32> to vector<8xf32>
    %119 = vector.shape_cast %118 : vector<8xf32> to vector<8x1xf32>
    %cst_53 = arith.constant 3.200000e+01 : f32
    %120 = vector.broadcast %cst_53 : f32 to vector<8x1xf32>
    %121 = arith.divf %119, %120 : vector<8x1xf32>
    %122 = vector.broadcast %114 : vector<8x1xf32> to vector<8x32xf32>
    %123 = arith.subf %108, %122 : vector<8x32xf32>
    %cst_54 = arith.constant 9.99999974E-6 : f32
    %124 = vector.broadcast %cst_54 : f32 to vector<8x1xf32>
    %125 = arith.addf %121, %124 : vector<8x1xf32>
    %126 = math.rsqrt %125 : vector<8x1xf32>
    %127 = vector.broadcast %126 : vector<8x1xf32> to vector<8x32xf32>
    %128 = arith.mulf %123, %127 : vector<8x32xf32>
    %129 = vector.broadcast %109 : vector<1x32xf32> to vector<8x32xf32>
    %130 = arith.mulf %128, %129 : vector<8x32xf32>
    %131 = vector.broadcast %110 : vector<1x32xf32> to vector<8x32xf32>
    %132 = arith.addf %130, %131 : vector<8x32xf32>
    %133 = arith.truncf %132 : vector<8x32xf32> to vector<8x32xbf16>
    %c0_55 = arith.constant 0 : index
    %c0_56 = arith.constant 0 : index
    %c0_57 = arith.constant 0 : index
    %134 = vector.load %arg15[%c0_55, %c0_56, %c0_57] : memref<1x8x32xbf16, #tpu.memory_space<vmem>>, vector<1x8x32xbf16>
    %135 = vector.shape_cast %134 : vector<1x8x32xbf16> to vector<8x32xbf16>
    %136 = vector.shape_cast %133 : vector<8x32xbf16> to vector<1x8x32xbf16>
    tpu.vector_store %arg15[%c0_55, %c0_56, %c0_57], %136 {strides = array<i32>} : memref<1x8x32xbf16, #tpu.memory_space<vmem>>, vector<1x8x32xbf16>,
    return
  }
  func.func @transform_0(%arg0: i32) -> (i32, i32, i32) {
    %c0_i32 = arith.constant 0 : i32
    %c0_i32_0 = arith.constant 0 : i32
    %c0_i32_1 = arith.constant 0 : i32
    return %arg0, %c0_i32, %c0_i32_0 : i32, i32, i32
  }
  func.func @transform_1(%arg0: i32) -> (i32, i32, i32) {
    %c0_i32 = arith.constant 0 : i32
    %c0_i32_0 = arith.constant 0 : i32
    %c0_i32_1 = arith.constant 0 : i32
    return %arg0, %c0_i32, %c0_i32_0 : i32, i32, i32
  }
  func.func @transform_2(%arg0: i32) -> (i32, i32) {
    %c0_i32 = arith.constant 0 : i32
    %c0_i32_0 = arith.constant 0 : i32
    %c0_i32_1 = arith.constant 0 : i32
    return %c0_i32, %c0_i32_0 : i32, i32
  }
  func.func @transform_3(%arg0: i32) -> (i32, i32) {
    %c0_i32 = arith.constant 0 : i32
    %c0_i32_0 = arith.constant 0 : i32
    %c0_i32_1 = arith.constant 0 : i32
    return %c0_i32, %c0_i32_0 : i32, i32
  }
  func.func @transform_4(%arg0: i32) -> (i32, i32) {
    %c0_i32 = arith.constant 0 : i32
    %c0_i32_0 = arith.constant 0 : i32
    %c0_i32_1 = arith.constant 0 : i32
    return %c0_i32, %c0_i32_0 : i32, i32
  }
  func.func @transform_5(%arg0: i32) -> (i32, i32) {
    %c0_i32 = arith.constant 0 : i32
    %c0_i32_0 = arith.constant 0 : i32
    %c0_i32_1 = arith.constant 0 : i32
    return %c0_i32, %c0_i32_0 : i32, i32
  }
  func.func @transform_6(%arg0: i32) -> (i32, i32) {
    %c0_i32 = arith.constant 0 : i32
    %c0_i32_0 = arith.constant 0 : i32
    %c0_i32_1 = arith.constant 0 : i32
    return %c0_i32, %c0_i32_0 : i32, i32
  }
  func.func @transform_7(%arg0: i32) -> (i32, i32) {
    %c0_i32 = arith.constant 0 : i32
    %c0_i32_0 = arith.constant 0 : i32
    %c0_i32_1 = arith.constant 0 : i32
    return %c0_i32, %c0_i32_0 : i32, i32
  }
  func.func @transform_8(%arg0: i32) -> (i32, i32) {
    %c0_i32 = arith.constant 0 : i32
    %c0_i32_0 = arith.constant 0 : i32
    %c0_i32_1 = arith.constant 0 : i32
    return %c0_i32, %c0_i32_0 : i32, i32
  }
  func.func @transform_9(%arg0: i32) -> (i32, i32) {
    %c0_i32 = arith.constant 0 : i32
    %c0_i32_0 = arith.constant 0 : i32
    %c0_i32_1 = arith.constant 0 : i32
    return %c0_i32, %c0_i32_0 : i32, i32
  }
  func.func @transform_10(%arg0: i32) -> (i32, i32) {
    %c0_i32 = arith.constant 0 : i32
    %c0_i32_0 = arith.constant 0 : i32
    %c0_i32_1 = arith.constant 0 : i32
    return %c0_i32, %c0_i32_0 : i32, i32
  }
  func.func @transform_11(%arg0: i32) -> (i32, i32) {
    %c0_i32 = arith.constant 0 : i32
    %c0_i32_0 = arith.constant 0 : i32
    %c0_i32_1 = arith.constant 0 : i32
    return %c0_i32, %c0_i32_0 : i32, i32
  }
  func.func @transform_12(%arg0: i32) -> (i32, i32) {
    %c0_i32 = arith.constant 0 : i32
    %c0_i32_0 = arith.constant 0 : i32
    %c0_i32_1 = arith.constant 0 : i32
    return %c0_i32, %c0_i32_0 : i32, i32
  }
  func.func @transform_13(%arg0: i32) -> (i32, i32) {
    %c0_i32 = arith.constant 0 : i32
    %c0_i32_0 = arith.constant 0 : i32
    %c0_i32_1 = arith.constant 0 : i32
    return %c0_i32, %c0_i32_0 : i32, i32
  }
  func.func @transform_14(%arg0: i32) -> (i32, i32, i32) {
    %c0_i32 = arith.constant 0 : i32
    %c0_i32_0 = arith.constant 0 : i32
    %c0_i32_1 = arith.constant 0 : i32
    return %arg0, %c0_i32, %c0_i32_0 : i32, i32, i32
  }
}

module attributes {stable_mosaic.version = 11 : i64} {
  func.func @_heads_kernel(%arg0: memref<2x32xbf16, #tpu.memory_space<vmem>>, %arg1: memref<32x32xbf16, #tpu.memory_space<vmem>>, %arg2: memref<1x32xf32, #tpu.memory_space<vmem>>, %arg3: memref<32x128xbf16, #tpu.memory_space<vmem>>, %arg4: memref<1x128xf32, #tpu.memory_space<vmem>>, %arg5: memref<64x32xbf16, #tpu.memory_space<vmem>>, %arg6: memref<1x32xf32, #tpu.memory_space<vmem>>, %arg7: memref<1x32xf32, #tpu.memory_space<vmem>>, %arg8: memref<1x32xf32, #tpu.memory_space<vmem>>, %arg9: memref<64x32xbf16, #tpu.memory_space<vmem>>, %arg10: memref<1x32xf32, #tpu.memory_space<vmem>>, %arg11: memref<1x32xf32, #tpu.memory_space<vmem>>, %arg12: memref<1x32xf32, #tpu.memory_space<vmem>>, %arg13: memref<32x1xbf16, #tpu.memory_space<vmem>>, %arg14: memref<1x1xf32, #tpu.memory_space<vmem>>, %arg15: memref<32x1xbf16, #tpu.memory_space<vmem>>, %arg16: memref<1x1xf32, #tpu.memory_space<vmem>>, %arg17: memref<2x32xf32, #tpu.memory_space<vmem>>, %arg18: memref<2x2xf32, #tpu.memory_space<vmem>>) attributes {dimension_semantics = [], scalar_prefetch = 0 : i64, scratch_operands = 0 : i64, tpu.core_type = #tpu.core_type<tc>} {
    %c0 = arith.constant 0 : index
    %c0_0 = arith.constant 0 : index
    %0 = vector.load %arg0[%c0, %c0_0] : memref<2x32xbf16, #tpu.memory_space<vmem>>, vector<2x32xbf16>
    %c0_1 = arith.constant 0 : index
    %c0_2 = arith.constant 0 : index
    %1 = vector.load %arg1[%c0_1, %c0_2] : memref<32x32xbf16, #tpu.memory_space<vmem>>, vector<32x32xbf16>
    %cst = arith.constant dense<0.000000e+00> : vector<2x32xf32>
    %2 = tpu.matmul %0, %1, %cst {dimension_numbers = #tpu.dot_dimension_numbers<[1], [0], [0], [1], [0, 0, 1, 1], [], []>} : vector<2x32xbf16>, vector<32x32xbf16>, vector<2x32xf32> -> vector<2x32xf32>
    %c0_3 = arith.constant 0 : index
    %c0_4 = arith.constant 0 : index
    %3 = vector.load %arg2[%c0_3, %c0_4] : memref<1x32xf32, #tpu.memory_space<vmem>>, vector<1x32xf32>
    %4 = vector.broadcast %3 : vector<1x32xf32> to vector<2x32xf32>
    %5 = arith.addf %2, %4 : vector<2x32xf32>
    %6 = math.tanh %5 : vector<2x32xf32>
    %c0_5 = arith.constant 0 : index
    %c0_6 = arith.constant 0 : index
    %7 = vector.load %arg17[%c0_5, %c0_6] : memref<2x32xf32, #tpu.memory_space<vmem>>, vector<2x32xf32>
    tpu.vector_store %arg17[%c0_5, %c0_6], %6 {strides = array<i32>} : memref<2x32xf32, #tpu.memory_space<vmem>>, vector<2x32xf32>,
    %8 = arith.truncf %6 : vector<2x32xf32> to vector<2x32xbf16>
    %c0_7 = arith.constant 0 : index
    %c0_8 = arith.constant 0 : index
    %9 = vector.load %arg3[%c0_7, %c0_8] : memref<32x128xbf16, #tpu.memory_space<vmem>>, vector<32x128xbf16>
    %cst_9 = arith.constant dense<0.000000e+00> : vector<2x128xf32>
    %10 = tpu.matmul %8, %9, %cst_9 {dimension_numbers = #tpu.dot_dimension_numbers<[1], [0], [0], [1], [0, 0, 1, 1], [], []>} : vector<2x32xbf16>, vector<32x128xbf16>, vector<2x128xf32> -> vector<2x128xf32>
    %c0_10 = arith.constant 0 : index
    %c0_11 = arith.constant 0 : index
    %11 = vector.load %arg4[%c0_10, %c0_11] : memref<1x128xf32, #tpu.memory_space<vmem>>, vector<1x128xf32>
    %12 = vector.broadcast %11 : vector<1x128xf32> to vector<2x128xf32>
    %13 = arith.addf %10, %12 : vector<2x128xf32>
    %cst_12 = arith.constant 5.000000e-01 : f32
    %14 = vector.broadcast %cst_12 : f32 to vector<2x128xf32>
    %15 = arith.mulf %14, %13 : vector<2x128xf32>
    %cst_13 = arith.constant 0.707106769 : f32
    %16 = vector.broadcast %cst_13 : f32 to vector<2x128xf32>
    %17 = arith.mulf %13, %16 : vector<2x128xf32>
    %18 = math.erf %17 : vector<2x128xf32>
    %cst_14 = arith.constant 1.000000e+00 : f32
    %19 = vector.broadcast %cst_14 : f32 to vector<2x128xf32>
    %20 = arith.addf %19, %18 : vector<2x128xf32>
    %21 = arith.mulf %15, %20 : vector<2x128xf32>
    %22 = vector.extract_strided_slice %21 {offsets = [0, 0], sizes = [2, 64], strides = [1, 1]} : vector<2x128xf32> to vector<2x64xf32>
    %c0_15 = arith.constant 0 : index
    %c0_16 = arith.constant 0 : index
    %23 = vector.load %arg5[%c0_15, %c0_16] : memref<64x32xbf16, #tpu.memory_space<vmem>>, vector<64x32xbf16>
    %c0_17 = arith.constant 0 : index
    %c0_18 = arith.constant 0 : index
    %24 = vector.load %arg6[%c0_17, %c0_18] : memref<1x32xf32, #tpu.memory_space<vmem>>, vector<1x32xf32>
    %c0_19 = arith.constant 0 : index
    %c0_20 = arith.constant 0 : index
    %25 = vector.load %arg7[%c0_19, %c0_20] : memref<1x32xf32, #tpu.memory_space<vmem>>, vector<1x32xf32>
    %c0_21 = arith.constant 0 : index
    %c0_22 = arith.constant 0 : index
    %26 = vector.load %arg8[%c0_21, %c0_22] : memref<1x32xf32, #tpu.memory_space<vmem>>, vector<1x32xf32>
    %27 = arith.truncf %22 : vector<2x64xf32> to vector<2x64xbf16>
    %cst_23 = arith.constant dense<0.000000e+00> : vector<2x32xf32>
    %28 = tpu.matmul %27, %23, %cst_23 {dimension_numbers = #tpu.dot_dimension_numbers<[1], [0], [0], [1], [0, 0, 1, 1], [], []>} : vector<2x64xbf16>, vector<64x32xbf16>, vector<2x32xf32> -> vector<2x32xf32>
    %29 = vector.broadcast %24 : vector<1x32xf32> to vector<2x32xf32>
    %30 = arith.addf %28, %29 : vector<2x32xf32>
    %31 = arith.addf %30, %6 : vector<2x32xf32>
    %cst_24 = arith.constant dense<0.000000e+00> : vector<2xf32>
    %32 = vector.multi_reduction <add>, %31, %cst_24 [1] : vector<2x32xf32> to vector<2xf32>
    %33 = vector.shape_cast %32 : vector<2xf32> to vector<2x1xf32>
    %cst_25 = arith.constant 3.200000e+01 : f32
    %34 = vector.broadcast %cst_25 : f32 to vector<2x1xf32>
    %35 = arith.divf %33, %34 : vector<2x1xf32>
    %36 = vector.broadcast %35 : vector<2x1xf32> to vector<2x32xf32>
    %37 = arith.subf %31, %36 : vector<2x32xf32>
    %38 = arith.mulf %37, %37 : vector<2x32xf32>
    %cst_26 = arith.constant dense<0.000000e+00> : vector<2xf32>
    %39 = vector.multi_reduction <add>, %38, %cst_26 [1] : vector<2x32xf32> to vector<2xf32>
    %40 = vector.shape_cast %39 : vector<2xf32> to vector<2x1xf32>
    %cst_27 = arith.constant 3.200000e+01 : f32
    %41 = vector.broadcast %cst_27 : f32 to vector<2x1xf32>
    %42 = arith.divf %40, %41 : vector<2x1xf32>
    %43 = vector.broadcast %35 : vector<2x1xf32> to vector<2x32xf32>
    %44 = arith.subf %31, %43 : vector<2x32xf32>
    %cst_28 = arith.constant 9.99999974E-6 : f32
    %45 = vector.broadcast %cst_28 : f32 to vector<2x1xf32>
    %46 = arith.addf %42, %45 : vector<2x1xf32>
    %47 = math.rsqrt %46 : vector<2x1xf32>
    %48 = vector.broadcast %47 : vector<2x1xf32> to vector<2x32xf32>
    %49 = arith.mulf %44, %48 : vector<2x32xf32>
    %50 = vector.broadcast %25 : vector<1x32xf32> to vector<2x32xf32>
    %51 = arith.mulf %49, %50 : vector<2x32xf32>
    %52 = vector.broadcast %26 : vector<1x32xf32> to vector<2x32xf32>
    %53 = arith.addf %51, %52 : vector<2x32xf32>
    %54 = vector.extract_strided_slice %21 {offsets = [0, 64], sizes = [2, 64], strides = [1, 1]} : vector<2x128xf32> to vector<2x64xf32>
    %c0_29 = arith.constant 0 : index
    %c0_30 = arith.constant 0 : index
    %55 = vector.load %arg9[%c0_29, %c0_30] : memref<64x32xbf16, #tpu.memory_space<vmem>>, vector<64x32xbf16>
    %c0_31 = arith.constant 0 : index
    %c0_32 = arith.constant 0 : index
    %56 = vector.load %arg10[%c0_31, %c0_32] : memref<1x32xf32, #tpu.memory_space<vmem>>, vector<1x32xf32>
    %c0_33 = arith.constant 0 : index
    %c0_34 = arith.constant 0 : index
    %57 = vector.load %arg11[%c0_33, %c0_34] : memref<1x32xf32, #tpu.memory_space<vmem>>, vector<1x32xf32>
    %c0_35 = arith.constant 0 : index
    %c0_36 = arith.constant 0 : index
    %58 = vector.load %arg12[%c0_35, %c0_36] : memref<1x32xf32, #tpu.memory_space<vmem>>, vector<1x32xf32>
    %59 = arith.truncf %54 : vector<2x64xf32> to vector<2x64xbf16>
    %cst_37 = arith.constant dense<0.000000e+00> : vector<2x32xf32>
    %60 = tpu.matmul %59, %55, %cst_37 {dimension_numbers = #tpu.dot_dimension_numbers<[1], [0], [0], [1], [0, 0, 1, 1], [], []>} : vector<2x64xbf16>, vector<64x32xbf16>, vector<2x32xf32> -> vector<2x32xf32>
    %61 = vector.broadcast %56 : vector<1x32xf32> to vector<2x32xf32>
    %62 = arith.addf %60, %61 : vector<2x32xf32>
    %63 = arith.addf %62, %6 : vector<2x32xf32>
    %cst_38 = arith.constant dense<0.000000e+00> : vector<2xf32>
    %64 = vector.multi_reduction <add>, %63, %cst_38 [1] : vector<2x32xf32> to vector<2xf32>
    %65 = vector.shape_cast %64 : vector<2xf32> to vector<2x1xf32>
    %cst_39 = arith.constant 3.200000e+01 : f32
    %66 = vector.broadcast %cst_39 : f32 to vector<2x1xf32>
    %67 = arith.divf %65, %66 : vector<2x1xf32>
    %68 = vector.broadcast %67 : vector<2x1xf32> to vector<2x32xf32>
    %69 = arith.subf %63, %68 : vector<2x32xf32>
    %70 = arith.mulf %69, %69 : vector<2x32xf32>
    %cst_40 = arith.constant dense<0.000000e+00> : vector<2xf32>
    %71 = vector.multi_reduction <add>, %70, %cst_40 [1] : vector<2x32xf32> to vector<2xf32>
    %72 = vector.shape_cast %71 : vector<2xf32> to vector<2x1xf32>
    %cst_41 = arith.constant 3.200000e+01 : f32
    %73 = vector.broadcast %cst_41 : f32 to vector<2x1xf32>
    %74 = arith.divf %72, %73 : vector<2x1xf32>
    %75 = vector.broadcast %67 : vector<2x1xf32> to vector<2x32xf32>
    %76 = arith.subf %63, %75 : vector<2x32xf32>
    %cst_42 = arith.constant 9.99999974E-6 : f32
    %77 = vector.broadcast %cst_42 : f32 to vector<2x1xf32>
    %78 = arith.addf %74, %77 : vector<2x1xf32>
    %79 = math.rsqrt %78 : vector<2x1xf32>
    %80 = vector.broadcast %79 : vector<2x1xf32> to vector<2x32xf32>
    %81 = arith.mulf %76, %80 : vector<2x32xf32>
    %82 = vector.broadcast %57 : vector<1x32xf32> to vector<2x32xf32>
    %83 = arith.mulf %81, %82 : vector<2x32xf32>
    %84 = vector.broadcast %58 : vector<1x32xf32> to vector<2x32xf32>
    %85 = arith.addf %83, %84 : vector<2x32xf32>
    %86 = arith.truncf %53 : vector<2x32xf32> to vector<2x32xbf16>
    %c0_43 = arith.constant 0 : index
    %c0_44 = arith.constant 0 : index
    %87 = vector.load %arg13[%c0_43, %c0_44] : memref<32x1xbf16, #tpu.memory_space<vmem>>, vector<32x1xbf16>
    %cst_45 = arith.constant dense<0.000000e+00> : vector<2x1xf32>
    %88 = tpu.matmul %86, %87, %cst_45 {dimension_numbers = #tpu.dot_dimension_numbers<[1], [0], [0], [1], [0, 0, 1, 1], [], []>} : vector<2x32xbf16>, vector<32x1xbf16>, vector<2x1xf32> -> vector<2x1xf32>
    %c0_46 = arith.constant 0 : index
    %c0_47 = arith.constant 0 : index
    %89 = vector.load %arg14[%c0_46, %c0_47] : memref<1x1xf32, #tpu.memory_space<vmem>>, vector<1x1xf32>
    %90 = vector.broadcast %89 : vector<1x1xf32> to vector<2x1xf32>
    %91 = arith.addf %88, %90 : vector<2x1xf32>
    %92 = arith.truncf %85 : vector<2x32xf32> to vector<2x32xbf16>
    %c0_48 = arith.constant 0 : index
    %c0_49 = arith.constant 0 : index
    %93 = vector.load %arg15[%c0_48, %c0_49] : memref<32x1xbf16, #tpu.memory_space<vmem>>, vector<32x1xbf16>
    %cst_50 = arith.constant dense<0.000000e+00> : vector<2x1xf32>
    %94 = tpu.matmul %92, %93, %cst_50 {dimension_numbers = #tpu.dot_dimension_numbers<[1], [0], [0], [1], [0, 0, 1, 1], [], []>} : vector<2x32xbf16>, vector<32x1xbf16>, vector<2x1xf32> -> vector<2x1xf32>
    %c0_51 = arith.constant 0 : index
    %c0_52 = arith.constant 0 : index
    %95 = vector.load %arg16[%c0_51, %c0_52] : memref<1x1xf32, #tpu.memory_space<vmem>>, vector<1x1xf32>
    %96 = vector.broadcast %95 : vector<1x1xf32> to vector<2x1xf32>
    %97 = arith.addf %94, %96 : vector<2x1xf32>
    %98 = arith.negf %91 : vector<2x1xf32>
    %99 = math.exp %98 : vector<2x1xf32>
    %cst_53 = arith.constant 1.000000e+00 : f32
    %100 = vector.broadcast %cst_53 : f32 to vector<2x1xf32>
    %101 = arith.addf %100, %99 : vector<2x1xf32>
    %102 = arith.divf %100, %101 : vector<2x1xf32>
    %103 = tpu.concatenate %102, %97 in 1 : vector<2x1xf32>, vector<2x1xf32> -> vector<2x2xf32>
    %c0_54 = arith.constant 0 : index
    %c0_55 = arith.constant 0 : index
    %104 = vector.load %arg18[%c0_54, %c0_55] : memref<2x2xf32, #tpu.memory_space<vmem>>, vector<2x2xf32>
    tpu.vector_store %arg18[%c0_54, %c0_55], %103 {strides = array<i32>} : memref<2x2xf32, #tpu.memory_space<vmem>>, vector<2x2xf32>,
    return
  }
}

</mosaic_0001>

<llo_original>
// kernel: distinguish_forward.4
$region0: #{distinguish_forward.4}
  #allocation0 [shape = 'u32[]', space=smem, size = 0x4, offset = 0x4, fixed_abs, tag = 'smem constant byte address 0x4 - core index']
  #allocation1 [shape = 'u32[144,128]{1,0:T(1,128)}', space=vmem, size = 0x12000, scoped, tag = 'internal scratch']
  %s0 = inlined_call_operand.hbm [shape: f32[16,32], index: 0, kind: input, shape index: {}]
  %s1 = inlined_call_operand.hbm [shape: f32[1,32], index: 1, kind: input, shape index: {}]
  %s2 = inlined_call_operand.hbm [shape: f32[1,32], index: 2, kind: input, shape index: {}]
  %s3 = inlined_call_operand.hbm [shape: bf16[16,32], index: 3, kind: output, shape index: {}]
  %s4 = sld [smem:[#allocation0]]
  $region34: #{distinguish_forward.4} parent=0
    _
  %s6 = ssub.s32 1, %s4
  %s7 = scalar_select 0, %s6, %s4
  $region1: #{distinguish_forward.4} parent=0
    #allocation2 [shape = 'u8[8192]{0}', space=vmem, size = 0x2000, scoped, tag = 'input window, operand 0, single buffered']
    #allocation3 [shape = 's32[1]{0}', space=sflag, size = 0x4, scoped, tag = 'scoped memory for distinguish_forward.4']
    #allocation4 [shape = 's32[1]{0}', space=sflag, size = 0x4, scoped, tag = 'scoped memory for distinguish_forward.4']
    #allocation5 [shape = 'u8[512]{0}', space=vmem, size = 0x400, scoped, tag = 'input window, operand 1, single buffered']
    #allocation6 [shape = 's32[1]{0}', space=sflag, size = 0x4, scoped, tag = 'scoped memory for distinguish_forward.4']
    #allocation7 [shape = 'u8[512]{0}', space=vmem, size = 0x400, scoped, tag = 'input window, operand 2, single buffered']
    #allocation8 [shape = 'u8[4096]{0}', space=vmem, size = 0x1000, scoped, tag = 'output window, operand 0, single buffered']
    %8 = vsyncpa [#allocation3], 0
    %9 = vsyncpa [#allocation6], 0
    %10 = vsyncpa [#allocation4], 0
    // Predicated region
    $region2: #{distinguish_forward.4} parent=1 // pred_check
      _
    $region3: #{distinguish_forward.4} parent=1 // pred_check_branch
      %12 = sbr.rel (0) target = $region5
    $region4: #{distinguish_forward.4} parent=1 // pred_region
      %s14 = ssub.s32 256, 256
      %15 = vsyncadd [#allocation3], %s14
      %s16 = sshll.u32 [#allocation2], 4
      %s17 = int_to_ptr.vmem [resolvable:$true] %s16
      %22 = dma.hbm_to_vmem [thread:$0]  %s0, 256, %s17, [#allocation3], 128, 128, 8
    $region5: #{distinguish_forward.4} parent=1 // pred_fallthru
      _
    // Predicated region
    $region6: #{distinguish_forward.4} parent=1 // pred_check
      _
    $region7: #{distinguish_forward.4} parent=1 // pred_check_branch
      %24 = sbr.rel (0) target = $region9
    $region8: #{distinguish_forward.4} parent=1 // pred_region
      %s26 = ssub.s32 16, 16
      %27 = vsyncadd [#allocation6], %s26
      %s29 = sshll.u32 [#allocation5], 4
      %s30 = int_to_ptr.vmem [resolvable:$true] %s29
      %32 = dma.hbm_to_vmem [thread:$0]  %s1, 16, %s30, [#allocation6]
    $region9: #{distinguish_forward.4} parent=1 // pred_fallthru
      _
    // Predicated region
    $region10: #{distinguish_forward.4} parent=1 // pred_check
      _
    $region11: #{distinguish_forward.4} parent=1 // pred_check_branch
      %34 = sbr.rel (0) target = $region13
    $region12: #{distinguish_forward.4} parent=1 // pred_region
      %s36 = ssub.s32 16, 16
      %37 = vsyncadd [#allocation6], %s36
      %s39 = sshll.u32 [#allocation7], 4
      %s40 = int_to_ptr.vmem [resolvable:$true] %s39
      %42 = dma.hbm_to_vmem [thread:$0]  %s2, 16, %s40, [#allocation6]
    $region13: #{distinguish_forward.4} parent=1 // pred_fallthru
      _
    // Predicated region
    $region14: #{distinguish_forward.4} parent=1 // pred_check
      _
    $region15: #{distinguish_forward.4} parent=1 // pred_check_branch
      %44 = sbr.rel (0) target = $region17
    $region16: #{distinguish_forward.4} parent=1 // pred_region
      %45 = dma.done [#allocation3], 256
    $region17: #{distinguish_forward.4} parent=1 // pred_fallthru
      _
    // Predicated region
    $region18: #{distinguish_forward.4} parent=1 // pred_check
      _
    $region19: #{distinguish_forward.4} parent=1 // pred_check_branch
      %47 = sbr.rel (0) target = $region21
    $region20: #{distinguish_forward.4} parent=1 // pred_region
      %48 = dma.done [#allocation6], 16
    $region21: #{distinguish_forward.4} parent=1 // pred_fallthru
      _
    // Predicated region
    $region22: #{distinguish_forward.4} parent=1 // pred_check
      _
    $region23: #{distinguish_forward.4} parent=1 // pred_check_branch
      %50 = sbr.rel (0) target = $region25
    $region24: #{distinguish_forward.4} parent=1 // pred_region
      %51 = dma.done [#allocation6], 16
    $region25: #{distinguish_forward.4} parent=1 // pred_fallthru
      _
    %v52 = vld [vmem:[#allocation2] sm:$0xff]
    %v53 = vld [vmem:[#allocation2 + $0x8] sm:$0xff]
    %v54 = vld [vmem:[#allocation5] sm:$0x1]
    %v55 = vld [vmem:[#allocation7] sm:$0x1]
    %vm56 = vcmask 261120
    %v57 = vsel %vm56, %v52, 0.0
    %58 = vadd.xlane.f32.xlu0 %v57
    %v59 = vpop.xlane.xlu0 %58
    %v60 = vsel %vm56, %v53, 0.0
    %61 = vadd.xlane.f32.xlu0 %v60
    %v62 = vpop.xlane.xlu0 %61
    %v63 = vrcp.pop 32.0
    %v64 = vmul.f32 %v59, %v63
    %v65 = vmul.f32 %v62, %v63
    %v66 = vsub.f32 %v52, %v64
    %v67 = vsub.f32 %v53, %v65
    %v68 = vmul.f32 %v66, %v66
    %v69 = vmul.f32 %v67, %v67
    %v70 = vsel %vm56, %v68, 0.0
    %71 = vadd.xlane.f32.xlu0 %v70
    %v72 = vpop.xlane.xlu0 %71
    %v73 = vsel %vm56, %v69, 0.0
    %74 = vadd.xlane.f32.xlu0 %v73
    %v75 = vpop.xlane.xlu0 %74
    %v76 = vmul.f32 %v72, %v63
    %v77 = vmul.f32 %v75, %v63
    %v78 = vadd.f32 %v76, 1e-05
    %v79 = vadd.f32 %v77, 1e-05
    %v80 = vrsqrt.pop %v78
    %v81 = vrsqrt.pop %v79
    %v82 = vmul.f32 %v66, %v80
    %v83 = vmul.f32 %v67, %v81
    %v85 = vlaneseq
    %v86 = vshrl.u32 %v85, 7
    %v87 = vsub.s32 0, %v86
    %v88 = vrot.slane %v54, %v87
    %v90 = vmul.f32 %v82, %v88
    %v91 = vmul.f32 %v83, %v88
    %v93 = vlaneseq
    %v94 = vshrl.u32 %v93, 7
    %v95 = vsub.s32 0, %v94
    %v96 = vrot.slane %v55, %v95
    %v98 = vadd.f32 %v90, %v96
    %v99 = vadd.f32 %v91, %v96
    %v100 = vpack.c.bf16 %v99, %v98
    %v102 = vunpack.c.l.b16 %v100
    %v103 = vunpack.c.h.b16 %v100
    %v104 = vpack.c.b16 %v102, %v102
    %v105 = vpack.c.b16 %v103, %v103
    %vm108 = vcmask 257024
    %109 = vst.msk [vmem:[#allocation8] sm:$0xf] %vm108, %v104
    %110 = vst.msk [vmem:[#allocation8 + $0x4] sm:$0xf] %vm108, %v105
    // Predicated region
    $region26: #{distinguish_forward.4} parent=1 // pred_check
      _
    $region27: #{distinguish_forward.4} parent=1 // pred_check_branch
      %112 = sbr.rel (0) target = $region29
    $region28: #{distinguish_forward.4} parent=1 // pred_region
      %s114 = ssub.s32 128, 128
      %115 = vsyncadd [#allocation4], %s114
      %s116 = sshll.u32 [#allocation8], 4
      %s117 = int_to_ptr.vmem [resolvable:$true] %s116
      %122 = dma.vmem_to_hbm [thread:$0]  %s117, 128, %s3, [#allocation4], 64, 64, 4
    $region29: #{distinguish_forward.4} parent=1 // pred_fallthru
      _
    // Predicated region
    $region30: #{distinguish_forward.4} parent=1 // pred_check
      _
    $region31: #{distinguish_forward.4} parent=1 // pred_check_branch
      %124 = sbr.rel (0) target = $region33
    $region32: #{distinguish_forward.4} parent=1 // pred_region
      %125 = dma.done [#allocation4], 128
    $region33: #{distinguish_forward.4} parent=1 // pred_fallthru
      _
    %126 = vsyncpa [#allocation3], 1
    %127 = vsyncpa [#allocation6], 1
    %128 = vsyncpa [#allocation4], 1

// kernel: distinguish_forward.7
$region0: #{distinguish_forward.7}
  #allocation0 [shape = 'u32[]', space=smem, size = 0x4, offset = 0x4, fixed_abs, tag = 'smem constant byte address 0x4 - core index']
  #allocation1 [shape = 'u32[144,128]{1,0:T(1,128)}', space=vmem, size = 0x12000, scoped, tag = 'internal scratch']
  #allocation2 [shape = 'f32[1,1]{1,0:T(1,128)S(1)}', space=vmem, size = 0x200, scoped, tag = 'scoped memory for distinguish_forward.7']
  #allocation3 [shape = 'f32[1,1]{1,0:T(1,128)S(1)}', space=vmem, size = 0x200, scoped, tag = 'scoped memory for distinguish_forward.7']
  %s0 = inlined_call_operand.hbm [shape: bf16[2,32], index: 0, kind: input, shape index: {}]
  %s1 = inlined_call_operand.hbm [shape: bf16[32,32], index: 1, kind: input, shape index: {}]
  %s2 = inlined_call_operand.hbm [shape: f32[1,32], index: 2, kind: input, shape index: {}]
  %s3 = inlined_call_operand.hbm [shape: bf16[32,128], index: 3, kind: input, shape index: {}]
  %s4 = inlined_call_operand.hbm [shape: f32[1,128], index: 4, kind: input, shape index: {}]
  %s5 = inlined_call_operand.hbm [shape: bf16[64,32], index: 5, kind: input, shape index: {}]
  %s6 = inlined_call_operand.hbm [shape: f32[1,32], index: 6, kind: input, shape index: {}]
  %s7 = inlined_call_operand.hbm [shape: f32[1,32], index: 7, kind: input, shape index: {}]
  %s8 = inlined_call_operand.hbm [shape: f32[1,32], index: 8, kind: input, shape index: {}]
  %s9 = inlined_call_operand.hbm [shape: bf16[64,32], index: 9, kind: input, shape index: {}]
  %s10 = inlined_call_operand.hbm [shape: f32[1,32], index: 10, kind: input, shape index: {}]
  %s11 = inlined_call_operand.hbm [shape: f32[1,32], index: 11, kind: input, shape index: {}]
  %s12 = inlined_call_operand.hbm [shape: f32[1,32], index: 12, kind: input, shape index: {}]
  %s13 = inlined_call_operand.hbm [shape: bf16[32,1], index: 13, kind: input, shape index: {}]
  %s14 = inlined_call_operand.<no memory space> [shape: f32[1,1], index: 14, kind: input, shape index: {}]
  %s15 = inlined_call_operand.hbm [shape: bf16[32,1], index: 15, kind: input, shape index: {}]
  %s16 = inlined_call_operand.<no memory space> [shape: f32[1,1], index: 16, kind: input, shape index: {}]
  %s17 = inlined_call_operand.hbm [shape: f32[2,32], index: 17, kind: output, shape index: {0}]
  %s18 = inlined_call_operand.hbm [shape: f32[2,2], index: 18, kind: output, shape index: {1}]
  %19 = xla_tuple %s17, %s18
  %s20 = sld [smem:[#allocation0]]
  $region146: #{distinguish_forward.7} parent=0
    _
  %s22 = ssub.s32 1, %s20
  %s23 = scalar_select 0, %s22, %s20
  %v24 = vstv %s14
  %25 = vst [vmem:[#allocation2] sm:$0x1] %v24
  %v26 = vstv %s16
  %27 = vst [vmem:[#allocation3] sm:$0x1] %v26
  $region1: #{distinguish_forward.7} parent=0
    #allocation4 [shape = 'u8[512]{0}', space=vmem, size = 0x400, scoped, tag = 'input window, operand 0, single buffered']
    #allocation5 [shape = 's32[1]{0}', space=sflag, size = 0x4, scoped, tag = 'scoped memory for distinguish_forward.7']
    #allocation6 [shape = 's32[1]{0}', space=sflag, size = 0x4, scoped, tag = 'scoped memory for distinguish_forward.7']
    #allocation7 [shape = 'u8[8192]{0}', space=vmem, size = 0x2000, scoped, tag = 'input window, operand 1, single buffered']
    #allocation8 [shape = 's32[1]{0}', space=sflag, size = 0x4, scoped, tag = 'scoped memory for distinguish_forward.7']
    #allocation9 [shape = 'u8[512]{0}', space=vmem, size = 0x400, scoped, tag = 'input window, operand 2, single buffered']
    #allocation10 [shape = 'u8[8192]{0}', space=vmem, size = 0x2000, scoped, tag = 'input window, operand 3, single buffered']
    #allocation11 [shape = 's32[1]{0}', space=sflag, size = 0x4, scoped, tag = 'scoped memory for distinguish_forward.7']
    #allocation12 [shape = 'u8[512]{0}', space=vmem, size = 0x400, scoped, tag = 'input window, operand 4, single buffered']
    #allocation13 [shape = 'u8[16384]{0}', space=vmem, size = 0x4000, scoped, tag = 'input window, operand 5, single buffered']
    #allocation14 [shape = 's32[1]{0}', space=sflag, size = 0x4, scoped, tag = 'scoped memory for distinguish_forward.7']
    #allocation15 [shape = 'u8[512]{0}', space=vmem, size = 0x400, scoped, tag = 'input window, operand 6, single buffered']
    #allocation16 [shape = 'u8[512]{0}', space=vmem, size = 0x400, scoped, tag = 'input window, operand 7, single buffered']
    #allocation17 [shape = 's32[1]{0}', space=sflag, size = 0x4, scoped, tag = 'scoped memory for distinguish_forward.7']
    #allocation18 [shape = 'u8[512]{0}', space=vmem, size = 0x400, scoped, tag = 'input window, operand 8, single buffered']
    #allocation19 [shape = 'u8[16384]{0}', space=vmem, size = 0x4000, scoped, tag = 'input window, operand 9, single buffered']
    #allocation20 [shape = 's32[1]{0}', space=sflag, size = 0x4, scoped, tag = 'scoped memory for distinguish_forward.7']
    #allocation21 [shape = 'u8[512]{0}', space=vmem, size = 0x400, scoped, tag = 'input window, operand 10, single buffered']
    #allocation22 [shape = 'u8[512]{0}', space=vmem, size = 0x400, scoped, tag = 'input window, operand 11, single buffered']
    #allocation23 [shape = 's32[1]{0}', space=sflag, size = 0x4, scoped, tag = 'scoped memory for distinguish_forward.7']
    #allocation24 [shape = 'u8[512]{0}', space=vmem, size = 0x400, scoped, tag = 'input window, operand 12, single buffered']
    #allocation25 [shape = 'u8[8192]{0}', space=vmem, size = 0x2000, scoped, tag = 'input window, operand 13, single buffered']
    #allocation26 [shape = 's32[1]{0}', space=sflag, size = 0x4, scoped, tag = 'scoped memory for distinguish_forward.7']
    #allocation27 [shape = 'u8[8192]{0}', space=vmem, size = 0x2000, scoped, tag = 'input window, operand 15, single buffered']
    #allocation28 [shape = 'u8[1024]{0}', space=vmem, size = 0x400, scoped, tag = 'output window, operand 0, single buffered']
    #allocation29 [shape = 'u8[1024]{0}', space=vmem, size = 0x400, scoped, tag = 'output window, operand 1, single buffered']
    #allocation30 [shape = 's32[1]{0}', space=sflag, size = 0x4, scoped, tag = 'scoped memory for distinguish_forward.7']
    %28 = vsyncpa [#allocation5], 0
    %29 = vsyncpa [#allocation8], 0
    %30 = vsyncpa [#allocation11], 0
    %31 = vsyncpa [#allocation14], 0
    %32 = vsyncpa [#allocation17], 0
    %33 = vsyncpa [#allocation20], 0
    %34 = vsyncpa [#allocation23], 0
    %35 = vsyncpa [#allocation26], 0
    %36 = vsyncpa [#allocation6], 0
    %37 = vsyncpa [#allocation30], 0
    // Predicated region
    $region2: #{distinguish_forward.7} parent=1 // pred_check
      _
    $region3: #{distinguish_forward.7} parent=1 // pred_check_branch
      %39 = sbr.rel (0) target = $region5
    $region4: #{distinguish_forward.7} parent=1 // pred_region
      %s41 = ssub.s32 16, 16
      %42 = vsyncadd [#allocation5], %s41
      %s44 = sshll.u32 [#allocation4], 4
      %s45 = int_to_ptr.vmem [resolvable:$true] %s44
      %47 = dma.hbm_to_vmem [thread:$0]  %s0, 16, %s45, [#allocation5]
    $region5: #{distinguish_forward.7} parent=1 // pred_fallthru
      _
    // Predicated region
    $region6: #{distinguish_forward.7} parent=1 // pred_check
      _
    $region7: #{distinguish_forward.7} parent=1 // pred_check_branch
      %49 = sbr.rel (0) target = $region9
    $region8: #{distinguish_forward.7} parent=1 // pred_region
      %s51 = ssub.s32 256, 256
      %52 = vsyncadd [#allocation8], %s51
      %s53 = sshll.u32 [#allocation7], 4
      %s54 = int_to_ptr.vmem [resolvable:$true] %s53
      %59 = dma.hbm_to_vmem [thread:$0]  %s1, 256, %s54, [#allocation8], 64, 64, 4
    $region9: #{distinguish_forward.7} parent=1 // pred_fallthru
      _
    // Predicated region
    $region10: #{distinguish_forward.7} parent=1 // pred_check
      _
    $region11: #{distinguish_forward.7} parent=1 // pred_check_branch
      %61 = sbr.rel (0) target = $region13
    $region12: #{distinguish_forward.7} parent=1 // pred_region
      %s63 = ssub.s32 16, 16
      %64 = vsyncadd [#allocation8], %s63
      %s66 = sshll.u32 [#allocation9], 4
      %s67 = int_to_ptr.vmem [resolvable:$true] %s66
      %69 = dma.hbm_to_vmem [thread:$0]  %s2, 16, %s67, [#allocation8]
    $region13: #{distinguish_forward.7} parent=1 // pred_fallthru
      _
    // Predicated region
    $region14: #{distinguish_forward.7} parent=1 // pred_check
      _
    $region15: #{distinguish_forward.7} parent=1 // pred_check_branch
      %71 = sbr.rel (0) target = $region17
    $region16: #{distinguish_forward.7} parent=1 // pred_region
      %s73 = ssub.s32 256, 256
      %74 = vsyncadd [#allocation11], %s73
      %s75 = sshll.u32 [#allocation10], 4
      %s76 = int_to_ptr.vmem [resolvable:$true] %s75
      %81 = dma.hbm_to_vmem [thread:$0]  %s3, 256, %s76, [#allocation11], 64, 64, 4
    $region17: #{distinguish_forward.7} parent=1 // pred_fallthru
      _
    // Predicated region
    $region18: #{distinguish_forward.7} parent=1 // pred_check
      _
    $region19: #{distinguish_forward.7} parent=1 // pred_check_branch
      %83 = sbr.rel (0) target = $region21
    $region20: #{distinguish_forward.7} parent=1 // pred_region
      %s85 = ssub.s32 16, 16
      %86 = vsyncadd [#allocation11], %s85
      %s88 = sshll.u32 [#allocation12], 4
      %s89 = int_to_ptr.vmem [resolvable:$true] %s88
      %91 = dma.hbm_to_vmem [thread:$0]  %s4, 16, %s89, [#allocation11]
    $region21: #{distinguish_forward.7} parent=1 // pred_fallthru
      _
    // Predicated region
    $region22: #{distinguish_forward.7} parent=1 // pred_check
      _
    $region23: #{distinguish_forward.7} parent=1 // pred_check_branch
      %93 = sbr.rel (0) target = $region25
    $region24: #{distinguish_forward.7} parent=1 // pred_region
      %s95 = ssub.s32 512, 512
      %96 = vsyncadd [#allocation14], %s95
      %s97 = sshll.u32 [#allocation13], 4
      %s98 = int_to_ptr.vmem [resolvable:$true] %s97
      %103 = dma.hbm_to_vmem [thread:$0]  %s5, 512, %s98, [#allocation14], 64, 64, 4
    $region25: #{distinguish_forward.7} parent=1 // pred_fallthru
      _
    // Predicated region
    $region26: #{distinguish_forward.7} parent=1 // pred_check
      _
    $region27: #{distinguish_forward.7} parent=1 // pred_check_branch
      %105 = sbr.rel (0) target = $region29
    $region28: #{distinguish_forward.7} parent=1 // pred_region
      %s107 = ssub.s32 16, 16
      %108 = vsyncadd [#allocation14], %s107
      %s110 = sshll.u32 [#allocation15], 4
      %s111 = int_to_ptr.vmem [resolvable:$true] %s110
      %113 = dma.hbm_to_vmem [thread:$0]  %s6, 16, %s111, [#allocation14]
    $region29: #{distinguish_forward.7} parent=1 // pred_fallthru
      _
    // Predicated region
    $region30: #{distinguish_forward.7} parent=1 // pred_check
      _
    $region31: #{distinguish_forward.7} parent=1 // pred_check_branch
      %115 = sbr.rel (0) target = $region33
    $region32: #{distinguish_forward.7} parent=1 // pred_region
      %s117 = ssub.s32 16, 16
      %118 = vsyncadd [#allocation17], %s117
      %s120 = sshll.u32 [#allocation16], 4
      %s121 = int_to_ptr.vmem [resolvable:$true] %s120
      %123 = dma.hbm_to_vmem [thread:$0]  %s7, 16, %s121, [#allocation17]
    $region33: #{distinguish_forward.7} parent=1 // pred_fallthru
      _
    // Predicated region
    $region34: #{distinguish_forward.7} parent=1 // pred_check
      _
    $region35: #{distinguish_forward.7} parent=1 // pred_check_branch
      %125 = sbr.rel (0) target = $region37
    $region36: #{distinguish_forward.7} parent=1 // pred_region
      %s127 = ssub.s32 16, 16
      %128 = vsyncadd [#allocation17], %s127
      %s130 = sshll.u32 [#allocation18], 4
      %s131 = int_to_ptr.vmem [resolvable:$true] %s130
      %133 = dma.hbm_to_vmem [thread:$0]  %s8, 16, %s131, [#allocation17]
    $region37: #{distinguish_forward.7} parent=1 // pred_fallthru
      _
    // Predicated region
    $region38: #{distinguish_forward.7} parent=1 // pred_check
      _
    $region39: #{distinguish_forward.7} parent=1 // pred_check_branch
      %135 = sbr.rel (0) target = $region41
    $region40: #{distinguish_forward.7} parent=1 // pred_region
      %s137 = ssub.s32 512, 512
      %138 = vsyncadd [#allocation20], %s137
      %s139 = sshll.u32 [#allocation19], 4
      %s140 = int_to_ptr.vmem [resolvable:$true] %s139
      %145 = dma.hbm_to_vmem [thread:$0]  %s9, 512, %s140, [#allocation20], 64, 64, 4
    $region41: #{distinguish_forward.7} parent=1 // pred_fallthru
      _
    // Predicated region
    $region42: #{distinguish_forward.7} parent=1 // pred_check
      _
    $region43: #{distinguish_forward.7} parent=1 // pred_check_branch
      %147 = sbr.rel (0) target = $region45
    $region44: #{distinguish_forward.7} parent=1 // pred_region
      %s149 = ssub.s32 16, 16
      %150 = vsyncadd [#allocation20], %s149
      %s152 = sshll.u32 [#allocation21], 4
      %s153 = int_to_ptr.vmem [resolvable:$true] %s152
      %155 = dma.hbm_to_vmem [thread:$0]  %s10, 16, %s153, [#allocation20]
    $region45: #{distinguish_forward.7} parent=1 // pred_fallthru
      _
    // Predicated region
    $region46: #{distinguish_forward.7} parent=1 // pred_check
      _
    $region47: #{distinguish_forward.7} parent=1 // pred_check_branch
      %157 = sbr.rel (0) target = $region49
    $region48: #{distinguish_forward.7} parent=1 // pred_region
      %s159 = ssub.s32 16, 16
      %160 = vsyncadd [#allocation23], %s159
      %s162 = sshll.u32 [#allocation22], 4
      %s163 = int_to_ptr.vmem [resolvable:$true] %s162
      %165 = dma.hbm_to_vmem [thread:$0]  %s11, 16, %s163, [#allocation23]
    $region49: #{distinguish_forward.7} parent=1 // pred_fallthru
      _
    // Predicated region
    $region50: #{distinguish_forward.7} parent=1 // pred_check
      _
    $region51: #{distinguish_forward.7} parent=1 // pred_check_branch
      %167 = sbr.rel (0) target = $region53
    $region52: #{distinguish_forward.7} parent=1 // pred_region
      %s169 = ssub.s32 16, 16
      %170 = vsyncadd [#allocation23], %s169
      %s172 = sshll.u32 [#allocation24], 4
      %s173 = int_to_ptr.vmem [resolvable:$true] %s172
      %175 = dma.hbm_to_vmem [thread:$0]  %s12, 16, %s173, [#allocation23]
    $region53: #{distinguish_forward.7} parent=1 // pred_fallthru
      _
    // Predicated region
    $region54: #{distinguish_forward.7} parent=1 // pred_check
      _
    $region55: #{distinguish_forward.7} parent=1 // pred_check_branch
      %177 = sbr.rel (0) target = $region57
    $region56: #{distinguish_forward.7} parent=1 // pred_region
      %s179 = ssub.s32 256, 256
      %180 = vsyncadd [#allocation26], %s179
      %s181 = sshll.u32 [#allocation25], 4
      %s182 = int_to_ptr.vmem [resolvable:$true] %s181
      %187 = dma.hbm_to_vmem [thread:$0]  %s13, 256, %s182, [#allocation26], 64, 64, 4
    $region57: #{distinguish_forward.7} parent=1 // pred_fallthru
      _
    // Predicated region
    $region58: #{distinguish_forward.7} parent=1 // pred_check
      _
    $region59: #{distinguish_forward.7} parent=1 // pred_check_branch
      %189 = sbr.rel (0) target = $region61
    $region60: #{distinguish_forward.7} parent=1 // pred_region
      _
    $region61: #{distinguish_forward.7} parent=1 // pred_fallthru
      _
    // Predicated region
    $region62: #{distinguish_forward.7} parent=1 // pred_check
      _
    $region63: #{distinguish_forward.7} parent=1 // pred_check_branch
      %191 = sbr.rel (0) target = $region65
    $region64: #{distinguish_forward.7} parent=1 // pred_region
      %s193 = ssub.s32 256, 256
      %194 = vsyncadd [#allocation26], %s193
      %s195 = sshll.u32 [#allocation27], 4
      %s196 = int_to_ptr.vmem [resolvable:$true] %s195
      %201 = dma.hbm_to_vmem [thread:$0]  %s15, 256, %s196, [#allocation26], 64, 64, 4
    $region65: #{distinguish_forward.7} parent=1 // pred_fallthru
      _
    // Predicated region
    $region66: #{distinguish_forward.7} parent=1 // pred_check
      _
    $region67: #{distinguish_forward.7} parent=1 // pred_check_branch
      %203 = sbr.rel (0) target = $region69
    $region68: #{distinguish_forward.7} parent=1 // pred_region
      _
    $region69: #{distinguish_forward.7} parent=1 // pred_fallthru
      _
    // Predicated region
    $region70: #{distinguish_forward.7} parent=1 // pred_check
      _
    $region71: #{distinguish_forward.7} parent=1 // pred_check_branch
      %205 = sbr.rel (0) target = $region73
    $region72: #{distinguish_forward.7} parent=1 // pred_region
      %206 = dma.done [#allocation5], 16
    $region73: #{distinguish_forward.7} parent=1 // pred_fallthru
      _
    // Predicated region
    $region74: #{distinguish_forward.7} parent=1 // pred_check
      _
    $region75: #{distinguish_forward.7} parent=1 // pred_check_branch
      %208 = sbr.rel (0) target = $region77
    $region76: #{distinguish_forward.7} parent=1 // pred_region
      %209 = dma.done [#allocation8], 256
    $region77: #{distinguish_forward.7} parent=1 // pred_fallthru
      _
    // Predicated region
    $region78: #{distinguish_forward.7} parent=1 // pred_check
      _
    $region79: #{distinguish_forward.7} parent=1 // pred_check_branch
      %211 = sbr.rel (0) target = $region81
    $region80: #{distinguish_forward.7} parent=1 // pred_region
      %212 = dma.done [#allocation8], 16
    $region81: #{distinguish_forward.7} parent=1 // pred_fallthru
      _
    // Predicated region
    $region82: #{distinguish_forward.7} parent=1 // pred_check
      _
    $region83: #{distinguish_forward.7} parent=1 // pred_check_branch
      %214 = sbr.rel (0) target = $region85
    $region84: #{distinguish_forward.7} parent=1 // pred_region
      %215 = dma.done [#allocation11], 256
    $region85: #{distinguish_forward.7} parent=1 // pred_fallthru
      _
    // Predicated region
    $region86: #{distinguish_forward.7} parent=1 // pred_check
      _
    $region87: #{distinguish_forward.7} parent=1 // pred_check_branch
      %217 = sbr.rel (0) target = $region89
    $region88: #{distinguish_forward.7} parent=1 // pred_region
      %218 = dma.done [#allocation11], 16
    $region89: #{distinguish_forward.7} parent=1 // pred_fallthru
      _
    // Predicated region
    $region90: #{distinguish_forward.7} parent=1 // pred_check
      _
    $region91: #{distinguish_forward.7} parent=1 // pred_check_branch
      %220 = sbr.rel (0) target = $region93
    $region92: #{distinguish_forward.7} parent=1 // pred_region
      %221 = dma.done [#allocation14], 512
    $region93: #{distinguish_forward.7} parent=1 // pred_fallthru
      _
    // Predicated region
    $region94: #{distinguish_forward.7} parent=1 // pred_check
      _
    $region95: #{distinguish_forward.7} parent=1 // pred_check_branch
      %223 = sbr.rel (0) target = $region97
    $region96: #{distinguish_forward.7} parent=1 // pred_region
      %224 = dma.done [#allocation14], 16
    $region97: #{distinguish_forward.7} parent=1 // pred_fallthru
      _
    // Predicated region
    $region98: #{distinguish_forward.7} parent=1 // pred_check
      _
    $region99: #{distinguish_forward.7} parent=1 // pred_check_branch
      %226 = sbr.rel (0) target = $region101
    $region100: #{distinguish_forward.7} parent=1 // pred_region
      %227 = dma.done [#allocation17], 16
    $region101: #{distinguish_forward.7} parent=1 // pred_fallthru
      _
    // Predicated region
    $region102: #{distinguish_forward.7} parent=1 // pred_check
      _
    $region103: #{distinguish_forward.7} parent=1 // pred_check_branch
      %229 = sbr.rel (0) target = $region105
    $region104: #{distinguish_forward.7} parent=1 // pred_region
      %230 = dma.done [#allocation17], 16
    $region105: #{distinguish_forward.7} parent=1 // pred_fallthru
      _
    // Predicated region
    $region106: #{distinguish_forward.7} parent=1 // pred_check
      _
    $region107: #{distinguish_forward.7} parent=1 // pred_check_branch
      %232 = sbr.rel (0) target = $region109
    $region108: #{distinguish_forward.7} parent=1 // pred_region
      %233 = dma.done [#allocation20], 512
    $region109: #{distinguish_forward.7} parent=1 // pred_fallthru
      _
    // Predicated region
    $region110: #{distinguish_forward.7} parent=1 // pred_check
      _
    $region111: #{distinguish_forward.7} parent=1 // pred_check_branch
      %235 = sbr.rel (0) target = $region113
    $region112: #{distinguish_forward.7} parent=1 // pred_region
      %236 = dma.done [#allocation20], 16
    $region113: #{distinguish_forward.7} parent=1 // pred_fallthru
      _
    // Predicated region
    $region114: #{distinguish_forward.7} parent=1 // pred_check
      _
    $region115: #{distinguish_forward.7} parent=1 // pred_check_branch
      %238 = sbr.rel (0) target = $region117
    $region116: #{distinguish_forward.7} parent=1 // pred_region
      %239 = dma.done [#allocation23], 16
    $region117: #{distinguish_forward.7} parent=1 // pred_fallthru
      _
    // Predicated region
    $region118: #{distinguish_forward.7} parent=1 // pred_check
      _
    $region119: #{distinguish_forward.7} parent=1 // pred_check_branch
      %241 = sbr.rel (0) target = $region121
    $region120: #{distinguish_forward.7} parent=1 // pred_region
      %242 = dma.done [#allocation23], 16
    $region121: #{distinguish_forward.7} parent=1 // pred_fallthru
      _
    // Predicated region
    $region122: #{distinguish_forward.7} parent=1 // pred_check
      _
    $region123: #{distinguish_forward.7} parent=1 // pred_check_branch
      %244 = sbr.rel (0) target = $region125
    $region124: #{distinguish_forward.7} parent=1 // pred_region
      %245 = dma.done [#allocation26], 256
    $region125: #{distinguish_forward.7} parent=1 // pred_fallthru
      _
    // Predicated region
    $region126: #{distinguish_forward.7} parent=1 // pred_check
      _
    $region127: #{distinguish_forward.7} parent=1 // pred_check_branch
      %247 = sbr.rel (0) target = $region129
    $region128: #{distinguish_forward.7} parent=1 // pred_region
      %248 = dma.done [#allocation26], 256
    $region129: #{distinguish_forward.7} parent=1 // pred_fallthru
      _
    %v250 = vld [vmem:[#allocation4] sm:$0x1]
    %v251 = vld [vmem:[#allocation7] sm:$0xf]
    %v252 = vld [vmem:[#allocation7 + $0x4] sm:$0xf]
    %v253 = vld [vmem:[#allocation7 + $0x8] sm:$0xf]
    %v254 = vld [vmem:[#allocation7 + $0xc] sm:$0xf]
    %v255 = vld [vmem:[#allocation9] sm:$0x1]
    %v257 = vlaneseq
    %v258 = vshrl.u32 %v257, 7
    %v259 = vsub.s32 0, %v258
    %v260 = vrot.slane %v255, %v259
    %v266 = vunpack.c.l.b16 %v251
    %v267 = vunpack.c.l.b16 %v252
    %v268 = vunpack.c.l.b16 %v253
    %v269 = vunpack.c.l.b16 %v254
    %v270 = vpack.c.b16 %v267, %v266
    %v271 = vpack.c.b16 %v269, %v268
    %vm274 = vcmask 261120
    %v276 = vsel %vm274, %v250, 0
    %278 = vmatprep.subr.bf16.mxu0 0
    %279 = vmatpush1.bf16.msra.mxu0 %v270
    %280 = vmatprep.subr.bf16.mxu0 0
    %281 = vmatpush1.bf16.msra.mxu0 %v271
    %282 = vmatprep.subr.bf16.mxu0 0
    %283 = vmatpush1.bf16.msra.mxu0 0
    %284 = vmatprep.subr.bf16.mxu0 0
    %285 = vmatpush1.bf16.msra.mxu0 0
    %286 = vmatprep.subr.bf16.mxu0 0
    %287 = vmatpush1.bf16.msra.mxu0 0
    %288 = vmatprep.subr.bf16.mxu0 0
    %289 = vmatpush1.bf16.msra.mxu0 0
    %290 = vmatprep.subr.bf16.mxu0 0
    %291 = vmatpush1.bf16.msra.mxu0 0
    %292 = vmatprep.subr.bf16.mxu0 0
    %293 = vmatpush1.bf16.msra.mxu0 0
    %294 = vmatprep.subr.bf16.mxu0 0
    %295 = vmatpush1.bf16.msra.mxu0 0
    %296 = vmatprep.subr.bf16.mxu0 0
    %297 = vmatpush1.bf16.msra.mxu0 0
    %298 = vmatprep.subr.bf16.mxu0 0
    %299 = vmatpush1.bf16.msra.mxu0 0
    %300 = vmatprep.subr.bf16.mxu0 0
    %301 = vmatpush1.bf16.msra.mxu0 0
    %302 = vmatprep.subr.bf16.mxu0 0
    %303 = vmatpush1.bf16.msra.mxu0 0
    %304 = vmatprep.subr.bf16.mxu0 0
    %305 = vmatpush1.bf16.msra.mxu0 0
    %306 = vmatprep.subr.bf16.mxu0 0
    %307 = vmatpush1.bf16.msra.mxu0 0
    %308 = vmatprep.subr.bf16.mxu0 0
    %309 = vmatpush1.bf16.msra.mxu0 0
    %310 = vmatprep.mubr.bf16.mxu0 0
    %311 = vmatmul.mubr.bf16.gmra.mrb[0].mxu0 %v276
    %v312 = vpop.f32.mrb[0].mxu0
    %v313 = vadd.f32 %v260, %v312
    %v314 = vpop.f32.mrb[0].mxu0
    %v315 = vpop.f32.mrb[0].mxu0
    %v316 = vpop.f32.mrb[0].mxu0
    %317 = vdwg.mxu0
    %v318 = vtanh.pop %v313
    %vm319 = vcmask 254976
    %320 = vst.msk [vmem:[#allocation28] sm:$0x3] %vm319, %v318
    %v321 = vpack.c.bf16 %v318, %v318
    %v322 = vld [vmem:[#allocation10] sm:$0xf]
    %v323 = vld [vmem:[#allocation10 + $0x4] sm:$0xf]
    %v324 = vld [vmem:[#allocation10 + $0x8] sm:$0xf]
    %v325 = vld [vmem:[#allocation10 + $0xc] sm:$0xf]
    %v326 = vld [vmem:[#allocation12] sm:$0x1]
    %v328 = vlaneseq
    %v329 = vshrl.u32 %v328, 7
    %v330 = vsub.s32 0, %v329
    %v331 = vrot.slane %v326, %v330
    %v337 = vunpack.c.l.b16 %v322
    %v338 = vunpack.c.l.b16 %v323
    %v339 = vunpack.c.l.b16 %v324
    %v340 = vunpack.c.l.b16 %v325
    %v341 = vpack.c.b16 %v338, %v337
    %v342 = vpack.c.b16 %v340, %v339
    %v346 = vsel %vm274, %v321, 0
    %348 = vmatprep.subr.bf16.mxu0 0
    %349 = vmatpush1.bf16.msra.mxu0 %v341
    %350 = vmatprep.subr.bf16.mxu0 0
    %351 = vmatpush1.bf16.msra.mxu0 %v342
    %352 = vmatprep.subr.bf16.mxu0 0
    %353 = vmatpush1.bf16.msra.mxu0 0
    %354 = vmatprep.subr.bf16.mxu0 0
    %355 = vmatpush1.bf16.msra.mxu0 0
    %356 = vmatprep.subr.bf16.mxu0 0
    %357 = vmatpush1.bf16.msra.mxu0 0
    %358 = vmatprep.subr.bf16.mxu0 0
    %359 = vmatpush1.bf16.msra.mxu0 0
    %360 = vmatprep.subr.bf16.mxu0 0
    %361 = vmatpush1.bf16.msra.mxu0 0
    %362 = vmatprep.subr.bf16.mxu0 0
    %363 = vmatpush1.bf16.msra.mxu0 0
    %364 = vmatprep.subr.bf16.mxu0 0
    %365 = vmatpush1.bf16.msra.mxu0 0
    %366 = vmatprep.subr.bf16.mxu0 0
    %367 = vmatpush1.bf16.msra.mxu0 0
    %368 = vmatprep.subr.bf16.mxu0 0
    %369 = vmatpush1.bf16.msra.mxu0 0
    %370 = vmatprep.subr.bf16.mxu0 0
    %371 = vmatpush1.bf16.msra.mxu0 0
    %372 = vmatprep.subr.bf16.mxu0 0
    %373 = vmatpush1.bf16.msra.mxu0 0
    %374 = vmatprep.subr.bf16.mxu0 0
    %375 = vmatpush1.bf16.msra.mxu0 0
    %376 = vmatprep.subr.bf16.mxu0 0
    %377 = vmatpush1.bf16.msra.mxu0 0
    %378 = vmatprep.subr.bf16.mxu0 0
    %379 = vmatpush1.bf16.msra.mxu0 0
    %380 = vmatprep.mubr.bf16.mxu0 0
    %381 = vmatmul.mubr.bf16.gmra.mrb[0].mxu0 %v346
    %v382 = vpop.f32.mrb[0].mxu0
    %v383 = vadd.f32 %v331, %v382
    %v384 = vpop.f32.mrb[0].mxu0
    %v385 = vpop.f32.mrb[0].mxu0
    %v386 = vpop.f32.mrb[0].mxu0
    %387 = vdwg.mxu0
    %v388 = vmul.f32 %v383, 0.5
    %v389 = vmul.f32 %v383, 0.70710677
    %v390 = verf.f32.pop %v389
    %v391 = vadd.f32 %v390, 1.0
    %v392 = vmul.f32 %v388, %v391
    %v393 = vld [vmem:[#allocation13] sm:$0xf]
    %v394 = vld [vmem:[#allocation13 + $0x4] sm:$0xf]
    %v395 = vld [vmem:[#allocation13 + $0x8] sm:$0xf]
    %v396 = vld [vmem:[#allocation13 + $0xc] sm:$0xf]
    %v397 = vld [vmem:[#allocation13 + $0x10] sm:$0xf]
    %v398 = vld [vmem:[#allocation13 + $0x14] sm:$0xf]
    %v399 = vld [vmem:[#allocation13 + $0x18] sm:$0xf]
    %v400 = vld [vmem:[#allocation13 + $0x1c] sm:$0xf]
    %v401 = vld [vmem:[#allocation15] sm:$0x1]
    %v402 = vld [vmem:[#allocation16] sm:$0x1]
    %v403 = vld [vmem:[#allocation18] sm:$0x1]
    %v404 = vpack.c.bf16 %v392, %v392
    %v406 = vlaneseq
    %v407 = vshrl.u32 %v406, 7
    %v408 = vsub.s32 0, %v407
    %v409 = vrot.slane %v401, %v408
    %v419 = vunpack.c.l.b16 %v393
    %v420 = vunpack.c.l.b16 %v394
    %v421 = vunpack.c.l.b16 %v395
    %v422 = vunpack.c.l.b16 %v396
    %v423 = vunpack.c.l.b16 %v397
    %v424 = vunpack.c.l.b16 %v398
    %v425 = vunpack.c.l.b16 %v399
    %v426 = vunpack.c.l.b16 %v400
    %v427 = vpack.c.b16 %v420, %v419
    %v428 = vpack.c.b16 %v422, %v421
    %v429 = vpack.c.b16 %v424, %v423
    %v430 = vpack.c.b16 %v426, %v425
    %vm435 = vcmask 523264
    %v437 = vsel %vm435, %v404, 0
    %439 = vmatprep.subr.bf16.mxu0 0
    %440 = vmatpush1.bf16.msra.mxu0 %v427
    %441 = vmatprep.subr.bf16.mxu0 0
    %442 = vmatpush1.bf16.msra.mxu0 %v428
    %443 = vmatprep.subr.bf16.mxu0 0
    %444 = vmatpush1.bf16.msra.mxu0 %v429
    %445 = vmatprep.subr.bf16.mxu0 0
    %446 = vmatpush1.bf16.msra.mxu0 %v430
    %447 = vmatprep.subr.bf16.mxu0 0
    %448 = vmatpush1.bf16.msra.mxu0 0
    %449 = vmatprep.subr.bf16.mxu0 0
    %450 = vmatpush1.bf16.msra.mxu0 0
    %451 = vmatprep.subr.bf16.mxu0 0
    %452 = vmatpush1.bf16.msra.mxu0 0
    %453 = vmatprep.subr.bf16.mxu0 0
    %454 = vmatpush1.bf16.msra.mxu0 0
    %455 = vmatprep.subr.bf16.mxu0 0
    %456 = vmatpush1.bf16.msra.mxu0 0
    %457 = vmatprep.subr.bf16.mxu0 0
    %458 = vmatpush1.bf16.msra.mxu0 0
    %459 = vmatprep.subr.bf16.mxu0 0
    %460 = vmatpush1.bf16.msra.mxu0 0
    %461 = vmatprep.subr.bf16.mxu0 0
    %462 = vmatpush1.bf16.msra.mxu0 0
    %463 = vmatprep.subr.bf16.mxu0 0
    %464 = vmatpush1.bf16.msra.mxu0 0
    %465 = vmatprep.subr.bf16.mxu0 0
    %466 = vmatpush1.bf16.msra.mxu0 0
    %467 = vmatprep.subr.bf16.mxu0 0
    %468 = vmatpush1.bf16.msra.mxu0 0
    %469 = vmatprep.subr.bf16.mxu0 0
    %470 = vmatpush1.bf16.msra.mxu0 0
    %471 = vmatprep.mubr.bf16.mxu0 0
    %472 = vmatmul.mubr.bf16.gmra.mrb[0].mxu0 %v437
    %v473 = vpop.f32.mrb[0].mxu0
    %v474 = vadd.f32 %v409, %v473
    %v475 = vpop.f32.mrb[0].mxu0
    %v476 = vpop.f32.mrb[0].mxu0
    %v477 = vpop.f32.mrb[0].mxu0
    %478 = vdwg.mxu0
    %v479 = vadd.f32 %v474, %v318
    %v480 = vsel %vm319, %v479, 0.0
    %481 = vadd.xlane.f32.xlu0 %v480
    %v482 = vpop.xlane.xlu0 %481
    %v483 = vrcp.pop 32.0
    %v484 = vmul.f32 %v482, %v483
    %v485 = vsub.f32 %v479, %v484
    %v486 = vmul.f32 %v485, %v485
    %v487 = vsel %vm319, %v486, 0.0
    %488 = vadd.xlane.f32.xlu0 %v487
    %v489 = vpop.xlane.xlu0 %488
    %v490 = vmul.f32 %v489, %v483
    %v491 = vadd.f32 %v490, 1e-05
    %v492 = vrsqrt.pop %v491
    %v493 = vmul.f32 %v485, %v492
    %v495 = vlaneseq
    %v496 = vshrl.u32 %v495, 7
    %v497 = vsub.s32 0, %v496
    %v498 = vrot.slane %v402, %v497
    %v500 = vmul.f32 %v493, %v498
    %v502 = vlaneseq
    %v503 = vshrl.u32 %v502, 7
    %v504 = vsub.s32 0, %v503
    %v505 = vrot.slane %v403, %v504
    %v507 = vadd.f32 %v500, %v505
    %v508 = vld [vmem:[#allocation19] sm:$0xf]
    %v509 = vld [vmem:[#allocation19 + $0x4] sm:$0xf]
    %v510 = vld [vmem:[#allocation19 + $0x8] sm:$0xf]
    %v511 = vld [vmem:[#allocation19 + $0xc] sm:$0xf]
    %v512 = vld [vmem:[#allocation19 + $0x10] sm:$0xf]
    %v513 = vld [vmem:[#allocation19 + $0x14] sm:$0xf]
    %v514 = vld [vmem:[#allocation19 + $0x18] sm:$0xf]
    %v515 = vld [vmem:[#allocation19 + $0x1c] sm:$0xf]
    %v516 = vld [vmem:[#allocation21] sm:$0x1]
    %v517 = vld [vmem:[#allocation22] sm:$0x1]
    %v518 = vld [vmem:[#allocation24] sm:$0x1]
    %v520 = vlaneseq
    %v521 = vshrl.u32 %v520, 7
    %v522 = vsub.s32 0, %v521
    %v523 = vrot.slane %v516, %v522
    %526 = vrot.lane.b32.xlu0 %v404, 64
    %v527 = vpop.permute.xlu0 %526
    %v536 = vunpack.c.l.b16 %v508
    %v537 = vunpack.c.l.b16 %v509
    %v538 = vunpack.c.l.b16 %v510
    %v539 = vunpack.c.l.b16 %v511
    %v540 = vunpack.c.l.b16 %v512
    %v541 = vunpack.c.l.b16 %v513
    %v542 = vunpack.c.l.b16 %v514
    %v543 = vunpack.c.l.b16 %v515
    %v544 = vpack.c.b16 %v537, %v536
    %v545 = vpack.c.b16 %v539, %v538
    %v546 = vpack.c.b16 %v541, %v540
    %v547 = vpack.c.b16 %v543, %v542
    %v553 = vsel %vm435, %v527, 0
    %555 = vmatprep.subr.bf16.mxu0 0
    %556 = vmatpush1.bf16.msra.mxu0 %v544
    %557 = vmatprep.subr.bf16.mxu0 0
    %558 = vmatpush1.bf16.msra.mxu0 %v545
    %559 = vmatprep.subr.bf16.mxu0 0
    %560 = vmatpush1.bf16.msra.mxu0 %v546
    %561 = vmatprep.subr.bf16.mxu0 0
    %562 = vmatpush1.bf16.msra.mxu0 %v547
    %563 = vmatprep.subr.bf16.mxu0 0
    %564 = vmatpush1.bf16.msra.mxu0 0
    %565 = vmatprep.subr.bf16.mxu0 0
    %566 = vmatpush1.bf16.msra.mxu0 0
    %567 = vmatprep.subr.bf16.mxu0 0
    %568 = vmatpush1.bf16.msra.mxu0 0
    %569 = vmatprep.subr.bf16.mxu0 0
    %570 = vmatpush1.bf16.msra.mxu0 0
    %571 = vmatprep.subr.bf16.mxu0 0
    %572 = vmatpush1.bf16.msra.mxu0 0
    %573 = vmatprep.subr.bf16.mxu0 0
    %574 = vmatpush1.bf16.msra.mxu0 0
    %575 = vmatprep.subr.bf16.mxu0 0
    %576 = vmatpush1.bf16.msra.mxu0 0
    %577 = vmatprep.subr.bf16.mxu0 0
    %578 = vmatpush1.bf16.msra.mxu0 0
    %579 = vmatprep.subr.bf16.mxu0 0
    %580 = vmatpush1.bf16.msra.mxu0 0
    %581 = vmatprep.subr.bf16.mxu0 0
    %582 = vmatpush1.bf16.msra.mxu0 0
    %583 = vmatprep.subr.bf16.mxu0 0
    %584 = vmatpush1.bf16.msra.mxu0 0
    %585 = vmatprep.subr.bf16.mxu0 0
    %586 = vmatpush1.bf16.msra.mxu0 0
    %587 = vmatprep.mubr.bf16.mxu0 0
    %588 = vmatmul.mubr.bf16.gmra.mrb[0].mxu0 %v553
    %v589 = vpop.f32.mrb[0].mxu0
    %v590 = vadd.f32 %v523, %v589
    %v591 = vpop.f32.mrb[0].mxu0
    %v592 = vpop.f32.mrb[0].mxu0
    %v593 = vpop.f32.mrb[0].mxu0
    %594 = vdwg.mxu0
    %v595 = vadd.f32 %v590, %v318
    %v596 = vsel %vm319, %v595, 0.0
    %597 = vadd.xlane.f32.xlu0 %v596
    %v598 = vpop.xlane.xlu0 %597
    %v599 = vmul.f32 %v598, %v483
    %v600 = vsub.f32 %v595, %v599
    %v601 = vmul.f32 %v600, %v600
    %v602 = vsel %vm319, %v601, 0.0
    %603 = vadd.xlane.f32.xlu0 %v602
    %v604 = vpop.xlane.xlu0 %603
    %v605 = vmul.f32 %v604, %v483
    %v606 = vadd.f32 %v605, 1e-05
    %v607 = vrsqrt.pop %v606
    %v608 = vmul.f32 %v600, %v607
    %v610 = vlaneseq
    %v611 = vshrl.u32 %v610, 7
    %v612 = vsub.s32 0, %v611
    %v613 = vrot.slane %v517, %v612
    %v615 = vmul.f32 %v608, %v613
    %v617 = vlaneseq
    %v618 = vshrl.u32 %v617, 7
    %v619 = vsub.s32 0, %v618
    %v620 = vrot.slane %v518, %v619
    %v622 = vadd.f32 %v615, %v620
    %v623 = vpack.c.bf16 %v507, %v507
    %v624 = vld [vmem:[#allocation25] sm:$0xf]
    %v625 = vld [vmem:[#allocation25 + $0x4] sm:$0xf]
    %v626 = vld [vmem:[#allocation25 + $0x8] sm:$0xf]
    %v627 = vld [vmem:[#allocation25 + $0xc] sm:$0xf]
    %v628 = vld [vmem:[#allocation2] sm:$0x1]
    %v630 = vlaneseq
    %v631 = vshrl.u32 %v630, 7
    %v632 = vsub.s32 0, %v631
    %v633 = vrot.slane %v628, %v632
    %v639 = vunpack.c.l.b16 %v624
    %v640 = vunpack.c.l.b16 %v625
    %v641 = vunpack.c.l.b16 %v626
    %v642 = vunpack.c.l.b16 %v627
    %v643 = vpack.c.b16 %v640, %v639
    %v644 = vpack.c.b16 %v642, %v641
    %v648 = vsel %vm274, %v623, 0
    %650 = vmatprep.subr.bf16.mxu0 0
    %651 = vmatpush1.bf16.msra.mxu0 %v643
    %652 = vmatprep.subr.bf16.mxu0 0
    %653 = vmatpush1.bf16.msra.mxu0 %v644
    %654 = vmatprep.subr.bf16.mxu0 0
    %655 = vmatpush1.bf16.msra.mxu0 0
    %656 = vmatprep.subr.bf16.mxu0 0
    %657 = vmatpush1.bf16.msra.mxu0 0
    %658 = vmatprep.subr.bf16.mxu0 0
    %659 = vmatpush1.bf16.msra.mxu0 0
    %660 = vmatprep.subr.bf16.mxu0 0
    %661 = vmatpush1.bf16.msra.mxu0 0
    %662 = vmatprep.subr.bf16.mxu0 0
    %663 = vmatpush1.bf16.msra.mxu0 0
    %664 = vmatprep.subr.bf16.mxu0 0
    %665 = vmatpush1.bf16.msra.mxu0 0
    %666 = vmatprep.subr.bf16.mxu0 0
    %667 = vmatpush1.bf16.msra.mxu0 0
    %668 = vmatprep.subr.bf16.mxu0 0
    %669 = vmatpush1.bf16.msra.mxu0 0
    %670 = vmatprep.subr.bf16.mxu0 0
    %671 = vmatpush1.bf16.msra.mxu0 0
    %672 = vmatprep.subr.bf16.mxu0 0
    %673 = vmatpush1.bf16.msra.mxu0 0
    %674 = vmatprep.subr.bf16.mxu0 0
    %675 = vmatpush1.bf16.msra.mxu0 0
    %676 = vmatprep.subr.bf16.mxu0 0
    %677 = vmatpush1.bf16.msra.mxu0 0
    %678 = vmatprep.subr.bf16.mxu0 0
    %679 = vmatpush1.bf16.msra.mxu0 0
    %680 = vmatprep.subr.bf16.mxu0 0
    %681 = vmatpush1.bf16.msra.mxu0 0
    %682 = vmatprep.mubr.bf16.mxu0 0
    %683 = vmatmul.mubr.bf16.gmra.mrb[0].mxu0 %v648
    %v684 = vpop.f32.mrb[0].mxu0
    %v685 = vadd.f32 %v633, %v684
    %v686 = vpop.f32.mrb[0].mxu0
    %v687 = vpop.f32.mrb[0].mxu0
    %v688 = vpop.f32.mrb[0].mxu0
    %689 = vdwg.mxu0
    %v690 = vpack.c.bf16 %v622, %v622
    %v691 = vld [vmem:[#allocation27] sm:$0xf]
    %v692 = vld [vmem:[#allocation27 + $0x4] sm:$0xf]
    %v693 = vld [vmem:[#allocation27 + $0x8] sm:$0xf]
    %v694 = vld [vmem:[#allocation27 + $0xc] sm:$0xf]
    %v695 = vld [vmem:[#allocation3] sm:$0x1]
    %v697 = vlaneseq
    %v698 = vshrl.u32 %v697, 7
    %v699 = vsub.s32 0, %v698
    %v700 = vrot.slane %v695, %v699
    %v706 = vunpack.c.l.b16 %v691
    %v707 = vunpack.c.l.b16 %v692
    %v708 = vunpack.c.l.b16 %v693
    %v709 = vunpack.c.l.b16 %v694
    %v710 = vpack.c.b16 %v707, %v706
    %v711 = vpack.c.b16 %v709, %v708
    %v715 = vsel %vm274, %v690, 0
    %717 = vmatprep.subr.bf16.mxu0 0
    %718 = vmatpush1.bf16.msra.mxu0 %v710
    %719 = vmatprep.subr.bf16.mxu0 0
    %720 = vmatpush1.bf16.msra.mxu0 %v711
    %721 = vmatprep.subr.bf16.mxu0 0
    %722 = vmatpush1.bf16.msra.mxu0 0
    %723 = vmatprep.subr.bf16.mxu0 0
    %724 = vmatpush1.bf16.msra.mxu0 0
    %725 = vmatprep.subr.bf16.mxu0 0
    %726 = vmatpush1.bf16.msra.mxu0 0
    %727 = vmatprep.subr.bf16.mxu0 0
    %728 = vmatpush1.bf16.msra.mxu0 0
    %729 = vmatprep.subr.bf16.mxu0 0
    %730 = vmatpush1.bf16.msra.mxu0 0
    %731 = vmatprep.subr.bf16.mxu0 0
    %732 = vmatpush1.bf16.msra.mxu0 0
    %733 = vmatprep.subr.bf16.mxu0 0
    %734 = vmatpush1.bf16.msra.mxu0 0
    %735 = vmatprep.subr.bf16.mxu0 0
    %736 = vmatpush1.bf16.msra.mxu0 0
    %737 = vmatprep.subr.bf16.mxu0 0
    %738 = vmatpush1.bf16.msra.mxu0 0
    %739 = vmatprep.subr.bf16.mxu0 0
    %740 = vmatpush1.bf16.msra.mxu0 0
    %741 = vmatprep.subr.bf16.mxu0 0
    %742 = vmatpush1.bf16.msra.mxu0 0
    %743 = vmatprep.subr.bf16.mxu0 0
    %744 = vmatpush1.bf16.msra.mxu0 0
    %745 = vmatprep.subr.bf16.mxu0 0
    %746 = vmatpush1.bf16.msra.mxu0 0
    %747 = vmatprep.subr.bf16.mxu0 0
    %748 = vmatpush1.bf16.msra.mxu0 0
    %749 = vmatprep.mubr.bf16.mxu0 0
    %750 = vmatmul.mubr.bf16.gmra.mrb[0].mxu0 %v715
    %v751 = vpop.f32.mrb[0].mxu0
    %v752 = vadd.f32 %v700, %v751
    %v753 = vpop.f32.mrb[0].mxu0
    %v754 = vpop.f32.mrb[0].mxu0
    %v755 = vpop.f32.mrb[0].mxu0
    %756 = vdwg.mxu0
    %v757 = vxor.u32 %v685, 2147483648
    %v758 = vmul.f32 %v757, 1.442695
    %v759 = vpow.pop %v758
    %v760 = vadd.f32 %v759, 1.0
    %v761 = vrcp.pop %v760
    %v762 = vmul.f32 1.0, %v761
    %764 = vrot.lane.b32.xlu0 %v752, 1
    %v765 = vpop.permute.xlu0 %764
    %vm767 = vcmask 7168
    %v768 = vsel %vm767, %v762, %v765
    %vm769 = vcmask 9216
    %770 = vst.msk [vmem:[#allocation29] sm:$0x3] %vm769, %v768
    // Predicated region
    $region130: #{distinguish_forward.7} parent=1 // pred_check
      _
    $region131: #{distinguish_forward.7} parent=1 // pred_check_branch
      %772 = sbr.rel (0) target = $region133
    $region132: #{distinguish_forward.7} parent=1 // pred_region
      %s774 = ssub.s32 32, 32
      %775 = vsyncadd [#allocation6], %s774
      %s777 = sshll.u32 [#allocation28], 4
      %s778 = int_to_ptr.vmem [resolvable:$true] %s777
      %780 = dma.vmem_to_hbm [thread:$0]  %s778, 32, %s17, [#allocation6]
    $region133: #{distinguish_forward.7} parent=1 // pred_fallthru
      _
    // Predicated region
    $region134: #{distinguish_forward.7} parent=1 // pred_check
      _
    $region135: #{distinguish_forward.7} parent=1 // pred_check_branch
      %782 = sbr.rel (0) target = $region137
    $region136: #{distinguish_forward.7} parent=1 // pred_region
      %s784 = ssub.s32 32, 32
      %785 = vsyncadd [#allocation30], %s784
      %s787 = sshll.u32 [#allocation29], 4
      %s788 = int_to_ptr.vmem [resolvable:$true] %s787
      %790 = dma.vmem_to_hbm [thread:$0]  %s788, 32, %s18, [#allocation30]
    $region137: #{distinguish_forward.7} parent=1 // pred_fallthru
      _
    // Predicated region
    $region138: #{distinguish_forward.7} parent=1 // pred_check
      _
    $region139: #{distinguish_forward.7} parent=1 // pred_check_branch
      %792 = sbr.rel (0) target = $region141
    $region140: #{distinguish_forward.7} parent=1 // pred_region
      %793 = dma.done [#allocation6], 32
    $region141: #{distinguish_forward.7} parent=1 // pred_fallthru
      _
    // Predicated region
    $region142: #{distinguish_forward.7} parent=1 // pred_check
      _
    $region143: #{distinguish_forward.7} parent=1 // pred_check_branch
      %795 = sbr.rel (0) target = $region145
    $region144: #{distinguish_forward.7} parent=1 // pred_region
      %796 = dma.done [#allocation30], 32
    $region145: #{distinguish_forward.7} parent=1 // pred_fallthru
      _
    %797 = vsyncpa [#allocation5], 1
    %798 = vsyncpa [#allocation8], 1
    %799 = vsyncpa [#allocation11], 1
    %800 = vsyncpa [#allocation14], 1
    %801 = vsyncpa [#allocation17], 1
    %802 = vsyncpa [#allocation20], 1
    %803 = vsyncpa [#allocation23], 1
    %804 = vsyncpa [#allocation26], 1
    %805 = vsyncpa [#allocation6], 1
    %806 = vsyncpa [#allocation30], 1

// kernel: distinguish_forward.5
$region0: #{distinguish_forward.5}
  #allocation0 [shape = 'u32[]', space=smem, size = 0x4, offset = 0x4, fixed_abs, tag = 'smem constant byte address 0x4 - core index']
  #allocation1 [shape = 'u32[144,128]{1,0:T(1,128)}', space=vmem, size = 0x12000, scoped, tag = 'internal scratch']
  %s0 = inlined_call_operand.hbm [shape: bf16[2,8,32], index: 0, kind: input, shape index: {}]
  %s1 = inlined_call_operand.hbm [shape: f32[2,1,8], index: 1, kind: input, shape index: {}]
  %s2 = inlined_call_operand.hbm [shape: bf16[32,96], index: 2, kind: input, shape index: {}]
  %s3 = inlined_call_operand.hbm [shape: f32[1,96], index: 3, kind: input, shape index: {}]
  %s4 = inlined_call_operand.hbm [shape: bf16[32,32], index: 4, kind: input, shape index: {}]
  %s5 = inlined_call_operand.hbm [shape: f32[1,32], index: 5, kind: input, shape index: {}]
  %s6 = inlined_call_operand.hbm [shape: f32[1,32], index: 6, kind: input, shape index: {}]
  %s7 = inlined_call_operand.hbm [shape: f32[1,32], index: 7, kind: input, shape index: {}]
  %s8 = inlined_call_operand.hbm [shape: bf16[32,64], index: 8, kind: input, shape index: {}]
  %s9 = inlined_call_operand.hbm [shape: f32[1,64], index: 9, kind: input, shape index: {}]
  %s10 = inlined_call_operand.hbm [shape: bf16[64,32], index: 10, kind: input, shape index: {}]
  %s11 = inlined_call_operand.hbm [shape: f32[1,32], index: 11, kind: input, shape index: {}]
  %s12 = inlined_call_operand.hbm [shape: f32[1,32], index: 12, kind: input, shape index: {}]
  %s13 = inlined_call_operand.hbm [shape: f32[1,32], index: 13, kind: input, shape index: {}]
  %s14 = inlined_call_operand.hbm [shape: bf16[2,8,32], index: 14, kind: output, shape index: {}]
  %s15 = sld [smem:[#allocation0]]
  $region145: #{distinguish_forward.5} parent=0
    _
  %s17 = ssub.s32 1, %s15
  %s18 = scalar_select 0, %s17, %s15
  $region1: #{distinguish_forward.5} parent=0
    #allocation2 [shape = 'u8[4096]{0}', space=vmem, size = 0x1000, scoped, tag = 'input window, operand 0']
    #allocation3 [shape = 's32[2]{0}', space=sflag, size = 0x8, scoped, tag = 'scoped memory for distinguish_forward.5']
    #allocation4 [shape = 's32[2]{0}', space=sflag, size = 0x8, scoped, tag = 'scoped memory for distinguish_forward.5']
    #allocation5 [shape = 'u8[1024]{0}', space=vmem, size = 0x400, scoped, tag = 'input window, operand 1']
    #allocation6 [shape = 's32[2]{0}', space=sflag, size = 0x8, scoped, tag = 'scoped memory for distinguish_forward.5']
    #allocation7 [shape = 'u8[8192]{0}', space=vmem, size = 0x2000, scoped, tag = 'input window, operand 2, single buffered']
    #allocation8 [shape = 'u8[512]{0}', space=vmem, size = 0x400, scoped, tag = 'input window, operand 3, single buffered']
    #allocation9 [shape = 's32[1]{0}', space=sflag, size = 0x4, scoped, tag = 'scoped memory for distinguish_forward.5']
    #allocation10 [shape = 'u8[8192]{0}', space=vmem, size = 0x2000, scoped, tag = 'input window, operand 4, single buffered']
    #allocation11 [shape = 'u8[512]{0}', space=vmem, size = 0x400, scoped, tag = 'input window, operand 5, single buffered']
    #allocation12 [shape = 's32[1]{0}', space=sflag, size = 0x4, scoped, tag = 'scoped memory for distinguish_forward.5']
    #allocation13 [shape = 'u8[512]{0}', space=vmem, size = 0x400, scoped, tag = 'input window, operand 6, single buffered']
    #allocation14 [shape = 'u8[512]{0}', space=vmem, size = 0x400, scoped, tag = 'input window, operand 7, single buffered']
    #allocation15 [shape = 's32[1]{0}', space=sflag, size = 0x4, scoped, tag = 'scoped memory for distinguish_forward.5']
    #allocation16 [shape = 'u8[8192]{0}', space=vmem, size = 0x2000, scoped, tag = 'input window, operand 8, single buffered']
    #allocation17 [shape = 'u8[512]{0}', space=vmem, size = 0x400, scoped, tag = 'input window, operand 9, single buffered']
    #allocation18 [shape = 's32[1]{0}', space=sflag, size = 0x4, scoped, tag = 'scoped memory for distinguish_forward.5']
    #allocation19 [shape = 'u8[16384]{0}', space=vmem, size = 0x4000, scoped, tag = 'input window, operand 10, single buffered']
    #allocation20 [shape = 'u8[512]{0}', space=vmem, size = 0x400, scoped, tag = 'input window, operand 11, single buffered']
    #allocation21 [shape = 's32[1]{0}', space=sflag, size = 0x4, scoped, tag = 'scoped memory for distinguish_forward.5']
    #allocation22 [shape = 'u8[512]{0}', space=vmem, size = 0x400, scoped, tag = 'input window, operand 12, single buffered']
    #allocation23 [shape = 'u8[512]{0}', space=vmem, size = 0x400, scoped, tag = 'input window, operand 13, single buffered']
    #allocation24 [shape = 's32[1]{0}', space=sflag, size = 0x4, scoped, tag = 'scoped memory for distinguish_forward.5']
    #allocation25 [shape = 'u8[4096]{0}', space=vmem, size = 0x1000, scoped, tag = 'output window, operand 0']
    %19 = vsyncpa [#allocation3], 0
    %s20 = scalar_lea.sflag [#allocation3], 1
    %21 = vsyncpa %s20, 0
    %22 = vsyncpa [#allocation6], 0
    %s23 = scalar_lea.sflag [#allocation6], 1
    %24 = vsyncpa %s23, 0
    %25 = vsyncpa [#allocation9], 0
    %26 = vsyncpa [#allocation12], 0
    %27 = vsyncpa [#allocation15], 0
    %28 = vsyncpa [#allocation18], 0
    %29 = vsyncpa [#allocation21], 0
    %30 = vsyncpa [#allocation24], 0
    %31 = vsyncpa [#allocation4], 0
    %s32 = scalar_lea.sflag [#allocation4], 1
    %33 = vsyncpa %s32, 0
    loop: start=0, step=1, limit=4
    $region2: #{distinguish_forward.5} parent=1 // loop_pre_header
      _
    $region3: #{distinguish_forward.5} parent=1 // loop_header
      %s35 = sphi 0, %s39
      %p36 = scmp.ge.s32.totalorder %s35, 4
      %s45 = sphi 0, %s47
      %s48 = sphi 0, %s45
      %s49 = sphi 0, %s48
      %s65 = sphi 0, %s49
      %s71 = sphi 0, %s73
      %s74 = sphi 0, %s71
      %s75 = sphi 0, %s74
      %s91 = sphi 0, %s75
      %s95 = sphi 0, %s95
      %s97 = sphi 0, %s95
      %s98 = sphi 0, %s97
      %s112 = sphi 0, %s98
      %s116 = sphi 0, %s116
      %s118 = sphi 0, %s116
      %s119 = sphi 0, %s118
      %s133 = sphi 0, %s119
      %s137 = sphi 0, %s137
      %s139 = sphi 0, %s137
      %s140 = sphi 0, %s139
      %s154 = sphi 0, %s140
      %s158 = sphi 0, %s158
      %s160 = sphi 0, %s158
      %s161 = sphi 0, %s160
      %s175 = sphi 0, %s161
      %s179 = sphi 0, %s179
      %s181 = sphi 0, %s179
      %s182 = sphi 0, %s181
      %s196 = sphi 0, %s182
      %s200 = sphi 0, %s200
      %s202 = sphi 0, %s200
      %s203 = sphi 0, %s202
      %s217 = sphi 0, %s203
      %s221 = sphi 0, %s221
      %s223 = sphi 0, %s221
      %s224 = sphi 0, %s223
      %s238 = sphi 0, %s224
      %s242 = sphi 0, %s242
      %s244 = sphi 0, %s242
      %s245 = sphi 0, %s244
      %s259 = sphi 0, %s245
      %s263 = sphi 0, %s263
      %s265 = sphi 0, %s263
      %s266 = sphi 0, %s265
      %s280 = sphi 0, %s266
      %s284 = sphi 0, %s284
      %s286 = sphi 0, %s284
      %s287 = sphi 0, %s286
      %s301 = sphi 0, %s287
      %s305 = sphi 0, %s305
      %s307 = sphi 0, %s305
      %s308 = sphi 0, %s307
      %s322 = sphi 0, %s308
      %s326 = sphi 0, %s326
      %s328 = sphi 0, %s326
      %s329 = sphi 0, %s328
      %s343 = sphi 0, %s329
      %s349 = sphi 0, %s351
      %s352 = sphi 0, %s349
      %s353 = sphi 0, %s352
      %s369 = sphi 0, %s353
    $region4: #{distinguish_forward.5} parent=1 // loop_header_branch
      %38 = sbr.rel (%p36) target = $region8
    $region5: #{distinguish_forward.5} parent=1 // loop_body
      %s40 = ssub.s32 %s35, 1
      %s41 = ssub.s32 %s35, 2
      %s42 = sadd.s32 %s35, 1
      %s43 = ssub.s32 %s35, %s42
      %p44 = scmp.eq.s32.totalorder %s43, 0
      %s46 = sadd.s32 %s45, 1
      %s47 = scalar_select %p44, %s45, %s46
      %p50 = pneg %p44
      %p51 = scmp.eq.s32.totalorder %s35, 1
      %p52 = por %p50, %p51
      %p53 = scmp.ne.s32.totalorder %s45, %s48
      %p54 = scmp.eq.s32.totalorder %s35, 0
      %p55 = por %p53, %p54
      %p56 = scmp.ne.s32.totalorder %s45, %s48
      %p57 = scmp.eq.s32.totalorder %s40, 1
      %p58 = por %p56, %p57
      %p59 = scmp.ne.s32.totalorder %s48, %s49
      %p60 = scmp.eq.s32.totalorder %s40, 0
      %p61 = por %p59, %p60
      %p62 = scmp.ne.s32.totalorder %s48, %s49
      %p63 = scmp.eq.s32.totalorder %s41, 1
      %p64 = por %p62, %p63
      %p66 = scmp.ne.s32.totalorder %s49, %s65
      %p67 = scmp.eq.s32.totalorder %s41, 0
      %p68 = por %p66, %p67
      %s69 = ssub.s32 %s35, %s42
      %p70 = scmp.eq.s32.totalorder %s69, 0
      %s72 = sadd.s32 %s71, 1
      %s73 = scalar_select %p70, %s71, %s72
      %p76 = pneg %p70
      %p77 = scmp.eq.s32.totalorder %s35, 1
      %p78 = por %p76, %p77
      %p79 = scmp.ne.s32.totalorder %s71, %s74
      %p80 = scmp.eq.s32.totalorder %s35, 0
      %p81 = por %p79, %p80
      %p82 = scmp.ne.s32.totalorder %s71, %s74
      %p83 = scmp.eq.s32.totalorder %s40, 1
      %p84 = por %p82, %p83
      %p85 = scmp.ne.s32.totalorder %s74, %s75
      %p86 = scmp.eq.s32.totalorder %s40, 0
      %p87 = por %p85, %p86
      %p88 = scmp.ne.s32.totalorder %s74, %s75
      %p89 = scmp.eq.s32.totalorder %s41, 1
      %p90 = por %p88, %p89
      %p92 = scmp.ne.s32.totalorder %s75, %s91
      %p93 = scmp.eq.s32.totalorder %s41, 0
      %p94 = por %p92, %p93
      %s96 = sadd.s32 %s95, 1
      %p99 = scmp.eq.s32.totalorder %s35, 1
      %p100 = scmp.ne.s32.totalorder %s95, %s97
      %p101 = scmp.eq.s32.totalorder %s35, 0
      %p102 = por %p100, %p101
      %p103 = scmp.ne.s32.totalorder %s95, %s97
      %p104 = scmp.eq.s32.totalorder %s40, 1
      %p105 = por %p103, %p104
      %p106 = scmp.ne.s32.totalorder %s97, %s98
      %p107 = scmp.eq.s32.totalorder %s40, 0
      %p108 = por %p106, %p107
      %p109 = scmp.ne.s32.totalorder %s97, %s98
      %p110 = scmp.eq.s32.totalorder %s41, 1
      %p111 = por %p109, %p110
      %p113 = scmp.ne.s32.totalorder %s98, %s112
      %p114 = scmp.eq.s32.totalorder %s41, 0
      %p115 = por %p113, %p114
      %s117 = sadd.s32 %s116, 1
      %p120 = scmp.eq.s32.totalorder %s35, 1
      %p121 = scmp.ne.s32.totalorder %s116, %s118
      %p122 = scmp.eq.s32.totalorder %s35, 0
      %p123 = por %p121, %p122
      %p124 = scmp.ne.s32.totalorder %s116, %s118
      %p125 = scmp.eq.s32.totalorder %s40, 1
      %p126 = por %p124, %p125
      %p127 = scmp.ne.s32.totalorder %s118, %s119
      %p128 = scmp.eq.s32.totalorder %s40, 0
      %p129 = por %p127, %p128
      %p130 = scmp.ne.s32.totalorder %s118, %s119
      %p131 = scmp.eq.s32.totalorder %s41, 1
      %p132 = por %p130, %p131
      %p134 = scmp.ne.s32.totalorder %s119, %s133
      %p135 = scmp.eq.s32.totalorder %s41, 0
      %p136 = por %p134, %p135
      %s138 = sadd.s32 %s137, 1
      %p141 = scmp.eq.s32.totalorder %s35, 1
      %p142 = scmp.ne.s32.totalorder %s137, %s139
      %p143 = scmp.eq.s32.totalorder %s35, 0
      %p144 = por %p142, %p143
      %p145 = scmp.ne.s32.totalorder %s137, %s139
      %p146 = scmp.eq.s32.totalorder %s40, 1
      %p147 = por %p145, %p146
      %p148 = scmp.ne.s32.totalorder %s139, %s140
      %p149 = scmp.eq.s32.totalorder %s40, 0
      %p150 = por %p148, %p149
      %p151 = scmp.ne.s32.totalorder %s139, %s140
      %p152 = scmp.eq.s32.totalorder %s41, 1
      %p153 = por %p151, %p152
      %p155 = scmp.ne.s32.totalorder %s140, %s154
      %p156 = scmp.eq.s32.totalorder %s41, 0
      %p157 = por %p155, %p156
      %s159 = sadd.s32 %s158, 1
      %p162 = scmp.eq.s32.totalorder %s35, 1
      %p163 = scmp.ne.s32.totalorder %s158, %s160
      %p164 = scmp.eq.s32.totalorder %s35, 0
      %p165 = por %p163, %p164
      %p166 = scmp.ne.s32.totalorder %s158, %s160
      %p167 = scmp.eq.s32.totalorder %s40, 1
      %p168 = por %p166, %p167
      %p169 = scmp.ne.s32.totalorder %s160, %s161
      %p170 = scmp.eq.s32.totalorder %s40, 0
      %p171 = por %p169, %p170
      %p172 = scmp.ne.s32.totalorder %s160, %s161
      %p173 = scmp.eq.s32.totalorder %s41, 1
      %p174 = por %p172, %p173
      %p176 = scmp.ne.s32.totalorder %s161, %s175
      %p177 = scmp.eq.s32.totalorder %s41, 0
      %p178 = por %p176, %p177
      %s180 = sadd.s32 %s179, 1
      %p183 = scmp.eq.s32.totalorder %s35, 1
      %p184 = scmp.ne.s32.totalorder %s179, %s181
      %p185 = scmp.eq.s32.totalorder %s35, 0
      %p186 = por %p184, %p185
      %p187 = scmp.ne.s32.totalorder %s179, %s181
      %p188 = scmp.eq.s32.totalorder %s40, 1
      %p189 = por %p187, %p188
      %p190 = scmp.ne.s32.totalorder %s181, %s182
      %p191 = scmp.eq.s32.totalorder %s40, 0
      %p192 = por %p190, %p191
      %p193 = scmp.ne.s32.totalorder %s181, %s182
      %p194 = scmp.eq.s32.totalorder %s41, 1
      %p195 = por %p193, %p194
      %p197 = scmp.ne.s32.totalorder %s182, %s196
      %p198 = scmp.eq.s32.totalorder %s41, 0
      %p199 = por %p197, %p198
      %s201 = sadd.s32 %s200, 1
      %p204 = scmp.eq.s32.totalorder %s35, 1
      %p205 = scmp.ne.s32.totalorder %s200, %s202
      %p206 = scmp.eq.s32.totalorder %s35, 0
      %p207 = por %p205, %p206
      %p208 = scmp.ne.s32.totalorder %s200, %s202
      %p209 = scmp.eq.s32.totalorder %s40, 1
      %p210 = por %p208, %p209
      %p211 = scmp.ne.s32.totalorder %s202, %s203
      %p212 = scmp.eq.s32.totalorder %s40, 0
      %p213 = por %p211, %p212
      %p214 = scmp.ne.s32.totalorder %s202, %s203
      %p215 = scmp.eq.s32.totalorder %s41, 1
      %p216 = por %p214, %p215
      %p218 = scmp.ne.s32.totalorder %s203, %s217
      %p219 = scmp.eq.s32.totalorder %s41, 0
      %p220 = por %p218, %p219
      %s222 = sadd.s32 %s221, 1
      %p225 = scmp.eq.s32.totalorder %s35, 1
      %p226 = scmp.ne.s32.totalorder %s221, %s223
      %p227 = scmp.eq.s32.totalorder %s35, 0
      %p228 = por %p226, %p227
      %p229 = scmp.ne.s32.totalorder %s221, %s223
      %p230 = scmp.eq.s32.totalorder %s40, 1
      %p231 = por %p229, %p230
      %p232 = scmp.ne.s32.totalorder %s223, %s224
      %p233 = scmp.eq.s32.totalorder %s40, 0
      %p234 = por %p232, %p233
      %p235 = scmp.ne.s32.totalorder %s223, %s224
      %p236 = scmp.eq.s32.totalorder %s41, 1
      %p237 = por %p235, %p236
      %p239 = scmp.ne.s32.totalorder %s224, %s238
      %p240 = scmp.eq.s32.totalorder %s41, 0
      %p241 = por %p239, %p240
      %s243 = sadd.s32 %s242, 1
      %p246 = scmp.eq.s32.totalorder %s35, 1
      %p247 = scmp.ne.s32.totalorder %s242, %s244
      %p248 = scmp.eq.s32.totalorder %s35, 0
      %p249 = por %p247, %p248
      %p250 = scmp.ne.s32.totalorder %s242, %s244
      %p251 = scmp.eq.s32.totalorder %s40, 1
      %p252 = por %p250, %p251
      %p253 = scmp.ne.s32.totalorder %s244, %s245
      %p254 = scmp.eq.s32.totalorder %s40, 0
      %p255 = por %p253, %p254
      %p256 = scmp.ne.s32.totalorder %s244, %s245
      %p257 = scmp.eq.s32.totalorder %s41, 1
      %p258 = por %p256, %p257
      %p260 = scmp.ne.s32.totalorder %s245, %s259
      %p261 = scmp.eq.s32.totalorder %s41, 0
      %p262 = por %p260, %p261
      %s264 = sadd.s32 %s263, 1
      %p267 = scmp.eq.s32.totalorder %s35, 1
      %p268 = scmp.ne.s32.totalorder %s263, %s265
      %p269 = scmp.eq.s32.totalorder %s35, 0
      %p270 = por %p268, %p269
      %p271 = scmp.ne.s32.totalorder %s263, %s265
      %p272 = scmp.eq.s32.totalorder %s40, 1
      %p273 = por %p271, %p272
      %p274 = scmp.ne.s32.totalorder %s265, %s266
      %p275 = scmp.eq.s32.totalorder %s40, 0
      %p276 = por %p274, %p275
      %p277 = scmp.ne.s32.totalorder %s265, %s266
      %p278 = scmp.eq.s32.totalorder %s41, 1
      %p279 = por %p277, %p278
      %p281 = scmp.ne.s32.totalorder %s266, %s280
      %p282 = scmp.eq.s32.totalorder %s41, 0
      %p283 = por %p281, %p282
      %s285 = sadd.s32 %s284, 1
      %p288 = scmp.eq.s32.totalorder %s35, 1
      %p289 = scmp.ne.s32.totalorder %s284, %s286
      %p290 = scmp.eq.s32.totalorder %s35, 0
      %p291 = por %p289, %p290
      %p292 = scmp.ne.s32.totalorder %s284, %s286
      %p293 = scmp.eq.s32.totalorder %s40, 1
      %p294 = por %p292, %p293
      %p295 = scmp.ne.s32.totalorder %s286, %s287
      %p296 = scmp.eq.s32.totalorder %s40, 0
      %p297 = por %p295, %p296
      %p298 = scmp.ne.s32.totalorder %s286, %s287
      %p299 = scmp.eq.s32.totalorder %s41, 1
      %p300 = por %p298, %p299
      %p302 = scmp.ne.s32.totalorder %s287, %s301
      %p303 = scmp.eq.s32.totalorder %s41, 0
      %p304 = por %p302, %p303
      %s306 = sadd.s32 %s305, 1
      %p309 = scmp.eq.s32.totalorder %s35, 1
      %p310 = scmp.ne.s32.totalorder %s305, %s307
      %p311 = scmp.eq.s32.totalorder %s35, 0
      %p312 = por %p310, %p311
      %p313 = scmp.ne.s32.totalorder %s305, %s307
      %p314 = scmp.eq.s32.totalorder %s40, 1
      %p315 = por %p313, %p314
      %p316 = scmp.ne.s32.totalorder %s307, %s308
      %p317 = scmp.eq.s32.totalorder %s40, 0
      %p318 = por %p316, %p317
      %p319 = scmp.ne.s32.totalorder %s307, %s308
      %p320 = scmp.eq.s32.totalorder %s41, 1
      %p321 = por %p319, %p320
      %p323 = scmp.ne.s32.totalorder %s308, %s322
      %p324 = scmp.eq.s32.totalorder %s41, 0
      %p325 = por %p323, %p324
      %s327 = sadd.s32 %s326, 1
      %p330 = scmp.eq.s32.totalorder %s35, 1
      %p331 = scmp.ne.s32.totalorder %s326, %s328
      %p332 = scmp.eq.s32.totalorder %s35, 0
      %p333 = por %p331, %p332
      %p334 = scmp.ne.s32.totalorder %s326, %s328
      %p335 = scmp.eq.s32.totalorder %s40, 1
      %p336 = por %p334, %p335
      %p337 = scmp.ne.s32.totalorder %s328, %s329
      %p338 = scmp.eq.s32.totalorder %s40, 0
      %p339 = por %p337, %p338
      %p340 = scmp.ne.s32.totalorder %s328, %s329
      %p341 = scmp.eq.s32.totalorder %s41, 1
      %p342 = por %p340, %p341
      %p344 = scmp.ne.s32.totalorder %s329, %s343
      %p345 = scmp.eq.s32.totalorder %s41, 0
      %p346 = por %p344, %p345
      %s347 = ssub.s32 %s35, %s42
      %p348 = scmp.eq.s32.totalorder %s347, 0
      %s350 = sadd.s32 %s349, 1
      %s351 = scalar_select %p348, %s349, %s350
      %p354 = pneg %p348
      %p355 = scmp.eq.s32.totalorder %s35, 1
      %p356 = por %p354, %p355
      %p357 = scmp.ne.s32.totalorder %s349, %s352
      %p358 = scmp.eq.s32.totalorder %s35, 0
      %p359 = por %p357, %p358
      %p360 = scmp.ne.s32.totalorder %s349, %s352
      %p361 = scmp.eq.s32.totalorder %s40, 1
      %p362 = por %p360, %p361
      %p363 = scmp.ne.s32.totalorder %s352, %s353
      %p364 = scmp.eq.s32.totalorder %s40, 0
      %p365 = por %p363, %p364
      %p366 = scmp.ne.s32.totalorder %s352, %s353
      %p367 = scmp.eq.s32.totalorder %s41, 1
      %p368 = por %p366, %p367
      %p370 = scmp.ne.s32.totalorder %s353, %s369
      %p371 = scmp.eq.s32.totalorder %s41, 0
      %p372 = por %p370, %p371
      %p373 = scmp.le.s32.totalorder 1, %s35
      %p374 = scmp.lt.s32.totalorder %s35, 3
      %p375 = pnand %p373, %p374
      %p376 = pneg %p375
      // Predicated region
      $region9: #{distinguish_forward.5} parent=5 // pred_check
        _
      $region10: #{distinguish_forward.5} parent=5 // pred_check_branch
        %378 = sbr.rel (%p375) target = $region12
      $region11: #{distinguish_forward.5} parent=5 // pred_region
        %s379 = ssub.s32 %s35, 1
        // Predicated region
        $region13: #{distinguish_forward.5} parent=11 // pred_check
          %p380 = pneg %p108
        $region14: #{distinguish_forward.5} parent=11 // pred_check_branch
          %382 = sbr.rel (%p380) target = $region16
        $region15: #{distinguish_forward.5} parent=11 // pred_region
          %s384 = ssub.s32 256, 256
          %385 = vsyncadd [#allocation6], %s384
          %s386 = sshll.u32 [#allocation7], 4
          %s387 = int_to_ptr.vmem [resolvable:$true] %s386
          %392 = dma.hbm_to_vmem [thread:$0]  %s2, 256, %s387, [#allocation6], 64, 64, 4
        $region16: #{distinguish_forward.5} parent=11 // pred_fallthru
          _
        // Predicated region
        $region17: #{distinguish_forward.5} parent=11 // pred_check
          %p393 = pneg %p129
        $region18: #{distinguish_forward.5} parent=11 // pred_check_branch
          %395 = sbr.rel (%p393) target = $region20
        $region19: #{distinguish_forward.5} parent=11 // pred_region
          %s397 = ssub.s32 16, 16
          %398 = vsyncadd [#allocation9], %s397
          %s400 = sshll.u32 [#allocation8], 4
          %s401 = int_to_ptr.vmem [resolvable:$true] %s400
          %403 = dma.hbm_to_vmem [thread:$0]  %s3, 16, %s401, [#allocation9]
        $region20: #{distinguish_forward.5} parent=11 // pred_fallthru
          _
        // Predicated region
        $region21: #{distinguish_forward.5} parent=11 // pred_check
          %p404 = pneg %p150
        $region22: #{distinguish_forward.5} parent=11 // pred_check_branch
          %406 = sbr.rel (%p404) target = $region24
        $region23: #{distinguish_forward.5} parent=11 // pred_region
          %s408 = ssub.s32 256, 256
          %409 = vsyncadd [#allocation9], %s408
          %s410 = sshll.u32 [#allocation10], 4
          %s411 = int_to_ptr.vmem [resolvable:$true] %s410
          %416 = dma.hbm_to_vmem [thread:$0]  %s4, 256, %s411, [#allocation9], 64, 64, 4
        $region24: #{distinguish_forward.5} parent=11 // pred_fallthru
          _
        // Predicated region
        $region25: #{distinguish_forward.5} parent=11 // pred_check
          %p417 = pneg %p171
        $region26: #{distinguish_forward.5} parent=11 // pred_check_branch
          %419 = sbr.rel (%p417) target = $region28
        $region27: #{distinguish_forward.5} parent=11 // pred_region
          %s421 = ssub.s32 16, 16
          %422 = vsyncadd [#allocation12], %s421
          %s424 = sshll.u32 [#allocation11], 4
          %s425 = int_to_ptr.vmem [resolvable:$true] %s424
          %427 = dma.hbm_to_vmem [thread:$0]  %s5, 16, %s425, [#allocation12]
        $region28: #{distinguish_forward.5} parent=11 // pred_fallthru
          _
        // Predicated region
        $region29: #{distinguish_forward.5} parent=11 // pred_check
          %p428 = pneg %p192
        $region30: #{distinguish_forward.5} parent=11 // pred_check_branch
          %430 = sbr.rel (%p428) target = $region32
        $region31: #{distinguish_forward.5} parent=11 // pred_region
          %s432 = ssub.s32 16, 16
          %433 = vsyncadd [#allocation12], %s432
          %s435 = sshll.u32 [#allocation13], 4
          %s436 = int_to_ptr.vmem [resolvable:$true] %s435
          %438 = dma.hbm_to_vmem [thread:$0]  %s6, 16, %s436, [#allocation12]
        $region32: #{distinguish_forward.5} parent=11 // pred_fallthru
          _
        // Predicated region
        $region33: #{distinguish_forward.5} parent=11 // pred_check
          %p439 = pneg %p213
        $region34: #{distinguish_forward.5} parent=11 // pred_check_branch
          %441 = sbr.rel (%p439) target = $region36
        $region35: #{distinguish_forward.5} parent=11 // pred_region
          %s443 = ssub.s32 16, 16
          %444 = vsyncadd [#allocation15], %s443
          %s446 = sshll.u32 [#allocation14], 4
          %s447 = int_to_ptr.vmem [resolvable:$true] %s446
          %449 = dma.hbm_to_vmem [thread:$0]  %s7, 16, %s447, [#allocation15]
        $region36: #{distinguish_forward.5} parent=11 // pred_fallthru
          _
        // Predicated region
        $region37: #{distinguish_forward.5} parent=11 // pred_check
          %p450 = pneg %p234
        $region38: #{distinguish_forward.5} parent=11 // pred_check_branch
          %452 = sbr.rel (%p450) target = $region40
        $region39: #{distinguish_forward.5} parent=11 // pred_region
          %s454 = ssub.s32 256, 256
          %455 = vsyncadd [#allocation15], %s454
          %s456 = sshll.u32 [#allocation16], 4
          %s457 = int_to_ptr.vmem [resolvable:$true] %s456
          %462 = dma.hbm_to_vmem [thread:$0]  %s8, 256, %s457, [#allocation15], 64, 64, 4
        $region40: #{distinguish_forward.5} parent=11 // pred_fallthru
          _
        // Predicated region
        $region41: #{distinguish_forward.5} parent=11 // pred_check
          %p463 = pneg %p255
        $region42: #{distinguish_forward.5} parent=11 // pred_check_branch
          %465 = sbr.rel (%p463) target = $region44
        $region43: #{distinguish_forward.5} parent=11 // pred_region
          %s467 = ssub.s32 16, 16
          %468 = vsyncadd [#allocation18], %s467
          %s470 = sshll.u32 [#allocation17], 4
          %s471 = int_to_ptr.vmem [resolvable:$true] %s470
          %473 = dma.hbm_to_vmem [thread:$0]  %s9, 16, %s471, [#allocation18]
        $region44: #{distinguish_forward.5} parent=11 // pred_fallthru
          _
        // Predicated region
        $region45: #{distinguish_forward.5} parent=11 // pred_check
          %p474 = pneg %p276
        $region46: #{distinguish_forward.5} parent=11 // pred_check_branch
          %476 = sbr.rel (%p474) target = $region48
        $region47: #{distinguish_forward.5} parent=11 // pred_region
          %s478 = ssub.s32 512, 512
          %479 = vsyncadd [#allocation18], %s478
          %s480 = sshll.u32 [#allocation19], 4
          %s481 = int_to_ptr.vmem [resolvable:$true] %s480
          %486 = dma.hbm_to_vmem [thread:$0]  %s10, 512, %s481, [#allocation18], 64, 64, 4
        $region48: #{distinguish_forward.5} parent=11 // pred_fallthru
          _
        // Predicated region
        $region49: #{distinguish_forward.5} parent=11 // pred_check
          %p487 = pneg %p297
        $region50: #{distinguish_forward.5} parent=11 // pred_check_branch
          %489 = sbr.rel (%p487) target = $region52
        $region51: #{distinguish_forward.5} parent=11 // pred_region
          %s491 = ssub.s32 16, 16
          %492 = vsyncadd [#allocation21], %s491
          %s494 = sshll.u32 [#allocation20], 4
          %s495 = int_to_ptr.vmem [resolvable:$true] %s494
          %497 = dma.hbm_to_vmem [thread:$0]  %s11, 16, %s495, [#allocation21]
        $region52: #{distinguish_forward.5} parent=11 // pred_fallthru
          _
        // Predicated region
        $region53: #{distinguish_forward.5} parent=11 // pred_check
          %p498 = pneg %p318
        $region54: #{distinguish_forward.5} parent=11 // pred_check_branch
          %500 = sbr.rel (%p498) target = $region56
        $region55: #{distinguish_forward.5} parent=11 // pred_region
          %s502 = ssub.s32 16, 16
          %503 = vsyncadd [#allocation21], %s502
          %s505 = sshll.u32 [#allocation22], 4
          %s506 = int_to_ptr.vmem [resolvable:$true] %s505
          %508 = dma.hbm_to_vmem [thread:$0]  %s12, 16, %s506, [#allocation21]
        $region56: #{distinguish_forward.5} parent=11 // pred_fallthru
          _
        // Predicated region
        $region57: #{distinguish_forward.5} parent=11 // pred_check
          %p509 = pneg %p339
        $region58: #{distinguish_forward.5} parent=11 // pred_check_branch
          %511 = sbr.rel (%p509) target = $region60
        $region59: #{distinguish_forward.5} parent=11 // pred_region
          %s513 = ssub.s32 16, 16
          %514 = vsyncadd [#allocation24], %s513
          %s516 = sshll.u32 [#allocation23], 4
          %s517 = int_to_ptr.vmem [resolvable:$true] %s516
          %519 = dma.hbm_to_vmem [thread:$0]  %s13, 16, %s517, [#allocation24]
        $region60: #{distinguish_forward.5} parent=11 // pred_fallthru
          _
      $region12: #{distinguish_forward.5} parent=5 // pred_fallthru
        _
      %p520 = scmp.lt.s32.totalorder %s35, 2
      // Predicated region
      $region61: #{distinguish_forward.5} parent=5 // pred_check
        %p521 = pneg %p520
      $region62: #{distinguish_forward.5} parent=5 // pred_check_branch
        %523 = sbr.rel (%p521) target = $region64
      $region63: #{distinguish_forward.5} parent=5 // pred_region
        // Predicated region
        $region65: #{distinguish_forward.5} parent=63 // pred_check
          %p524 = pneg %p55
        $region66: #{distinguish_forward.5} parent=63 // pred_check_branch
          %526 = sbr.rel (%p524) target = $region68
        $region67: #{distinguish_forward.5} parent=63 // pred_region
          %s527 = sand.u32 %s45, 1
          %s528 = scalar_lea.sflag [#allocation3], %s527
          %s529 = sand.u32 %s45, 1
          %s530 = smul.addr %s529, 4
          %s531 = scalar_lea.vmem [#allocation2], %s530
          %s533 = ssub.s32 64, 64
          %534 = vsyncadd %s528, %s533
          %s535 = smul.addr %s35, 64
          %s536 = scalar_lea.hbm %s0, %s535
          %s538 = sshll.u32 %s531, 4
          %s539 = int_to_ptr.vmem [resolvable:$true] %s538
          %541 = dma.hbm_to_vmem [thread:$0]  %s536, 64, %s539, %s528
        $region68: #{distinguish_forward.5} parent=63 // pred_fallthru
          _
        // Predicated region
        $region69: #{distinguish_forward.5} parent=63 // pred_check
          %p542 = pneg %p81
        $region70: #{distinguish_forward.5} parent=63 // pred_check_branch
          %544 = sbr.rel (%p542) target = $region72
        $region71: #{distinguish_forward.5} parent=63 // pred_region
          %s545 = sand.u32 %s35, 1
          %s546 = scalar_lea.sflag [#allocation6], %s545
          %s547 = sand.u32 %s71, 1
          %s548 = scalar_lea.vmem [#allocation5], %s547
          %s550 = ssub.s32 16, 16
          %551 = vsyncadd %s546, %s550
          %s552 = smul.addr %s35, 16
          %s553 = scalar_lea.hbm %s1, %s552
          %s555 = sshll.u32 %s548, 4
          %s556 = int_to_ptr.vmem [resolvable:$true] %s555
          %558 = dma.hbm_to_vmem [thread:$0]  %s553, 16, %s556, %s546
        $region72: #{distinguish_forward.5} parent=63 // pred_fallthru
          _
      $region64: #{distinguish_forward.5} parent=5 // pred_fallthru
        _
      %p559 = scmp.le.s32.totalorder 1, %s35
      %p560 = scmp.lt.s32.totalorder %s35, 3
      %p561 = pnand %p559, %p560
      %p562 = pneg %p561
      // Predicated region
      $region73: #{distinguish_forward.5} parent=5 // pred_check
        _
      $region74: #{distinguish_forward.5} parent=5 // pred_check_branch
        %564 = sbr.rel (%p561) target = $region76
      $region75: #{distinguish_forward.5} parent=5 // pred_region
        %s565 = ssub.s32 %s35, 1
        %s566 = sand.u32 %s48, 1
        %s567 = scalar_lea.sflag [#allocation3], %s566
        %s568 = sand.u32 %s48, 1
        %s569 = smul.addr %s568, 4
        %s570 = scalar_lea.vmem [#allocation2], %s569
        // Predicated region
        $region77: #{distinguish_forward.5} parent=75 // pred_check
          %p571 = pneg %p61
        $region78: #{distinguish_forward.5} parent=75 // pred_check_branch
          %573 = sbr.rel (%p571) target = $region80
        $region79: #{distinguish_forward.5} parent=75 // pred_region
          %574 = dma.done %s567, 64
        $region80: #{distinguish_forward.5} parent=75 // pred_fallthru
          _
        %s575 = sand.u32 %s40, 1
        %s576 = scalar_lea.sflag [#allocation6], %s575
        %s577 = sand.u32 %s74, 1
        %s578 = scalar_lea.vmem [#allocation5], %s577
        // Predicated region
        $region81: #{distinguish_forward.5} parent=75 // pred_check
          %p579 = pneg %p87
        $region82: #{distinguish_forward.5} parent=75 // pred_check_branch
          %581 = sbr.rel (%p579) target = $region84
        $region83: #{distinguish_forward.5} parent=75 // pred_region
          %582 = dma.done %s576, 16
        $region84: #{distinguish_forward.5} parent=75 // pred_fallthru
          _
        // Predicated region
        $region85: #{distinguish_forward.5} parent=75 // pred_check
          %p583 = pneg %p108
        $region86: #{distinguish_forward.5} parent=75 // pred_check_branch
          %585 = sbr.rel (%p583) target = $region88
        $region87: #{distinguish_forward.5} parent=75 // pred_region
          %586 = dma.done [#allocation6], 256
        $region88: #{distinguish_forward.5} parent=75 // pred_fallthru
          _
        // Predicated region
        $region89: #{distinguish_forward.5} parent=75 // pred_check
          %p587 = pneg %p129
        $region90: #{distinguish_forward.5} parent=75 // pred_check_branch
          %589 = sbr.rel (%p587) target = $region92
        $region91: #{distinguish_forward.5} parent=75 // pred_region
          %590 = dma.done [#allocation9], 16
        $region92: #{distinguish_forward.5} parent=75 // pred_fallthru
          _
        // Predicated region
        $region93: #{distinguish_forward.5} parent=75 // pred_check
          %p591 = pneg %p150
        $region94: #{distinguish_forward.5} parent=75 // pred_check_branch
          %593 = sbr.rel (%p591) target = $region96
        $region95: #{distinguish_forward.5} parent=75 // pred_region
          %594 = dma.done [#allocation9], 256
        $region96: #{distinguish_forward.5} parent=75 // pred_fallthru
          _
        // Predicated region
        $region97: #{distinguish_forward.5} parent=75 // pred_check
          %p595 = pneg %p171
        $region98: #{distinguish_forward.5} parent=75 // pred_check_branch
          %597 = sbr.rel (%p595) target = $region100
        $region99: #{distinguish_forward.5} parent=75 // pred_region
          %598 = dma.done [#allocation12], 16
        $region100: #{distinguish_forward.5} parent=75 // pred_fallthru
          _
        // Predicated region
        $region101: #{distinguish_forward.5} parent=75 // pred_check
          %p599 = pneg %p192
        $region102: #{distinguish_forward.5} parent=75 // pred_check_branch
          %601 = sbr.rel (%p599) target = $region104
        $region103: #{distinguish_forward.5} parent=75 // pred_region
          %602 = dma.done [#allocation12], 16
        $region104: #{distinguish_forward.5} parent=75 // pred_fallthru
          _
        // Predicated region
        $region105: #{distinguish_forward.5} parent=75 // pred_check
          %p603 = pneg %p213
        $region106: #{distinguish_forward.5} parent=75 // pred_check_branch
          %605 = sbr.rel (%p603) target = $region108
        $region107: #{distinguish_forward.5} parent=75 // pred_region
          %606 = dma.done [#allocation15], 16
        $region108: #{distinguish_forward.5} parent=75 // pred_fallthru
          _
        // Predicated region
        $region109: #{distinguish_forward.5} parent=75 // pred_check
          %p607 = pneg %p234
        $region110: #{distinguish_forward.5} parent=75 // pred_check_branch
          %609 = sbr.rel (%p607) target = $region112
        $region111: #{distinguish_forward.5} parent=75 // pred_region
          %610 = dma.done [#allocation15], 256
        $region112: #{distinguish_forward.5} parent=75 // pred_fallthru
          _
        // Predicated region
        $region113: #{distinguish_forward.5} parent=75 // pred_check
          %p611 = pneg %p255
        $region114: #{distinguish_forward.5} parent=75 // pred_check_branch
          %613 = sbr.rel (%p611) target = $region116
        $region115: #{distinguish_forward.5} parent=75 // pred_region
          %614 = dma.done [#allocation18], 16
        $region116: #{distinguish_forward.5} parent=75 // pred_fallthru
          _
        // Predicated region
        $region117: #{distinguish_forward.5} parent=75 // pred_check
          %p615 = pneg %p276
        $region118: #{distinguish_forward.5} parent=75 // pred_check_branch
          %617 = sbr.rel (%p615) target = $region120
        $region119: #{distinguish_forward.5} parent=75 // pred_region
          %618 = dma.done [#allocation18], 512
        $region120: #{distinguish_forward.5} parent=75 // pred_fallthru
          _
        // Predicated region
        $region121: #{distinguish_forward.5} parent=75 // pred_check
          %p619 = pneg %p297
        $region122: #{distinguish_forward.5} parent=75 // pred_check_branch
          %621 = sbr.rel (%p619) target = $region124
        $region123: #{distinguish_forward.5} parent=75 // pred_region
          %622 = dma.done [#allocation21], 16
        $region124: #{distinguish_forward.5} parent=75 // pred_fallthru
          _
        // Predicated region
        $region125: #{distinguish_forward.5} parent=75 // pred_check
          %p623 = pneg %p318
        $region126: #{distinguish_forward.5} parent=75 // pred_check_branch
          %625 = sbr.rel (%p623) target = $region128
        $region127: #{distinguish_forward.5} parent=75 // pred_region
          %626 = dma.done [#allocation21], 16
        $region128: #{distinguish_forward.5} parent=75 // pred_fallthru
          _
        // Predicated region
        $region129: #{distinguish_forward.5} parent=75 // pred_check
          %p627 = pneg %p339
        $region130: #{distinguish_forward.5} parent=75 // pred_check_branch
          %629 = sbr.rel (%p627) target = $region132
        $region131: #{distinguish_forward.5} parent=75 // pred_region
          %630 = dma.done [#allocation24], 16
        $region132: #{distinguish_forward.5} parent=75 // pred_fallthru
          _
        %s631 = sand.u32 %s48, 1
        %s632 = scalar_lea.sflag [#allocation3], %s631
        %s633 = sand.u32 %s48, 1
        %s634 = smul.addr %s633, 4
        %s635 = scalar_lea.vmem [#allocation2], %s634
        %p636 = pneg %p61
        %p637 = pneg %p58
        %s638 = sand.u32 %s40, 1
        %s639 = scalar_lea.sflag [#allocation6], %s638
        %s640 = sand.u32 %s74, 1
        %s641 = scalar_lea.vmem [#allocation5], %s640
        %p642 = pneg %p87
        %p643 = pneg %p84
        %p644 = pneg %p108
        %p645 = pneg %p105
        %p646 = pneg %p129
        %p647 = pneg %p126
        %p648 = pneg %p150
        %p649 = pneg %p147
        %p650 = pneg %p171
        %p651 = pneg %p168
        %p652 = pneg %p192
        %p653 = pneg %p189
        %p654 = pneg %p213
        %p655 = pneg %p210
        %p656 = pneg %p234
        %p657 = pneg %p231
        %p658 = pneg %p255
        %p659 = pneg %p252
        %p660 = pneg %p276
        %p661 = pneg %p273
        %p662 = pneg %p297
        %p663 = pneg %p294
        %p664 = pneg %p318
        %p665 = pneg %p315
        %p666 = pneg %p339
        %p667 = pneg %p336
        %p668 = pneg %p365
        %p669 = pneg %p362
        %s670 = sand.u32 %s352, 1
        %s671 = scalar_lea.sflag [#allocation4], %s670
        %s672 = sand.u32 %s352, 1
        %s673 = smul.addr %s672, 4
        %s674 = scalar_lea.vmem [#allocation25], %s673
        %v676 = vld [vmem:[%s570] sm:$0xf]
        %v677 = vunpack.c.l.bf16 %v676
        %v678 = vld [vmem:[%s578] sm:$0x1]
        %v679 = vld [vmem:[#allocation7] sm:$0xf]
        %v680 = vld [vmem:[#allocation7 + $0x4] sm:$0xf]
        %v681 = vld [vmem:[#allocation7 + $0x8] sm:$0xf]
        %v682 = vld [vmem:[#allocation7 + $0xc] sm:$0xf]
        %v683 = vld [vmem:[#allocation8] sm:$0x1]
        %v685 = vlaneseq
        %v686 = vshrl.u32 %v685, 7
        %v687 = vsub.s32 0, %v686
        %v688 = vrot.slane %v683, %v687
        %v694 = vunpack.c.l.b16 %v679
        %v695 = vunpack.c.l.b16 %v680
        %v696 = vunpack.c.l.b16 %v681
        %v697 = vunpack.c.l.b16 %v682
        %v698 = vpack.c.b16 %v695, %v694
        %v699 = vpack.c.b16 %v697, %v696
        %vm702 = vcmask 261120
        %v704 = vsel %vm702, %v676, 0
        %706 = vmatprep.subr.bf16.mxu0 0
        %707 = vmatpush1.bf16.msra.mxu0 %v698
        %708 = vmatprep.subr.bf16.mxu0 0
        %709 = vmatpush1.bf16.msra.mxu0 %v699
        %710 = vmatprep.subr.bf16.mxu0 0
        %711 = vmatpush1.bf16.msra.mxu0 0
        %712 = vmatprep.subr.bf16.mxu0 0
        %713 = vmatpush1.bf16.msra.mxu0 0
        %714 = vmatprep.subr.bf16.mxu0 0
        %715 = vmatpush1.bf16.msra.mxu0 0
        %716 = vmatprep.subr.bf16.mxu0 0
        %717 = vmatpush1.bf16.msra.mxu0 0
        %718 = vmatprep.subr.bf16.mxu0 0
        %719 = vmatpush1.bf16.msra.mxu0 0
        %720 = vmatprep.subr.bf16.mxu0 0
        %721 = vmatpush1.bf16.msra.mxu0 0
        %722 = vmatprep.subr.bf16.mxu0 0
        %723 = vmatpush1.bf16.msra.mxu0 0
        %724 = vmatprep.subr.bf16.mxu0 0
        %725 = vmatpush1.bf16.msra.mxu0 0
        %726 = vmatprep.subr.bf16.mxu0 0
        %727 = vmatpush1.bf16.msra.mxu0 0
        %728 = vmatprep.subr.bf16.mxu0 0
        %729 = vmatpush1.bf16.msra.mxu0 0
        %730 = vmatprep.subr.bf16.mxu0 0
        %731 = vmatpush1.bf16.msra.mxu0 0
        %732 = vmatprep.subr.bf16.mxu0 0
        %733 = vmatpush1.bf16.msra.mxu0 0
        %734 = vmatprep.subr.bf16.mxu0 0
        %735 = vmatpush1.bf16.msra.mxu0 0
        %736 = vmatprep.subr.bf16.mxu0 0
        %737 = vmatpush1.bf16.msra.mxu0 0
        %738 = vmatprep.mubr.bf16.mxu0 0
        %739 = vmatmul.mubr.bf16.gmra.mrb[0].mxu0 %v704
        %v740 = vpop.f32.mrb[0].mxu0
        %v741 = vadd.f32 %v688, %v740
        %v742 = vpop.f32.mrb[0].mxu0
        %v743 = vpop.f32.mrb[0].mxu0
        %v744 = vpop.f32.mrb[0].mxu0
        %745 = vdwg.mxu0
        %v746 = vpack.c.bf16 %v741, %v741
        %748 = vrot.lane.b32.xlu0 %v746, 96
        %v749 = vpop.permute.xlu0 %748
        %vm750 = vcmask 130048
        %v752 = vsel %vm750, %v746, 0
        %v755 = vsel %vm750, %v749, 0
        %757 = vmatprep.subr.bf16.mxu0 0
        %758 = vmatpush1.bf16.xpose.msra.mxu0 %v755
        %759 = vmatprep.subr.bf16.mxu0 0
        %760 = vmatpush1.bf16.xpose.msra.mxu0 0
        %761 = vmatprep.subr.bf16.mxu0 0
        %762 = vmatpush1.bf16.xpose.msra.mxu0 0
        %763 = vmatprep.subr.bf16.mxu0 0
        %764 = vmatpush1.bf16.xpose.msra.mxu0 0
        %765 = vmatprep.subr.bf16.mxu0 0
        %766 = vmatpush1.bf16.xpose.msra.mxu0 0
        %767 = vmatprep.subr.bf16.mxu0 0
        %768 = vmatpush1.bf16.xpose.msra.mxu0 0
        %769 = vmatprep.subr.bf16.mxu0 0
        %770 = vmatpush1.bf16.xpose.msra.mxu0 0
        %771 = vmatprep.subr.bf16.mxu0 0
        %772 = vmatpush1.bf16.xpose.msra.mxu0 0
        %773 = vmatprep.subr.bf16.mxu0 0
        %774 = vmatpush1.bf16.xpose.msra.mxu0 0
        %775 = vmatprep.subr.bf16.mxu0 0
        %776 = vmatpush1.bf16.xpose.msra.mxu0 0
        %777 = vmatprep.subr.bf16.mxu0 0
        %778 = vmatpush1.bf16.xpose.msra.mxu0 0
        %779 = vmatprep.subr.bf16.mxu0 0
        %780 = vmatpush1.bf16.xpose.msra.mxu0 0
        %781 = vmatprep.subr.bf16.mxu0 0
        %782 = vmatpush1.bf16.xpose.msra.mxu0 0
        %783 = vmatprep.subr.bf16.mxu0 0
        %784 = vmatpush1.bf16.xpose.msra.mxu0 0
        %785 = vmatprep.subr.bf16.mxu0 0
        %786 = vmatpush1.bf16.xpose.msra.mxu0 0
        %787 = vmatprep.subr.bf16.mxu0 0
        %788 = vmatpush1.bf16.xpose.msra.mxu0 0
        %789 = vmatprep.mubr.bf16.mxu0 0
        %790 = vmatmul.mubr.bf16.gmra.mrb[0].mxu0 %v752
        %v791 = vpop.f32.mrb[0].mxu0
        %v792 = vadd.f32 0.0, %v791
        %v793 = vpop.f32.mrb[0].mxu0
        %v794 = vpop.f32.mrb[0].mxu0
        %v795 = vpop.f32.mrb[0].mxu0
        %796 = vdwg.mxu0
        %v797 = vmul.f32 %v792, 0.25
        %v799 = vlaneseq
        %v800 = vshrl.u32 %v799, 7
        %v801 = vsub.s32 0, %v800
        %v802 = vrot.slane %v678, %v801
        %v804 = vadd.f32 %v797, %v802
        %vm805 = vcmask 64512
        %v806 = vsel %vm805, %v804, -inf
        %807 = vmax.xlane.f32.xlu0 %v806
        %v808 = vpop.xlane.xlu0 %807
        %v809 = vsub.f32 %v804, %v808
        %v810 = vmul.f32 %v809, 1.442695
        %v811 = vpow.pop %v810
        %v812 = vsel %vm805, %v811, 0.0
        %813 = vadd.xlane.f32.xlu0 %v812
        %v814 = vpop.xlane.xlu0 %813
        %v815 = vrcp.pop %v814
        %v816 = vmul.f32 %v811, %v815
        %v817 = vpack.c.bf16 %v816, %v816
        %818 = vrot.lane.b32.xlu0 %v746, 64
        %v819 = vpop.permute.xlu0 %818
        %v821 = vsel %vm805, %v817, 0
        %vm823 = vcmask 1043456
        %v825 = vsel %vm823, %v819, 0
        %827 = vmatprep.subr.bf16.mxu0 0
        %828 = vmatpush1.bf16.msra.mxu0 %v825
        %829 = vmatprep.subr.bf16.mxu0 0
        %830 = vmatpush1.bf16.msra.mxu0 0
        %831 = vmatprep.subr.bf16.mxu0 0
        %832 = vmatpush1.bf16.msra.mxu0 0
        %833 = vmatprep.subr.bf16.mxu0 0
        %834 = vmatpush1.bf16.msra.mxu0 0
        %835 = vmatprep.subr.bf16.mxu0 0
        %836 = vmatpush1.bf16.msra.mxu0 0
        %837 = vmatprep.subr.bf16.mxu0 0
        %838 = vmatpush1.bf16.msra.mxu0 0
        %839 = vmatprep.subr.bf16.mxu0 0
        %840 = vmatpush1.bf16.msra.mxu0 0
        %841 = vmatprep.subr.bf16.mxu0 0
        %842 = vmatpush1.bf16.msra.mxu0 0
        %843 = vmatprep.subr.bf16.mxu0 0
        %844 = vmatpush1.bf16.msra.mxu0 0
        %845 = vmatprep.subr.bf16.mxu0 0
        %846 = vmatpush1.bf16.msra.mxu0 0
        %847 = vmatprep.subr.bf16.mxu0 0
        %848 = vmatpush1.bf16.msra.mxu0 0
        %849 = vmatprep.subr.bf16.mxu0 0
        %850 = vmatpush1.bf16.msra.mxu0 0
        %851 = vmatprep.subr.bf16.mxu0 0
        %852 = vmatpush1.bf16.msra.mxu0 0
        %853 = vmatprep.subr.bf16.mxu0 0
        %854 = vmatpush1.bf16.msra.mxu0 0
        %855 = vmatprep.subr.bf16.mxu0 0
        %856 = vmatpush1.bf16.msra.mxu0 0
        %857 = vmatprep.subr.bf16.mxu0 0
        %858 = vmatpush1.bf16.msra.mxu0 0
        %859 = vmatprep.mubr.bf16.mxu0 0
        %860 = vmatmul.mubr.bf16.gmra.mrb[0].mxu0 %v821
        %v861 = vpop.f32.mrb[0].mxu0
        %v862 = vadd.f32 0.0, %v861
        %v863 = vpop.f32.mrb[0].mxu0
        %v864 = vpop.f32.mrb[0].mxu0
        %v865 = vpop.f32.mrb[0].mxu0
        %866 = vdwg.mxu0
        %867 = vrot.lane.b32.xlu0 %v746, 112
        %v868 = vpop.permute.xlu0 %867
        %869 = vrot.lane.b32.xlu0 %v746, 80
        %v870 = vpop.permute.xlu0 %869
        %v872 = vsel %vm750, %v868, 0
        %v875 = vsel %vm750, %v870, 0
        %877 = vmatprep.subr.bf16.mxu0 0
        %878 = vmatpush1.bf16.xpose.msra.mxu0 %v875
        %879 = vmatprep.subr.bf16.mxu0 0
        %880 = vmatpush1.bf16.xpose.msra.mxu0 0
        %881 = vmatprep.subr.bf16.mxu0 0
        %882 = vmatpush1.bf16.xpose.msra.mxu0 0
        %883 = vmatprep.subr.bf16.mxu0 0
        %884 = vmatpush1.bf16.xpose.msra.mxu0 0
        %885 = vmatprep.subr.bf16.mxu0 0
        %886 = vmatpush1.bf16.xpose.msra.mxu0 0
        %887 = vmatprep.subr.bf16.mxu0 0
        %888 = vmatpush1.bf16.xpose.msra.mxu0 0
        %889 = vmatprep.subr.bf16.mxu0 0
        %890 = vmatpush1.bf16.xpose.msra.mxu0 0
        %891 = vmatprep.subr.bf16.mxu0 0
        %892 = vmatpush1.bf16.xpose.msra.mxu0 0
        %893 = vmatprep.subr.bf16.mxu0 0
        %894 = vmatpush1.bf16.xpose.msra.mxu0 0
        %895 = vmatprep.subr.bf16.mxu0 0
        %896 = vmatpush1.bf16.xpose.msra.mxu0 0
        %897 = vmatprep.subr.bf16.mxu0 0
        %898 = vmatpush1.bf16.xpose.msra.mxu0 0
        %899 = vmatprep.subr.bf16.mxu0 0
        %900 = vmatpush1.bf16.xpose.msra.mxu0 0
        %901 = vmatprep.subr.bf16.mxu0 0
        %902 = vmatpush1.bf16.xpose.msra.mxu0 0
        %903 = vmatprep.subr.bf16.mxu0 0
        %904 = vmatpush1.bf16.xpose.msra.mxu0 0
        %905 = vmatprep.subr.bf16.mxu0 0
        %906 = vmatpush1.bf16.xpose.msra.mxu0 0
        %907 = vmatprep.subr.bf16.mxu0 0
        %908 = vmatpush1.bf16.xpose.msra.mxu0 0
        %909 = vmatprep.mubr.bf16.mxu0 0
        %910 = vmatmul.mubr.bf16.gmra.mrb[0].mxu0 %v872
        %v911 = vpop.f32.mrb[0].mxu0
        %v912 = vadd.f32 0.0, %v911
        %v913 = vpop.f32.mrb[0].mxu0
        %v914 = vpop.f32.mrb[0].mxu0
        %v915 = vpop.f32.mrb[0].mxu0
        %916 = vdwg.mxu0
        %v917 = vmul.f32 %v912, 0.25
        %v918 = vadd.f32 %v917, %v802
        %v919 = vsel %vm805, %v918, -inf
        %920 = vmax.xlane.f32.xlu0 %v919
        %v921 = vpop.xlane.xlu0 %920
        %v922 = vsub.f32 %v918, %v921
        %v923 = vmul.f32 %v922, 1.442695
        %v924 = vpow.pop %v923
        %v925 = vsel %vm805, %v924, 0.0
        %926 = vadd.xlane.f32.xlu0 %v925
        %v927 = vpop.xlane.xlu0 %926
        %v928 = vrcp.pop %v927
        %v929 = vmul.f32 %v924, %v928
        %v930 = vpack.c.bf16 %v929, %v929
        %931 = vrot.lane.b32.xlu0 %v746, 48
        %v932 = vpop.permute.xlu0 %931
        %v934 = vsel %vm805, %v930, 0
        %v937 = vsel %vm823, %v932, 0
        %939 = vmatprep.subr.bf16.mxu0 0
        %940 = vmatpush1.bf16.msra.mxu0 %v937
        %941 = vmatprep.subr.bf16.mxu0 0
        %942 = vmatpush1.bf16.msra.mxu0 0
        %943 = vmatprep.subr.bf16.mxu0 0
        %944 = vmatpush1.bf16.msra.mxu0 0
        %945 = vmatprep.subr.bf16.mxu0 0
        %946 = vmatpush1.bf16.msra.mxu0 0
        %947 = vmatprep.subr.bf16.mxu0 0
        %948 = vmatpush1.bf16.msra.mxu0 0
        %949 = vmatprep.subr.bf16.mxu0 0
        %950 = vmatpush1.bf16.msra.mxu0 0
        %951 = vmatprep.subr.bf16.mxu0 0
        %952 = vmatpush1.bf16.msra.mxu0 0
        %953 = vmatprep.subr.bf16.mxu0 0
        %954 = vmatpush1.bf16.msra.mxu0 0
        %955 = vmatprep.subr.bf16.mxu0 0
        %956 = vmatpush1.bf16.msra.mxu0 0
        %957 = vmatprep.subr.bf16.mxu0 0
        %958 = vmatpush1.bf16.msra.mxu0 0
        %959 = vmatprep.subr.bf16.mxu0 0
        %960 = vmatpush1.bf16.msra.mxu0 0
        %961 = vmatprep.subr.bf16.mxu0 0
        %962 = vmatpush1.bf16.msra.mxu0 0
        %963 = vmatprep.subr.bf16.mxu0 0
        %964 = vmatpush1.bf16.msra.mxu0 0
        %965 = vmatprep.subr.bf16.mxu0 0
        %966 = vmatpush1.bf16.msra.mxu0 0
        %967 = vmatprep.subr.bf16.mxu0 0
        %968 = vmatpush1.bf16.msra.mxu0 0
        %969 = vmatprep.subr.bf16.mxu0 0
        %970 = vmatpush1.bf16.msra.mxu0 0
        %971 = vmatprep.mubr.bf16.mxu0 0
        %972 = vmatmul.mubr.bf16.gmra.mrb[0].mxu0 %v934
        %v973 = vpop.f32.mrb[0].mxu0
        %v974 = vadd.f32 0.0, %v973
        %v975 = vpop.f32.mrb[0].mxu0
        %v976 = vpop.f32.mrb[0].mxu0
        %v977 = vpop.f32.mrb[0].mxu0
        %978 = vdwg.mxu0
        %980 = vrot.lane.b32.xlu0 %v974, 16
        %v981 = vpop.permute.xlu0 %980
        %v983 = vsel %vm750, %v862, %v981
        %v984 = vpack.c.bf16 %v983, %v983
        %v985 = vld [vmem:[#allocation10] sm:$0xf]
        %v986 = vld [vmem:[#allocation10 + $0x4] sm:$0xf]
        %v987 = vld [vmem:[#allocation10 + $0x8] sm:$0xf]
        %v988 = vld [vmem:[#allocation10 + $0xc] sm:$0xf]
        %v989 = vld [vmem:[#allocation11] sm:$0x1]
        %v991 = vlaneseq
        %v992 = vshrl.u32 %v991, 7
        %v993 = vsub.s32 0, %v992
        %v994 = vrot.slane %v989, %v993
        %v1000 = vunpack.c.l.b16 %v985
        %v1001 = vunpack.c.l.b16 %v986
        %v1002 = vunpack.c.l.b16 %v987
        %v1003 = vunpack.c.l.b16 %v988
        %v1004 = vpack.c.b16 %v1001, %v1000
        %v1005 = vpack.c.b16 %v1003, %v1002
        %v1009 = vsel %vm702, %v984, 0
        %1011 = vmatprep.subr.bf16.mxu0 0
        %1012 = vmatpush1.bf16.msra.mxu0 %v1004
        %1013 = vmatprep.subr.bf16.mxu0 0
        %1014 = vmatpush1.bf16.msra.mxu0 %v1005
        %1015 = vmatprep.subr.bf16.mxu0 0
        %1016 = vmatpush1.bf16.msra.mxu0 0
        %1017 = vmatprep.subr.bf16.mxu0 0
        %1018 = vmatpush1.bf16.msra.mxu0 0
        %1019 = vmatprep.subr.bf16.mxu0 0
        %1020 = vmatpush1.bf16.msra.mxu0 0
        %1021 = vmatprep.subr.bf16.mxu0 0
        %1022 = vmatpush1.bf16.msra.mxu0 0
        %1023 = vmatprep.subr.bf16.mxu0 0
        %1024 = vmatpush1.bf16.msra.mxu0 0
        %1025 = vmatprep.subr.bf16.mxu0 0
        %1026 = vmatpush1.bf16.msra.mxu0 0
        %1027 = vmatprep.subr.bf16.mxu0 0
        %1028 = vmatpush1.bf16.msra.mxu0 0
        %1029 = vmatprep.subr.bf16.mxu0 0
        %1030 = vmatpush1.bf16.msra.mxu0 0
        %1031 = vmatprep.subr.bf16.mxu0 0
        %1032 = vmatpush1.bf16.msra.mxu0 0
        %1033 = vmatprep.subr.bf16.mxu0 0
        %1034 = vmatpush1.bf16.msra.mxu0 0
        %1035 = vmatprep.subr.bf16.mxu0 0
        %1036 = vmatpush1.bf16.msra.mxu0 0
        %1037 = vmatprep.subr.bf16.mxu0 0
        %1038 = vmatpush1.bf16.msra.mxu0 0
        %1039 = vmatprep.subr.bf16.mxu0 0
        %1040 = vmatpush1.bf16.msra.mxu0 0
        %1041 = vmatprep.subr.bf16.mxu0 0
        %1042 = vmatpush1.bf16.msra.mxu0 0
        %1043 = vmatprep.mubr.bf16.mxu0 0
        %1044 = vmatmul.mubr.bf16.gmra.mrb[0].mxu0 %v1009
        %v1045 = vpop.f32.mrb[0].mxu0
        %v1046 = vadd.f32 %v994, %v1045
        %v1047 = vpop.f32.mrb[0].mxu0
        %v1048 = vpop.f32.mrb[0].mxu0
        %v1049 = vpop.f32.mrb[0].mxu0
        %1050 = vdwg.mxu0
        %v1051 = vadd.f32 %v1046, %v677
        %v1052 = vld [vmem:[#allocation13] sm:$0x1]
        %v1053 = vld [vmem:[#allocation14] sm:$0x1]
        %v1054 = vsel %vm702, %v1051, 0.0
        %1055 = vadd.xlane.f32.xlu0 %v1054
        %v1056 = vpop.xlane.xlu0 %1055
        %v1057 = vrcp.pop 32.0
        %v1058 = vmul.f32 %v1056, %v1057
        %v1059 = vsub.f32 %v1051, %v1058
        %v1060 = vmul.f32 %v1059, %v1059
        %v1061 = vsel %vm702, %v1060, 0.0
        %1062 = vadd.xlane.f32.xlu0 %v1061
        %v1063 = vpop.xlane.xlu0 %1062
        %v1064 = vmul.f32 %v1063, %v1057
        %v1065 = vadd.f32 %v1064, 1e-05
        %v1066 = vrsqrt.pop %v1065
        %v1067 = vmul.f32 %v1059, %v1066
        %v1069 = vlaneseq
        %v1070 = vshrl.u32 %v1069, 7
        %v1071 = vsub.s32 0, %v1070
        %v1072 = vrot.slane %v1052, %v1071
        %v1074 = vmul.f32 %v1067, %v1072
        %v1076 = vlaneseq
        %v1077 = vshrl.u32 %v1076, 7
        %v1078 = vsub.s32 0, %v1077
        %v1079 = vrot.slane %v1053, %v1078
        %v1081 = vadd.f32 %v1074, %v1079
        %v1082 = vpack.c.bf16 %v1081, %v1081
        %v1083 = vld [vmem:[#allocation16] sm:$0xf]
        %v1084 = vld [vmem:[#allocation16 + $0x4] sm:$0xf]
        %v1085 = vld [vmem:[#allocation16 + $0x8] sm:$0xf]
        %v1086 = vld [vmem:[#allocation16 + $0xc] sm:$0xf]
        %v1087 = vld [vmem:[#allocation17] sm:$0x1]
        %v1089 = vlaneseq
        %v1090 = vshrl.u32 %v1089, 7
        %v1091 = vsub.s32 0, %v1090
        %v1092 = vrot.slane %v1087, %v1091
        %v1098 = vunpack.c.l.b16 %v1083
        %v1099 = vunpack.c.l.b16 %v1084
        %v1100 = vunpack.c.l.b16 %v1085
        %v1101 = vunpack.c.l.b16 %v1086
        %v1102 = vpack.c.b16 %v1099, %v1098
        %v1103 = vpack.c.b16 %v1101, %v1100
        %v1107 = vsel %vm702, %v1082, 0
        %1109 = vmatprep.subr.bf16.mxu0 0
        %1110 = vmatpush1.bf16.msra.mxu0 %v1102
        %1111 = vmatprep.subr.bf16.mxu0 0
        %1112 = vmatpush1.bf16.msra.mxu0 %v1103
        %1113 = vmatprep.subr.bf16.mxu0 0
        %1114 = vmatpush1.bf16.msra.mxu0 0
        %1115 = vmatprep.subr.bf16.mxu0 0
        %1116 = vmatpush1.bf16.msra.mxu0 0
        %1117 = vmatprep.subr.bf16.mxu0 0
        %1118 = vmatpush1.bf16.msra.mxu0 0
        %1119 = vmatprep.subr.bf16.mxu0 0
        %1120 = vmatpush1.bf16.msra.mxu0 0
        %1121 = vmatprep.subr.bf16.mxu0 0
        %1122 = vmatpush1.bf16.msra.mxu0 0
        %1123 = vmatprep.subr.bf16.mxu0 0
        %1124 = vmatpush1.bf16.msra.mxu0 0
        %1125 = vmatprep.subr.bf16.mxu0 0
        %1126 = vmatpush1.bf16.msra.mxu0 0
        %1127 = vmatprep.subr.bf16.mxu0 0
        %1128 = vmatpush1.bf16.msra.mxu0 0
        %1129 = vmatprep.subr.bf16.mxu0 0
        %1130 = vmatpush1.bf16.msra.mxu0 0
        %1131 = vmatprep.subr.bf16.mxu0 0
        %1132 = vmatpush1.bf16.msra.mxu0 0
        %1133 = vmatprep.subr.bf16.mxu0 0
        %1134 = vmatpush1.bf16.msra.mxu0 0
        %1135 = vmatprep.subr.bf16.mxu0 0
        %1136 = vmatpush1.bf16.msra.mxu0 0
        %1137 = vmatprep.subr.bf16.mxu0 0
        %1138 = vmatpush1.bf16.msra.mxu0 0
        %1139 = vmatprep.subr.bf16.mxu0 0
        %1140 = vmatpush1.bf16.msra.mxu0 0
        %1141 = vmatprep.mubr.bf16.mxu0 0
        %1142 = vmatmul.mubr.bf16.gmra.mrb[0].mxu0 %v1107
        %v1143 = vpop.f32.mrb[0].mxu0
        %v1144 = vadd.f32 %v1092, %v1143
        %v1145 = vpop.f32.mrb[0].mxu0
        %v1146 = vpop.f32.mrb[0].mxu0
        %v1147 = vpop.f32.mrb[0].mxu0
        %1148 = vdwg.mxu0
        %v1149 = vmul.f32 %v1144, 0.5
        %v1150 = vmul.f32 %v1144, 0.70710677
        %v1151 = verf.f32.pop %v1150
        %v1152 = vadd.f32 %v1151, 1.0
        %v1153 = vmul.f32 %v1149, %v1152
        %v1154 = vpack.c.bf16 %v1153, %v1153
        %v1155 = vld [vmem:[#allocation19] sm:$0xf]
        %v1156 = vld [vmem:[#allocation19 + $0x4] sm:$0xf]
        %v1157 = vld [vmem:[#allocation19 + $0x8] sm:$0xf]
        %v1158 = vld [vmem:[#allocation19 + $0xc] sm:$0xf]
        %v1159 = vld [vmem:[#allocation19 + $0x10] sm:$0xf]
        %v1160 = vld [vmem:[#allocation19 + $0x14] sm:$0xf]
        %v1161 = vld [vmem:[#allocation19 + $0x18] sm:$0xf]
        %v1162 = vld [vmem:[#allocation19 + $0x1c] sm:$0xf]
        %v1163 = vld [vmem:[#allocation20] sm:$0x1]
        %v1165 = vlaneseq
        %v1166 = vshrl.u32 %v1165, 7
        %v1167 = vsub.s32 0, %v1166
        %v1168 = vrot.slane %v1163, %v1167
        %v1178 = vunpack.c.l.b16 %v1155
        %v1179 = vunpack.c.l.b16 %v1156
        %v1180 = vunpack.c.l.b16 %v1157
        %v1181 = vunpack.c.l.b16 %v1158
        %v1182 = vunpack.c.l.b16 %v1159
        %v1183 = vunpack.c.l.b16 %v1160
        %v1184 = vunpack.c.l.b16 %v1161
        %v1185 = vunpack.c.l.b16 %v1162
        %v1186 = vpack.c.b16 %v1179, %v1178
        %v1187 = vpack.c.b16 %v1181, %v1180
        %v1188 = vpack.c.b16 %v1183, %v1182
        %v1189 = vpack.c.b16 %v1185, %v1184
        %vm1194 = vcmask 523264
        %v1196 = vsel %vm1194, %v1154, 0
        %1198 = vmatprep.subr.bf16.mxu0 0
        %1199 = vmatpush1.bf16.msra.mxu0 %v1186
        %1200 = vmatprep.subr.bf16.mxu0 0
        %1201 = vmatpush1.bf16.msra.mxu0 %v1187
        %1202 = vmatprep.subr.bf16.mxu0 0
        %1203 = vmatpush1.bf16.msra.mxu0 %v1188
        %1204 = vmatprep.subr.bf16.mxu0 0
        %1205 = vmatpush1.bf16.msra.mxu0 %v1189
        %1206 = vmatprep.subr.bf16.mxu0 0
        %1207 = vmatpush1.bf16.msra.mxu0 0
        %1208 = vmatprep.subr.bf16.mxu0 0
        %1209 = vmatpush1.bf16.msra.mxu0 0
        %1210 = vmatprep.subr.bf16.mxu0 0
        %1211 = vmatpush1.bf16.msra.mxu0 0
        %1212 = vmatprep.subr.bf16.mxu0 0
        %1213 = vmatpush1.bf16.msra.mxu0 0
        %1214 = vmatprep.subr.bf16.mxu0 0
        %1215 = vmatpush1.bf16.msra.mxu0 0
        %1216 = vmatprep.subr.bf16.mxu0 0
        %1217 = vmatpush1.bf16.msra.mxu0 0
        %1218 = vmatprep.subr.bf16.mxu0 0
        %1219 = vmatpush1.bf16.msra.mxu0 0
        %1220 = vmatprep.subr.bf16.mxu0 0
        %1221 = vmatpush1.bf16.msra.mxu0 0
        %1222 = vmatprep.subr.bf16.mxu0 0
        %1223 = vmatpush1.bf16.msra.mxu0 0
        %1224 = vmatprep.subr.bf16.mxu0 0
        %1225 = vmatpush1.bf16.msra.mxu0 0
        %1226 = vmatprep.subr.bf16.mxu0 0
        %1227 = vmatpush1.bf16.msra.mxu0 0
        %1228 = vmatprep.subr.bf16.mxu0 0
        %1229 = vmatpush1.bf16.msra.mxu0 0
        %1230 = vmatprep.mubr.bf16.mxu0 0
        %1231 = vmatmul.mubr.bf16.gmra.mrb[0].mxu0 %v1196
        %v1232 = vpop.f32.mrb[0].mxu0
        %v1233 = vadd.f32 %v1168, %v1232
        %v1234 = vpop.f32.mrb[0].mxu0
        %v1235 = vpop.f32.mrb[0].mxu0
        %v1236 = vpop.f32.mrb[0].mxu0
        %1237 = vdwg.mxu0
        %v1238 = vadd.f32 %v1233, %v1081
        %v1239 = vld [vmem:[#allocation22] sm:$0x1]
        %v1240 = vld [vmem:[#allocation23] sm:$0x1]
        %v1241 = vsel %vm702, %v1238, 0.0
        %1242 = vadd.xlane.f32.xlu0 %v1241
        %v1243 = vpop.xlane.xlu0 %1242
        %v1244 = vmul.f32 %v1243, %v1057
        %v1245 = vsub.f32 %v1238, %v1244
        %v1246 = vmul.f32 %v1245, %v1245
        %v1247 = vsel %vm702, %v1246, 0.0
        %1248 = vadd.xlane.f32.xlu0 %v1247
        %v1249 = vpop.xlane.xlu0 %1248
        %v1250 = vmul.f32 %v1249, %v1057
        %v1251 = vadd.f32 %v1250, 1e-05
        %v1252 = vrsqrt.pop %v1251
        %v1253 = vmul.f32 %v1245, %v1252
        %v1255 = vlaneseq
        %v1256 = vshrl.u32 %v1255, 7
        %v1257 = vsub.s32 0, %v1256
        %v1258 = vrot.slane %v1239, %v1257
        %v1260 = vmul.f32 %v1253, %v1258
        %v1262 = vlaneseq
        %v1263 = vshrl.u32 %v1262, 7
        %v1264 = vsub.s32 0, %v1263
        %v1265 = vrot.slane %v1240, %v1264
        %v1267 = vadd.f32 %v1260, %v1265
        %v1268 = vpack.c.bf16 %v1267, %v1267
        %vm1269 = vcmask 257024
        %1270 = vst.msk [vmem:[%s674] sm:$0xf] %vm1269, %v1268
        %s1271 = sand.u32 %s352, 1
        %s1272 = scalar_lea.sflag [#allocation4], %s1271
        %s1273 = sand.u32 %s352, 1
        %s1274 = smul.addr %s1273, 4
        %s1275 = scalar_lea.vmem [#allocation25], %s1274
        // Predicated region
        $region133: #{distinguish_forward.5} parent=75 // pred_check
          %p1276 = pneg %p362
        $region134: #{distinguish_forward.5} parent=75 // pred_check_branch
          %1278 = sbr.rel (%p1276) target = $region136
        $region135: #{distinguish_forward.5} parent=75 // pred_region
          %s1280 = ssub.s32 64, 64
          %1281 = vsyncadd %s1272, %s1280
          %s1282 = smul.addr %s40, 64
          %s1283 = scalar_lea.hbm %s14, %s1282
          %s1285 = sshll.u32 %s1275, 4
          %s1286 = int_to_ptr.vmem [resolvable:$true] %s1285
          %1288 = dma.vmem_to_hbm [thread:$0]  %s1286, 64, %s1283, %s1272
        $region136: #{distinguish_forward.5} parent=75 // pred_fallthru
          _
      $region76: #{distinguish_forward.5} parent=5 // pred_fallthru
        _
      %p1289 = scmp.le.s32.totalorder 2, %s35
      // Predicated region
      $region137: #{distinguish_forward.5} parent=5 // pred_check
        %p1290 = pneg %p1289
      $region138: #{distinguish_forward.5} parent=5 // pred_check_branch
        %1292 = sbr.rel (%p1290) target = $region140
      $region139: #{distinguish_forward.5} parent=5 // pred_region
        %s1293 = ssub.s32 %s35, 2
        // Predicated region
        $region141: #{distinguish_forward.5} parent=139 // pred_check
          %p1294 = pneg %p368
        $region142: #{distinguish_forward.5} parent=139 // pred_check_branch
          %1296 = sbr.rel (%p1294) target = $region144
        $region143: #{distinguish_forward.5} parent=139 // pred_region
          %s1297 = sand.u32 %s353, 1
          %s1298 = scalar_lea.sflag [#allocation4], %s1297
          %s1299 = sand.u32 %s353, 1
          %s1300 = smul.addr %s1299, 4
          %s1301 = scalar_lea.vmem [#allocation25], %s1300
          %1302 = dma.done %s1298, 64
        $region144: #{distinguish_forward.5} parent=139 // pred_fallthru
          _
      $region140: #{distinguish_forward.5} parent=5 // pred_fallthru
        _
    $region6: #{distinguish_forward.5} parent=1 // loop_footer
      %s39 = sadd.s32 1, %s35
    $region7: #{distinguish_forward.5} parent=1 // loop_footer_branch
      %34 = sbr.rel target = $region3
    $region8: #{distinguish_forward.5} parent=1 // loop_exit
      _
    %1303 = vsyncpa [#allocation3], 1
    %s1304 = scalar_lea.sflag [#allocation3], 1
    %1305 = vsyncpa %s1304, 1
    %1306 = vsyncpa [#allocation6], 1
    %s1307 = scalar_lea.sflag [#allocation6], 1
    %1308 = vsyncpa %s1307, 1
    %1309 = vsyncpa [#allocation9], 1
    %1310 = vsyncpa [#allocation12], 1
    %1311 = vsyncpa [#allocation15], 1
    %1312 = vsyncpa [#allocation18], 1
    %1313 = vsyncpa [#allocation21], 1
    %1314 = vsyncpa [#allocation24], 1
    %1315 = vsyncpa [#allocation4], 1
    %s1316 = scalar_lea.sflag [#allocation4], 1
    %1317 = vsyncpa %s1316, 1

</llo_original>
